<compile_context>
chip_gen: v6e
topology: v6e:2x2x1
jax: 0.10.0
libtpu: 0.0.40
codegen_flags: <defaults>
</compile_context>

<pallas_src>
import math

import jax
import jax.numpy as jnp
from jax.experimental import pallas as pl
from jax.experimental.pallas import tpu as pltpu

# ----------------------------- config (small) ------------------------------
B = 2             # batch
T = 8             # sequence length == block_size
C = 32            # num_embeddings
H = 4             # num_heads
HD = C // H       # head dim
CP = 128          # lane-padded channel width
C4 = 4 * C        # MLP hidden width (= 128, already lane-dense)
BT = B * T
LN_EPS = 1e-5


def _new_gelu(x):
    return 0.5 * x * (1.0 + jnp.tanh(
        math.sqrt(2.0 / math.pi) * (x + 0.044715 * x * x * x)))


def _layernorm_padded(x, g, b, lane_mask):
    """LayerNorm over the padded last axis; statistics use the true C.

    Assumes padded lanes of `x` are zero and padded lanes of g/b are zero,
    so the output's padded lanes are zero as well.
    """
    mu = jnp.sum(x, axis=-1, keepdims=True) * (1.0 / C)
    cen = (x - mu) * lane_mask                       # zero out padded lanes
    var = jnp.sum(cen * cen, axis=-1, keepdims=True) * (1.0 / C)
    return cen * jax.lax.rsqrt(var + LN_EPS) * g + b


def _layernorm_ref(x, g, b):
    mu = jnp.mean(x, axis=-1, keepdims=True)
    var = jnp.mean((x - mu) ** 2, axis=-1, keepdims=True)
    return (x - mu) * jax.lax.rsqrt(var + LN_EPS) * g + b


# ------------------------------ Pallas kernel ------------------------------
def block_kernel(x_ref,
                 ln1g_ref, ln1b_ref,
                 wq_ref, bq_ref, wk_ref, bk_ref, wv_ref, bv_ref,
                 wao_ref, bao_ref,
                 ln2g_ref, ln2b_ref,
                 wfc_ref, bfc_ref,
                 wmo_ref, bmo_ref,
                 o_ref):
    # Entire batch in one step, flattened to (B*T, CP) for all dense matmuls.
    xf = x_ref[...].astype(jnp.float32).reshape(BT, CP)

    # Hoisted constants (built once per kernel invocation).
    lane = jax.lax.broadcasted_iota(jnp.int32, (1, CP), 1)
    lane_mask = (lane < C).astype(jnp.float32)                      # (1, CP)
    row = jax.lax.broadcasted_iota(jnp.int32, (T, T), 0)
    col = jax.lax.broadcasted_iota(jnp.int32, (T, T), 1)
    addmask = jnp.where(col <= row, 0.0, -1e30).astype(jnp.float32)  # (T, T)
    scale = 1.0 / math.sqrt(HD)

    # ---- ln_1 + causal self-attention --------------------------------------
    h1 = _layernorm_padded(xf, ln1g_ref[...], ln1b_ref[...], lane_mask)

    attn_out = jnp.zeros((BT, CP), jnp.float32) + bao_ref[...]
    for hh in range(H):                               # static, tiny head loop
        qh = jnp.dot(h1, wq_ref[hh],
                     preferred_element_type=jnp.float32) + bq_ref[hh]
        kh = jnp.dot(h1, wk_ref[hh],
                     preferred_element_type=jnp.float32) + bk_ref[hh]
        vh = jnp.dot(h1, wv_ref[hh],
                     preferred_element_type=jnp.float32) + bv_ref[hh]
        qb = qh.reshape(B, T, HD)
        kb = kh.reshape(B, T, HD)
        vb = vh.reshape(B, T, HD)

        att = jnp.einsum('bqd,bkd->bqk', qb, kb,
                         preferred_element_type=jnp.float32) * scale
        att = att + addmask                           # additive causal mask
        att = att - jnp.max(att, axis=-1, keepdims=True)   # stable softmax
        p = jnp.exp(att)
        p = p * pl.reciprocal(jnp.sum(p, axis=-1, keepdims=True), approx=True)
        yh = jnp.einsum('bqk,bkd->bqd', p, vb,
                        preferred_element_type=jnp.float32)

        # Fold the head concat into the output projection: accumulate the
        # per-head contribution directly (no jnp.concatenate / lane stitching).
        attn_out = attn_out + jnp.dot(yh.reshape(BT, HD), wao_ref[hh],
                                      preferred_element_type=jnp.float32)

    x1 = xf + attn_out                                # residual 1

    # ---- ln_2 + MLP ---------------------------------------------------------
    h2 = _layernorm_padded(x1, ln2g_ref[...], ln2b_ref[...], lane_mask)
    fc = jnp.dot(h2, wfc_ref[...],
                 preferred_element_type=jnp.float32) + bfc_ref[...]   # (BT, 4C)
    fc = _new_gelu(fc)
    mlp_out = jnp.dot(fc, wmo_ref[...],
                      preferred_element_type=jnp.float32) + bmo_ref[...]
    x2 = x1 + mlp_out                                 # residual 2

    o_ref[...] = x2.reshape(B, T, CP).astype(o_ref.dtype)


# ------------------------------ wrapper ------------------------------------
def _pad_last(a, n):
    pad = [(0, 0)] * (a.ndim - 1) + [(0, n - a.shape[-1])]
    return jnp.pad(a, pad)


def gpt_block(x, params):
    """x: (B, T, C) float32 -> (B, T, C) float32.  params in nanoGPT layout."""
    (ln1g, ln1b, wqkv, bqkv, wao, bao,
     ln2g, ln2b, wfc, bfc, wmo, bmo) = params

    # ---- wrapper-side layout plumbing (pure repacking / zero-padding) ------
    def per_head_w(w):        # (C, C) -> (H, CP, HD), input dim zero-padded
        w = w.reshape(C, H, HD).transpose(1, 0, 2)    # (H, C, HD)
        return jnp.pad(w, ((0, 0), (0, CP - C), (0, 0)))

    def per_head_b(b):        # (C,) -> (H, 1, HD)
        return b.reshape(H, 1, HD)

    wq, wk, wv = wqkv[:, :C], wqkv[:, C:2 * C], wqkv[:, 2 * C:]
    bq, bk, bv = bqkv[0, :C], bqkv[0, C:2 * C], bqkv[0, 2 * C:]

    kparams = (
        _pad_last(ln1g, CP), _pad_last(ln1b, CP),
        per_head_w(wq), per_head_b(bq),
        per_head_w(wk), per_head_b(bk),
        per_head_w(wv), per_head_b(bv),
        _pad_last(wao.reshape(H, HD, C), CP),          # (H, HD, CP)
        _pad_last(bao, CP),                            # (1, CP)
        _pad_last(ln2g, CP), _pad_last(ln2b, CP),
        jnp.pad(wfc, ((0, CP - C), (0, 0))),           # (CP, 4C)
        bfc,                                           # (1, 4C) already dense
        _pad_last(wmo, CP),                            # (4C, CP)
        _pad_last(bmo, CP),                            # (1, CP)
    )
    xp = _pad_last(x, CP)                              # (B, T, CP)

    full = lambda a: pl.BlockSpec(a.shape, lambda i, _n=a.ndim: (0,) * _n)
    out_p = pl.pallas_call(
        block_kernel,
        out_shape=jax.ShapeDtypeStruct((B, T, CP), x.dtype),
        grid_spec=pltpu.PrefetchScalarGridSpec(
            num_scalar_prefetch=0,
            grid=(1,),                                 # single step: whole batch
            in_specs=[full(xp)] + [full(p) for p in kparams],
            out_specs=pl.BlockSpec((B, T, CP), lambda i: (0, 0, 0)),
        ),
        compiler_params=pltpu.CompilerParams(
            dimension_semantics=("arbitrary",)),
    )(xp, *kparams)
    return out_p[..., :C]                              # drop lane padding


# -------------------------- pure-JAX reference ------------------------------
def gpt_block_ref(x, params):
    (ln1g, ln1b, wqkv, bqkv, wao, bao,
     ln2g, ln2b, wfc, bfc, wmo, bmo) = params
    h = _layernorm_ref(x, ln1g, ln1b)
    qkv = h @ wqkv + bqkv
    q, k, v = jnp.split(qkv, 3, axis=-1)
    q = q.reshape(B, T, H, HD).transpose(0, 2, 1, 3)
    k = k.reshape(B, T, H, HD).transpose(0, 2, 1, 3)
    v = v.reshape(B, T, H, HD).transpose(0, 2, 1, 3)
    att = jnp.einsum('bhqd,bhkd->bhqk', q, k) / math.sqrt(HD)
    mask = jnp.tril(jnp.ones((T, T), bool))
    att = jnp.where(mask, att, -jnp.inf)
    att = jax.nn.softmax(att, axis=-1)
    y = jnp.einsum('bhqk,bhkd->bhqd', att, v)
    y = y.transpose(0, 2, 1, 3).reshape(B, T, C)
    x = x + y @ wao + bao
    h2 = _layernorm_ref(x, ln2g, ln2b)
    fc = _new_gelu(h2 @ wfc + bfc)
    return x + fc @ wmo + bmo


# ------------------------------- main ---------------------------------------
if __name__ == "__main__":
    key = jax.random.PRNGKey(0)
    keys = jax.random.split(key, 8)

    x = jax.random.normal(keys[0], (B, T, C), jnp.float32)

    ln1g = jnp.ones((1, C), jnp.float32)
    ln1b = jnp.zeros((1, C), jnp.float32)
    ln2g = jnp.ones((1, C), jnp.float32)
    ln2b = jnp.zeros((1, C), jnp.float32)

    wqkv = jax.random.normal(keys[1], (C, 3 * C), jnp.float32) * 0.02
    bqkv = jax.random.normal(keys[2], (1, 3 * C), jnp.float32) * 0.02
    wao = jax.random.normal(keys[3], (C, C), jnp.float32) * 0.02
    bao = jax.random.normal(keys[4], (1, C), jnp.float32) * 0.02
    wfc = jax.random.normal(keys[5], (C, 4 * C), jnp.float32) * 0.02
    bfc = jax.random.normal(keys[6], (1, 4 * C), jnp.float32) * 0.02
    wmo = jax.random.normal(keys[7], (4 * C, C), jnp.float32) * 0.02
    bmo = jnp.zeros((1, C), jnp.float32)

    params = (ln1g, ln1b, wqkv, bqkv, wao, bao,
              ln2g, ln2b, wfc, bfc, wmo, bmo)

    out = gpt_block(x, params)
    out = jax.block_until_ready(out)

    ref = gpt_block_ref(x, params)
    assert out.shape == (B, T, C)
    # tolerance loosened slightly for pl.reciprocal(approx=True) in softmax
    assert jnp.allclose(out, ref, atol=5e-3, rtol=5e-3), "mismatch vs reference"

    print("KERNEL_OK")
</pallas_src>

<mosaic_0001>
module attributes {stable_mosaic.version = 11 : i64} {
  func.func @block_kernel(%arg0: i32, %arg1: memref<2x8x128xf32, #tpu.memory_space<vmem>>, %arg2: memref<1x128xf32, #tpu.memory_space<vmem>>, %arg3: memref<1x128xf32, #tpu.memory_space<vmem>>, %arg4: memref<4x128x8xf32, #tpu.memory_space<vmem>>, %arg5: memref<4x1x8xf32, #tpu.memory_space<vmem>>, %arg6: memref<4x128x8xf32, #tpu.memory_space<vmem>>, %arg7: memref<4x1x8xf32, #tpu.memory_space<vmem>>, %arg8: memref<4x128x8xf32, #tpu.memory_space<vmem>>, %arg9: memref<4x1x8xf32, #tpu.memory_space<vmem>>, %arg10: memref<4x8x128xf32, #tpu.memory_space<vmem>>, %arg11: memref<1x128xf32, #tpu.memory_space<vmem>>, %arg12: memref<1x128xf32, #tpu.memory_space<vmem>>, %arg13: memref<1x128xf32, #tpu.memory_space<vmem>>, %arg14: memref<128x128xf32, #tpu.memory_space<vmem>>, %arg15: memref<1x128xf32, #tpu.memory_space<vmem>>, %arg16: memref<128x128xf32, #tpu.memory_space<vmem>>, %arg17: memref<1x128xf32, #tpu.memory_space<vmem>>, %arg18: memref<2x8x128xf32, #tpu.memory_space<vmem>>) attributes {dimension_semantics = [#tpu.dimension_semantics<arbitrary>], iteration_bounds = array<i64: 1>, scalar_prefetch = 0 : i64, scratch_operands = 0 : i64, tpu.core_type = #tpu.core_type<tc>, window_params = [{pipeline_mode = #tpu.pipeline_mode<synchronous>, transform_indices = @transform_0, window_bounds = array<i64: 2, 8, 128>}, {pipeline_mode = #tpu.pipeline_mode<synchronous>, transform_indices = @transform_1, window_bounds = array<i64: 1, 128>}, {pipeline_mode = #tpu.pipeline_mode<synchronous>, transform_indices = @transform_2, window_bounds = array<i64: 1, 128>}, {pipeline_mode = #tpu.pipeline_mode<synchronous>, transform_indices = @transform_3, window_bounds = array<i64: 4, 128, 8>}, {pipeline_mode = #tpu.pipeline_mode<synchronous>, transform_indices = @transform_4, window_bounds = array<i64: 4, 1, 8>}, {pipeline_mode = #tpu.pipeline_mode<synchronous>, transform_indices = @transform_5, window_bounds = array<i64: 4, 128, 8>}, {pipeline_mode = #tpu.pipeline_mode<synchronous>, transform_indices = @transform_6, window_bounds = array<i64: 4, 1, 8>}, {pipeline_mode = #tpu.pipeline_mode<synchronous>, transform_indices = @transform_7, window_bounds = array<i64: 4, 128, 8>}, {pipeline_mode = #tpu.pipeline_mode<synchronous>, transform_indices = @transform_8, window_bounds = array<i64: 4, 1, 8>}, {pipeline_mode = #tpu.pipeline_mode<synchronous>, transform_indices = @transform_9, window_bounds = array<i64: 4, 8, 128>}, {pipeline_mode = #tpu.pipeline_mode<synchronous>, transform_indices = @transform_10, window_bounds = array<i64: 1, 128>}, {pipeline_mode = #tpu.pipeline_mode<synchronous>, transform_indices = @transform_11, window_bounds = array<i64: 1, 128>}, {pipeline_mode = #tpu.pipeline_mode<synchronous>, transform_indices = @transform_12, window_bounds = array<i64: 1, 128>}, {pipeline_mode = #tpu.pipeline_mode<synchronous>, transform_indices = @transform_13, window_bounds = array<i64: 128, 128>}, {pipeline_mode = #tpu.pipeline_mode<synchronous>, transform_indices = @transform_14, window_bounds = array<i64: 1, 128>}, {pipeline_mode = #tpu.pipeline_mode<synchronous>, transform_indices = @transform_15, window_bounds = array<i64: 128, 128>}, {pipeline_mode = #tpu.pipeline_mode<synchronous>, transform_indices = @transform_16, window_bounds = array<i64: 1, 128>}, {pipeline_mode = #tpu.pipeline_mode<synchronous>, transform_indices = @transform_17, window_bounds = array<i64: 2, 8, 128>}]} {
    %c0 = arith.constant 0 : index
    %c0_0 = arith.constant 0 : index
    %c0_1 = arith.constant 0 : index
    %0 = vector.load %arg1[%c0, %c0_0, %c0_1] : memref<2x8x128xf32, #tpu.memory_space<vmem>>, vector<2x8x128xf32>
    %1 = vector.shape_cast %0 : vector<2x8x128xf32> to vector<16x128xf32>
    %2 = tpu.iota {dimensions = array<i32: 1>} : vector<1x128xi32>
    %c32_i32 = arith.constant 32 : i32
    %3 = vector.broadcast %c32_i32 : i32 to vector<1x128xi32>
    %4 = arith.cmpi slt, %2, %3 : vector<1x128xi32>
    %5 = arith.extui %4 : vector<1x128xi1> to vector<1x128xi32>
    %6 = arith.sitofp %5 : vector<1x128xi32> to vector<1x128xf32>
    %7 = tpu.iota {dimensions = array<i32: 0>} : vector<8x8xi32>
    %8 = tpu.iota {dimensions = array<i32: 1>} : vector<8x8xi32>
    %9 = arith.cmpi sle, %8, %7 : vector<8x8xi32>
    %cst = arith.constant 0.000000e+00 : f32
    %cst_2 = arith.constant -1.000000e+30 : f32
    %10 = vector.broadcast %cst : f32 to vector<8x8xf32>
    %11 = vector.broadcast %cst_2 : f32 to vector<8x8xf32>
    %12 = arith.select %9, %10, %11 : vector<8x8xi1>, vector<8x8xf32>
    %c0_3 = arith.constant 0 : index
    %c0_4 = arith.constant 0 : index
    %13 = vector.load %arg2[%c0_3, %c0_4] : memref<1x128xf32, #tpu.memory_space<vmem>>, vector<1x128xf32>
    %c0_5 = arith.constant 0 : index
    %c0_6 = arith.constant 0 : index
    %14 = vector.load %arg3[%c0_5, %c0_6] : memref<1x128xf32, #tpu.memory_space<vmem>>, vector<1x128xf32>
    %cst_7 = arith.constant dense<0.000000e+00> : vector<16xf32>
    %15 = vector.multi_reduction <add>, %1, %cst_7 [1] : vector<16x128xf32> to vector<16xf32>
    %16 = vector.shape_cast %15 : vector<16xf32> to vector<16x1xf32>
    %cst_8 = arith.constant 3.125000e-02 : f32
    %17 = vector.broadcast %cst_8 : f32 to vector<16x1xf32>
    %18 = arith.mulf %16, %17 : vector<16x1xf32>
    %19 = vector.broadcast %18 : vector<16x1xf32> to vector<16x128xf32>
    %20 = arith.subf %1, %19 : vector<16x128xf32>
    %21 = vector.broadcast %6 : vector<1x128xf32> to vector<16x128xf32>
    %22 = arith.mulf %20, %21 : vector<16x128xf32>
    %23 = arith.mulf %22, %22 : vector<16x128xf32>
    %cst_9 = arith.constant dense<0.000000e+00> : vector<16xf32>
    %24 = vector.multi_reduction <add>, %23, %cst_9 [1] : vector<16x128xf32> to vector<16xf32>
    %25 = vector.shape_cast %24 : vector<16xf32> to vector<16x1xf32>
    %cst_10 = arith.constant 3.125000e-02 : f32
    %26 = vector.broadcast %cst_10 : f32 to vector<16x1xf32>
    %27 = arith.mulf %25, %26 : vector<16x1xf32>
    %cst_11 = arith.constant 9.99999974E-6 : f32
    %28 = vector.broadcast %cst_11 : f32 to vector<16x1xf32>
    %29 = arith.addf %27, %28 : vector<16x1xf32>
    %30 = math.rsqrt %29 : vector<16x1xf32>
    %31 = vector.broadcast %30 : vector<16x1xf32> to vector<16x128xf32>
    %32 = arith.mulf %22, %31 : vector<16x128xf32>
    %33 = vector.broadcast %13 : vector<1x128xf32> to vector<16x128xf32>
    %34 = arith.mulf %32, %33 : vector<16x128xf32>
    %35 = vector.broadcast %14 : vector<1x128xf32> to vector<16x128xf32>
    %36 = arith.addf %34, %35 : vector<16x128xf32>
    %cst_12 = arith.constant 0.000000e+00 : f32
    %37 = vector.broadcast %cst_12 : f32 to vector<16x128xf32>
    %c0_13 = arith.constant 0 : index
    %c0_14 = arith.constant 0 : index
    %38 = vector.load %arg11[%c0_13, %c0_14] : memref<1x128xf32, #tpu.memory_space<vmem>>, vector<1x128xf32>
    %39 = vector.broadcast %38 : vector<1x128xf32> to vector<16x128xf32>
    %40 = arith.addf %37, %39 : vector<16x128xf32>
    %c0_15 = arith.constant 0 : index
    %c0_16 = arith.constant 0 : index
    %c0_17 = arith.constant 0 : index
    %41 = vector.load %arg4[%c0_15, %c0_16, %c0_17] : memref<4x128x8xf32, #tpu.memory_space<vmem>>, vector<1x128x8xf32>
    %42 = vector.shape_cast %41 : vector<1x128x8xf32> to vector<128x8xf32>
    %cst_18 = arith.constant dense<0.000000e+00> : vector<16x8xf32>
    %43 = tpu.matmul %36, %42, %cst_18 {dimension_numbers = #tpu.dot_dimension_numbers<[1], [0], [0], [1], [0, 0, 1, 1], [], []>} : vector<16x128xf32>, vector<128x8xf32>, vector<16x8xf32> -> vector<16x8xf32>
    %c0_19 = arith.constant 0 : index
    %c0_20 = arith.constant 0 : index
    %c0_21 = arith.constant 0 : index
    %44 = vector.load %arg5[%c0_19, %c0_20, %c0_21] : memref<4x1x8xf32, #tpu.memory_space<vmem>>, vector<1x1x8xf32>
    %45 = vector.shape_cast %44 : vector<1x1x8xf32> to vector<1x8xf32>
    %46 = vector.broadcast %45 : vector<1x8xf32> to vector<16x8xf32>
    %47 = arith.addf %43, %46 : vector<16x8xf32>
    %c0_22 = arith.constant 0 : index
    %c0_23 = arith.constant 0 : index
    %c0_24 = arith.constant 0 : index
    %48 = vector.load %arg6[%c0_22, %c0_23, %c0_24] : memref<4x128x8xf32, #tpu.memory_space<vmem>>, vector<1x128x8xf32>
    %49 = vector.shape_cast %48 : vector<1x128x8xf32> to vector<128x8xf32>
    %cst_25 = arith.constant dense<0.000000e+00> : vector<16x8xf32>
    %50 = tpu.matmul %36, %49, %cst_25 {dimension_numbers = #tpu.dot_dimension_numbers<[1], [0], [0], [1], [0, 0, 1, 1], [], []>} : vector<16x128xf32>, vector<128x8xf32>, vector<16x8xf32> -> vector<16x8xf32>
    %c0_26 = arith.constant 0 : index
    %c0_27 = arith.constant 0 : index
    %c0_28 = arith.constant 0 : index
    %51 = vector.load %arg7[%c0_26, %c0_27, %c0_28] : memref<4x1x8xf32, #tpu.memory_space<vmem>>, vector<1x1x8xf32>
    %52 = vector.shape_cast %51 : vector<1x1x8xf32> to vector<1x8xf32>
    %53 = vector.broadcast %52 : vector<1x8xf32> to vector<16x8xf32>
    %54 = arith.addf %50, %53 : vector<16x8xf32>
    %c0_29 = arith.constant 0 : index
    %c0_30 = arith.constant 0 : index
    %c0_31 = arith.constant 0 : index
    %55 = vector.load %arg8[%c0_29, %c0_30, %c0_31] : memref<4x128x8xf32, #tpu.memory_space<vmem>>, vector<1x128x8xf32>
    %56 = vector.shape_cast %55 : vector<1x128x8xf32> to vector<128x8xf32>
    %cst_32 = arith.constant dense<0.000000e+00> : vector<16x8xf32>
    %57 = tpu.matmul %36, %56, %cst_32 {dimension_numbers = #tpu.dot_dimension_numbers<[1], [0], [0], [1], [0, 0, 1, 1], [], []>} : vector<16x128xf32>, vector<128x8xf32>, vector<16x8xf32> -> vector<16x8xf32>
    %c0_33 = arith.constant 0 : index
    %c0_34 = arith.constant 0 : index
    %c0_35 = arith.constant 0 : index
    %58 = vector.load %arg9[%c0_33, %c0_34, %c0_35] : memref<4x1x8xf32, #tpu.memory_space<vmem>>, vector<1x1x8xf32>
    %59 = vector.shape_cast %58 : vector<1x1x8xf32> to vector<1x8xf32>
    %60 = vector.broadcast %59 : vector<1x8xf32> to vector<16x8xf32>
    %61 = arith.addf %57, %60 : vector<16x8xf32>
    %62 = vector.shape_cast %47 : vector<16x8xf32> to vector<2x8x8xf32>
    %63 = vector.shape_cast %54 : vector<16x8xf32> to vector<2x8x8xf32>
    %64 = vector.shape_cast %61 : vector<16x8xf32> to vector<2x8x8xf32>
    "tpu.trace_start"() <{level = 10 : i32, message = "bqd,bkd->bqk"}> : () -> ()
    %cst_36 = arith.constant dense<0.000000e+00> : vector<2x8x8xf32>
    %65 = tpu.matmul %62, %63, %cst_36 {dimension_numbers = #tpu.dot_dimension_numbers<[2], [2], [1], [1], [0, 0, 0, 1, 1, 1], [0], [0]>} : vector<2x8x8xf32>, vector<2x8x8xf32>, vector<2x8x8xf32> -> vector<2x8x8xf32>
    "tpu.trace_stop"() : () -> ()
    %cst_37 = arith.constant 0.353553385 : f32
    %66 = vector.broadcast %cst_37 : f32 to vector<2x8x8xf32>
    %67 = arith.mulf %65, %66 : vector<2x8x8xf32>
    %68 = vector.shape_cast %12 : vector<8x8xf32> to vector<1x8x8xf32>
    %69 = vector.broadcast %68 : vector<1x8x8xf32> to vector<2x8x8xf32>
    %70 = arith.addf %67, %69 : vector<2x8x8xf32>
    %cst_38 = arith.constant dense<0xFF800000> : vector<2x8xf32>
    %71 = vector.multi_reduction <maximumf>, %70, %cst_38 [2] : vector<2x8x8xf32> to vector<2x8xf32>
    %72 = vector.shape_cast %71 : vector<2x8xf32> to vector<2x8x1xf32>
    %73 = vector.broadcast %72 : vector<2x8x1xf32> to vector<2x8x8xf32>
    %74 = arith.subf %70, %73 : vector<2x8x8xf32>
    %75 = math.exp %74 : vector<2x8x8xf32>
    %cst_39 = arith.constant dense<0.000000e+00> : vector<2x8xf32>
    %76 = vector.multi_reduction <add>, %75, %cst_39 [2] : vector<2x8x8xf32> to vector<2x8xf32>
    %77 = vector.shape_cast %76 : vector<2x8xf32> to vector<2x8x1xf32>
    %78 = tpu.reciprocal %77 {approx = true} : vector<2x8x1xf32> -> vector<2x8x1xf32>
    %79 = vector.broadcast %78 : vector<2x8x1xf32> to vector<2x8x8xf32>
    %80 = arith.mulf %75, %79 : vector<2x8x8xf32>
    "tpu.trace_start"() <{level = 10 : i32, message = "bqk,bkd->bqd"}> : () -> ()
    %cst_40 = arith.constant dense<0.000000e+00> : vector<2x8x8xf32>
    %81 = tpu.matmul %80, %64, %cst_40 {dimension_numbers = #tpu.dot_dimension_numbers<[2], [1], [1], [2], [0, 0, 0, 1, 1, 2], [0], [0]>} : vector<2x8x8xf32>, vector<2x8x8xf32>, vector<2x8x8xf32> -> vector<2x8x8xf32>
    "tpu.trace_stop"() : () -> ()
    %82 = vector.shape_cast %81 : vector<2x8x8xf32> to vector<16x8xf32>
    %c0_41 = arith.constant 0 : index
    %c0_42 = arith.constant 0 : index
    %c0_43 = arith.constant 0 : index
    %83 = vector.load %arg10[%c0_41, %c0_42, %c0_43] : memref<4x8x128xf32, #tpu.memory_space<vmem>>, vector<1x8x128xf32>
    %84 = vector.shape_cast %83 : vector<1x8x128xf32> to vector<8x128xf32>
    %cst_44 = arith.constant dense<0.000000e+00> : vector<16x128xf32>
    %85 = tpu.matmul %82, %84, %cst_44 {dimension_numbers = #tpu.dot_dimension_numbers<[1], [0], [0], [1], [0, 0, 1, 1], [], []>} : vector<16x8xf32>, vector<8x128xf32>, vector<16x128xf32> -> vector<16x128xf32>
    %86 = arith.addf %40, %85 : vector<16x128xf32>
    %c1 = arith.constant 1 : index
    %c0_45 = arith.constant 0 : index
    %c0_46 = arith.constant 0 : index
    %87 = vector.load %arg4[%c1, %c0_45, %c0_46] : memref<4x128x8xf32, #tpu.memory_space<vmem>>, vector<1x128x8xf32>
    %88 = vector.shape_cast %87 : vector<1x128x8xf32> to vector<128x8xf32>
    %cst_47 = arith.constant dense<0.000000e+00> : vector<16x8xf32>
    %89 = tpu.matmul %36, %88, %cst_47 {dimension_numbers = #tpu.dot_dimension_numbers<[1], [0], [0], [1], [0, 0, 1, 1], [], []>} : vector<16x128xf32>, vector<128x8xf32>, vector<16x8xf32> -> vector<16x8xf32>
    %c1_48 = arith.constant 1 : index
    %c0_49 = arith.constant 0 : index
    %c0_50 = arith.constant 0 : index
    %90 = vector.load %arg5[%c1_48, %c0_49, %c0_50] : memref<4x1x8xf32, #tpu.memory_space<vmem>>, vector<1x1x8xf32>
    %91 = vector.shape_cast %90 : vector<1x1x8xf32> to vector<1x8xf32>
    %92 = vector.broadcast %91 : vector<1x8xf32> to vector<16x8xf32>
    %93 = arith.addf %89, %92 : vector<16x8xf32>
    %c1_51 = arith.constant 1 : index
    %c0_52 = arith.constant 0 : index
    %c0_53 = arith.constant 0 : index
    %94 = vector.load %arg6[%c1_51, %c0_52, %c0_53] : memref<4x128x8xf32, #tpu.memory_space<vmem>>, vector<1x128x8xf32>
    %95 = vector.shape_cast %94 : vector<1x128x8xf32> to vector<128x8xf32>
    %cst_54 = arith.constant dense<0.000000e+00> : vector<16x8xf32>
    %96 = tpu.matmul %36, %95, %cst_54 {dimension_numbers = #tpu.dot_dimension_numbers<[1], [0], [0], [1], [0, 0, 1, 1], [], []>} : vector<16x128xf32>, vector<128x8xf32>, vector<16x8xf32> -> vector<16x8xf32>
    %c1_55 = arith.constant 1 : index
    %c0_56 = arith.constant 0 : index
    %c0_57 = arith.constant 0 : index
    %97 = vector.load %arg7[%c1_55, %c0_56, %c0_57] : memref<4x1x8xf32, #tpu.memory_space<vmem>>, vector<1x1x8xf32>
    %98 = vector.shape_cast %97 : vector<1x1x8xf32> to vector<1x8xf32>
    %99 = vector.broadcast %98 : vector<1x8xf32> to vector<16x8xf32>
    %100 = arith.addf %96, %99 : vector<16x8xf32>
    %c1_58 = arith.constant 1 : index
    %c0_59 = arith.constant 0 : index
    %c0_60 = arith.constant 0 : index
    %101 = vector.load %arg8[%c1_58, %c0_59, %c0_60] : memref<4x128x8xf32, #tpu.memory_space<vmem>>, vector<1x128x8xf32>
    %102 = vector.shape_cast %101 : vector<1x128x8xf32> to vector<128x8xf32>
    %cst_61 = arith.constant dense<0.000000e+00> : vector<16x8xf32>
    %103 = tpu.matmul %36, %102, %cst_61 {dimension_numbers = #tpu.dot_dimension_numbers<[1], [0], [0], [1], [0, 0, 1, 1], [], []>} : vector<16x128xf32>, vector<128x8xf32>, vector<16x8xf32> -> vector<16x8xf32>
    %c1_62 = arith.constant 1 : index
    %c0_63 = arith.constant 0 : index
    %c0_64 = arith.constant 0 : index
    %104 = vector.load %arg9[%c1_62, %c0_63, %c0_64] : memref<4x1x8xf32, #tpu.memory_space<vmem>>, vector<1x1x8xf32>
    %105 = vector.shape_cast %104 : vector<1x1x8xf32> to vector<1x8xf32>
    %106 = vector.broadcast %105 : vector<1x8xf32> to vector<16x8xf32>
    %107 = arith.addf %103, %106 : vector<16x8xf32>
    %108 = vector.shape_cast %93 : vector<16x8xf32> to vector<2x8x8xf32>
    %109 = vector.shape_cast %100 : vector<16x8xf32> to vector<2x8x8xf32>
    %110 = vector.shape_cast %107 : vector<16x8xf32> to vector<2x8x8xf32>
    "tpu.trace_start"() <{level = 10 : i32, message = "bqd,bkd->bqk"}> : () -> ()
    %cst_65 = arith.constant dense<0.000000e+00> : vector<2x8x8xf32>
    %111 = tpu.matmul %108, %109, %cst_65 {dimension_numbers = #tpu.dot_dimension_numbers<[2], [2], [1], [1], [0, 0, 0, 1, 1, 1], [0], [0]>} : vector<2x8x8xf32>, vector<2x8x8xf32>, vector<2x8x8xf32> -> vector<2x8x8xf32>
    "tpu.trace_stop"() : () -> ()
    %cst_66 = arith.constant 0.353553385 : f32
    %112 = vector.broadcast %cst_66 : f32 to vector<2x8x8xf32>
    %113 = arith.mulf %111, %112 : vector<2x8x8xf32>
    %114 = vector.shape_cast %12 : vector<8x8xf32> to vector<1x8x8xf32>
    %115 = vector.broadcast %114 : vector<1x8x8xf32> to vector<2x8x8xf32>
    %116 = arith.addf %113, %115 : vector<2x8x8xf32>
    %cst_67 = arith.constant dense<0xFF800000> : vector<2x8xf32>
    %117 = vector.multi_reduction <maximumf>, %116, %cst_67 [2] : vector<2x8x8xf32> to vector<2x8xf32>
    %118 = vector.shape_cast %117 : vector<2x8xf32> to vector<2x8x1xf32>
    %119 = vector.broadcast %118 : vector<2x8x1xf32> to vector<2x8x8xf32>
    %120 = arith.subf %116, %119 : vector<2x8x8xf32>
    %121 = math.exp %120 : vector<2x8x8xf32>
    %cst_68 = arith.constant dense<0.000000e+00> : vector<2x8xf32>
    %122 = vector.multi_reduction <add>, %121, %cst_68 [2] : vector<2x8x8xf32> to vector<2x8xf32>
    %123 = vector.shape_cast %122 : vector<2x8xf32> to vector<2x8x1xf32>
    %124 = tpu.reciprocal %123 {approx = true} : vector<2x8x1xf32> -> vector<2x8x1xf32>
    %125 = vector.broadcast %124 : vector<2x8x1xf32> to vector<2x8x8xf32>
    %126 = arith.mulf %121, %125 : vector<2x8x8xf32>
    "tpu.trace_start"() <{level = 10 : i32, message = "bqk,bkd->bqd"}> : () -> ()
    %cst_69 = arith.constant dense<0.000000e+00> : vector<2x8x8xf32>
    %127 = tpu.matmul %126, %110, %cst_69 {dimension_numbers = #tpu.dot_dimension_numbers<[2], [1], [1], [2], [0, 0, 0, 1, 1, 2], [0], [0]>} : vector<2x8x8xf32>, vector<2x8x8xf32>, vector<2x8x8xf32> -> vector<2x8x8xf32>
    "tpu.trace_stop"() : () -> ()
    %128 = vector.shape_cast %127 : vector<2x8x8xf32> to vector<16x8xf32>
    %c1_70 = arith.constant 1 : index
    %c0_71 = arith.constant 0 : index
    %c0_72 = arith.constant 0 : index
    %129 = vector.load %arg10[%c1_70, %c0_71, %c0_72] : memref<4x8x128xf32, #tpu.memory_space<vmem>>, vector<1x8x128xf32>
    %130 = vector.shape_cast %129 : vector<1x8x128xf32> to vector<8x128xf32>
    %cst_73 = arith.constant dense<0.000000e+00> : vector<16x128xf32>
    %131 = tpu.matmul %128, %130, %cst_73 {dimension_numbers = #tpu.dot_dimension_numbers<[1], [0], [0], [1], [0, 0, 1, 1], [], []>} : vector<16x8xf32>, vector<8x128xf32>, vector<16x128xf32> -> vector<16x128xf32>
    %132 = arith.addf %86, %131 : vector<16x128xf32>
    %c2 = arith.constant 2 : index
    %c0_74 = arith.constant 0 : index
    %c0_75 = arith.constant 0 : index
    %133 = vector.load %arg4[%c2, %c0_74, %c0_75] : memref<4x128x8xf32, #tpu.memory_space<vmem>>, vector<1x128x8xf32>
    %134 = vector.shape_cast %133 : vector<1x128x8xf32> to vector<128x8xf32>
    %cst_76 = arith.constant dense<0.000000e+00> : vector<16x8xf32>
    %135 = tpu.matmul %36, %134, %cst_76 {dimension_numbers = #tpu.dot_dimension_numbers<[1], [0], [0], [1], [0, 0, 1, 1], [], []>} : vector<16x128xf32>, vector<128x8xf32>, vector<16x8xf32> -> vector<16x8xf32>
    %c2_77 = arith.constant 2 : index
    %c0_78 = arith.constant 0 : index
    %c0_79 = arith.constant 0 : index
    %136 = vector.load %arg5[%c2_77, %c0_78, %c0_79] : memref<4x1x8xf32, #tpu.memory_space<vmem>>, vector<1x1x8xf32>
    %137 = vector.shape_cast %136 : vector<1x1x8xf32> to vector<1x8xf32>
    %138 = vector.broadcast %137 : vector<1x8xf32> to vector<16x8xf32>
    %139 = arith.addf %135, %138 : vector<16x8xf32>
    %c2_80 = arith.constant 2 : index
    %c0_81 = arith.constant 0 : index
    %c0_82 = arith.constant 0 : index
    %140 = vector.load %arg6[%c2_80, %c0_81, %c0_82] : memref<4x128x8xf32, #tpu.memory_space<vmem>>, vector<1x128x8xf32>
    %141 = vector.shape_cast %140 : vector<1x128x8xf32> to vector<128x8xf32>
    %cst_83 = arith.constant dense<0.000000e+00> : vector<16x8xf32>
    %142 = tpu.matmul %36, %141, %cst_83 {dimension_numbers = #tpu.dot_dimension_numbers<[1], [0], [0], [1], [0, 0, 1, 1], [], []>} : vector<16x128xf32>, vector<128x8xf32>, vector<16x8xf32> -> vector<16x8xf32>
    %c2_84 = arith.constant 2 : index
    %c0_85 = arith.constant 0 : index
    %c0_86 = arith.constant 0 : index
    %143 = vector.load %arg7[%c2_84, %c0_85, %c0_86] : memref<4x1x8xf32, #tpu.memory_space<vmem>>, vector<1x1x8xf32>
    %144 = vector.shape_cast %143 : vector<1x1x8xf32> to vector<1x8xf32>
    %145 = vector.broadcast %144 : vector<1x8xf32> to vector<16x8xf32>
    %146 = arith.addf %142, %145 : vector<16x8xf32>
    %c2_87 = arith.constant 2 : index
    %c0_88 = arith.constant 0 : index
    %c0_89 = arith.constant 0 : index
    %147 = vector.load %arg8[%c2_87, %c0_88, %c0_89] : memref<4x128x8xf32, #tpu.memory_space<vmem>>, vector<1x128x8xf32>
    %148 = vector.shape_cast %147 : vector<1x128x8xf32> to vector<128x8xf32>
    %cst_90 = arith.constant dense<0.000000e+00> : vector<16x8xf32>
    %149 = tpu.matmul %36, %148, %cst_90 {dimension_numbers = #tpu.dot_dimension_numbers<[1], [0], [0], [1], [0, 0, 1, 1], [], []>} : vector<16x128xf32>, vector<128x8xf32>, vector<16x8xf32> -> vector<16x8xf32>
    %c2_91 = arith.constant 2 : index
    %c0_92 = arith.constant 0 : index
    %c0_93 = arith.constant 0 : index
    %150 = vector.load %arg9[%c2_91, %c0_92, %c0_93] : memref<4x1x8xf32, #tpu.memory_space<vmem>>, vector<1x1x8xf32>
    %151 = vector.shape_cast %150 : vector<1x1x8xf32> to vector<1x8xf32>
    %152 = vector.broadcast %151 : vector<1x8xf32> to vector<16x8xf32>
    %153 = arith.addf %149, %152 : vector<16x8xf32>
    %154 = vector.shape_cast %139 : vector<16x8xf32> to vector<2x8x8xf32>
    %155 = vector.shape_cast %146 : vector<16x8xf32> to vector<2x8x8xf32>
    %156 = vector.shape_cast %153 : vector<16x8xf32> to vector<2x8x8xf32>
    "tpu.trace_start"() <{level = 10 : i32, message = "bqd,bkd->bqk"}> : () -> ()
    %cst_94 = arith.constant dense<0.000000e+00> : vector<2x8x8xf32>
    %157 = tpu.matmul %154, %155, %cst_94 {dimension_numbers = #tpu.dot_dimension_numbers<[2], [2], [1], [1], [0, 0, 0, 1, 1, 1], [0], [0]>} : vector<2x8x8xf32>, vector<2x8x8xf32>, vector<2x8x8xf32> -> vector<2x8x8xf32>
    "tpu.trace_stop"() : () -> ()
    %cst_95 = arith.constant 0.353553385 : f32
    %158 = vector.broadcast %cst_95 : f32 to vector<2x8x8xf32>
    %159 = arith.mulf %157, %158 : vector<2x8x8xf32>
    %160 = vector.shape_cast %12 : vector<8x8xf32> to vector<1x8x8xf32>
    %161 = vector.broadcast %160 : vector<1x8x8xf32> to vector<2x8x8xf32>
    %162 = arith.addf %159, %161 : vector<2x8x8xf32>
    %cst_96 = arith.constant dense<0xFF800000> : vector<2x8xf32>
    %163 = vector.multi_reduction <maximumf>, %162, %cst_96 [2] : vector<2x8x8xf32> to vector<2x8xf32>
    %164 = vector.shape_cast %163 : vector<2x8xf32> to vector<2x8x1xf32>
    %165 = vector.broadcast %164 : vector<2x8x1xf32> to vector<2x8x8xf32>
    %166 = arith.subf %162, %165 : vector<2x8x8xf32>
    %167 = math.exp %166 : vector<2x8x8xf32>
    %cst_97 = arith.constant dense<0.000000e+00> : vector<2x8xf32>
    %168 = vector.multi_reduction <add>, %167, %cst_97 [2] : vector<2x8x8xf32> to vector<2x8xf32>
    %169 = vector.shape_cast %168 : vector<2x8xf32> to vector<2x8x1xf32>
    %170 = tpu.reciprocal %169 {approx = true} : vector<2x8x1xf32> -> vector<2x8x1xf32>
    %171 = vector.broadcast %170 : vector<2x8x1xf32> to vector<2x8x8xf32>
    %172 = arith.mulf %167, %171 : vector<2x8x8xf32>
    "tpu.trace_start"() <{level = 10 : i32, message = "bqk,bkd->bqd"}> : () -> ()
    %cst_98 = arith.constant dense<0.000000e+00> : vector<2x8x8xf32>
    %173 = tpu.matmul %172, %156, %cst_98 {dimension_numbers = #tpu.dot_dimension_numbers<[2], [1], [1], [2], [0, 0, 0, 1, 1, 2], [0], [0]>} : vector<2x8x8xf32>, vector<2x8x8xf32>, vector<2x8x8xf32> -> vector<2x8x8xf32>
    "tpu.trace_stop"() : () -> ()
    %174 = vector.shape_cast %173 : vector<2x8x8xf32> to vector<16x8xf32>
    %c2_99 = arith.constant 2 : index
    %c0_100 = arith.constant 0 : index
    %c0_101 = arith.constant 0 : index
    %175 = vector.load %arg10[%c2_99, %c0_100, %c0_101] : memref<4x8x128xf32, #tpu.memory_space<vmem>>, vector<1x8x128xf32>
    %176 = vector.shape_cast %175 : vector<1x8x128xf32> to vector<8x128xf32>
    %cst_102 = arith.constant dense<0.000000e+00> : vector<16x128xf32>
    %177 = tpu.matmul %174, %176, %cst_102 {dimension_numbers = #tpu.dot_dimension_numbers<[1], [0], [0], [1], [0, 0, 1, 1], [], []>} : vector<16x8xf32>, vector<8x128xf32>, vector<16x128xf32> -> vector<16x128xf32>
    %178 = arith.addf %132, %177 : vector<16x128xf32>
    %c3 = arith.constant 3 : index
    %c0_103 = arith.constant 0 : index
    %c0_104 = arith.constant 0 : index
    %179 = vector.load %arg4[%c3, %c0_103, %c0_104] : memref<4x128x8xf32, #tpu.memory_space<vmem>>, vector<1x128x8xf32>
    %180 = vector.shape_cast %179 : vector<1x128x8xf32> to vector<128x8xf32>
    %cst_105 = arith.constant dense<0.000000e+00> : vector<16x8xf32>
    %181 = tpu.matmul %36, %180, %cst_105 {dimension_numbers = #tpu.dot_dimension_numbers<[1], [0], [0], [1], [0, 0, 1, 1], [], []>} : vector<16x128xf32>, vector<128x8xf32>, vector<16x8xf32> -> vector<16x8xf32>
    %c3_106 = arith.constant 3 : index
    %c0_107 = arith.constant 0 : index
    %c0_108 = arith.constant 0 : index
    %182 = vector.load %arg5[%c3_106, %c0_107, %c0_108] : memref<4x1x8xf32, #tpu.memory_space<vmem>>, vector<1x1x8xf32>
    %183 = vector.shape_cast %182 : vector<1x1x8xf32> to vector<1x8xf32>
    %184 = vector.broadcast %183 : vector<1x8xf32> to vector<16x8xf32>
    %185 = arith.addf %181, %184 : vector<16x8xf32>
    %c3_109 = arith.constant 3 : index
    %c0_110 = arith.constant 0 : index
    %c0_111 = arith.constant 0 : index
    %186 = vector.load %arg6[%c3_109, %c0_110, %c0_111] : memref<4x128x8xf32, #tpu.memory_space<vmem>>, vector<1x128x8xf32>
    %187 = vector.shape_cast %186 : vector<1x128x8xf32> to vector<128x8xf32>
    %cst_112 = arith.constant dense<0.000000e+00> : vector<16x8xf32>
    %188 = tpu.matmul %36, %187, %cst_112 {dimension_numbers = #tpu.dot_dimension_numbers<[1], [0], [0], [1], [0, 0, 1, 1], [], []>} : vector<16x128xf32>, vector<128x8xf32>, vector<16x8xf32> -> vector<16x8xf32>
    %c3_113 = arith.constant 3 : index
    %c0_114 = arith.constant 0 : index
    %c0_115 = arith.constant 0 : index
    %189 = vector.load %arg7[%c3_113, %c0_114, %c0_115] : memref<4x1x8xf32, #tpu.memory_space<vmem>>, vector<1x1x8xf32>
    %190 = vector.shape_cast %189 : vector<1x1x8xf32> to vector<1x8xf32>
    %191 = vector.broadcast %190 : vector<1x8xf32> to vector<16x8xf32>
    %192 = arith.addf %188, %191 : vector<16x8xf32>
    %c3_116 = arith.constant 3 : index
    %c0_117 = arith.constant 0 : index
    %c0_118 = arith.constant 0 : index
    %193 = vector.load %arg8[%c3_116, %c0_117, %c0_118] : memref<4x128x8xf32, #tpu.memory_space<vmem>>, vector<1x128x8xf32>
    %194 = vector.shape_cast %193 : vector<1x128x8xf32> to vector<128x8xf32>
    %cst_119 = arith.constant dense<0.000000e+00> : vector<16x8xf32>
    %195 = tpu.matmul %36, %194, %cst_119 {dimension_numbers = #tpu.dot_dimension_numbers<[1], [0], [0], [1], [0, 0, 1, 1], [], []>} : vector<16x128xf32>, vector<128x8xf32>, vector<16x8xf32> -> vector<16x8xf32>
    %c3_120 = arith.constant 3 : index
    %c0_121 = arith.constant 0 : index
    %c0_122 = arith.constant 0 : index
    %196 = vector.load %arg9[%c3_120, %c0_121, %c0_122] : memref<4x1x8xf32, #tpu.memory_space<vmem>>, vector<1x1x8xf32>
    %197 = vector.shape_cast %196 : vector<1x1x8xf32> to vector<1x8xf32>
    %198 = vector.broadcast %197 : vector<1x8xf32> to vector<16x8xf32>
    %199 = arith.addf %195, %198 : vector<16x8xf32>
    %200 = vector.shape_cast %185 : vector<16x8xf32> to vector<2x8x8xf32>
    %201 = vector.shape_cast %192 : vector<16x8xf32> to vector<2x8x8xf32>
    %202 = vector.shape_cast %199 : vector<16x8xf32> to vector<2x8x8xf32>
    "tpu.trace_start"() <{level = 10 : i32, message = "bqd,bkd->bqk"}> : () -> ()
    %cst_123 = arith.constant dense<0.000000e+00> : vector<2x8x8xf32>
    %203 = tpu.matmul %200, %201, %cst_123 {dimension_numbers = #tpu.dot_dimension_numbers<[2], [2], [1], [1], [0, 0, 0, 1, 1, 1], [0], [0]>} : vector<2x8x8xf32>, vector<2x8x8xf32>, vector<2x8x8xf32> -> vector<2x8x8xf32>
    "tpu.trace_stop"() : () -> ()
    %cst_124 = arith.constant 0.353553385 : f32
    %204 = vector.broadcast %cst_124 : f32 to vector<2x8x8xf32>
    %205 = arith.mulf %203, %204 : vector<2x8x8xf32>
    %206 = vector.shape_cast %12 : vector<8x8xf32> to vector<1x8x8xf32>
    %207 = vector.broadcast %206 : vector<1x8x8xf32> to vector<2x8x8xf32>
    %208 = arith.addf %205, %207 : vector<2x8x8xf32>
    %cst_125 = arith.constant dense<0xFF800000> : vector<2x8xf32>
    %209 = vector.multi_reduction <maximumf>, %208, %cst_125 [2] : vector<2x8x8xf32> to vector<2x8xf32>
    %210 = vector.shape_cast %209 : vector<2x8xf32> to vector<2x8x1xf32>
    %211 = vector.broadcast %210 : vector<2x8x1xf32> to vector<2x8x8xf32>
    %212 = arith.subf %208, %211 : vector<2x8x8xf32>
    %213 = math.exp %212 : vector<2x8x8xf32>
    %cst_126 = arith.constant dense<0.000000e+00> : vector<2x8xf32>
    %214 = vector.multi_reduction <add>, %213, %cst_126 [2] : vector<2x8x8xf32> to vector<2x8xf32>
    %215 = vector.shape_cast %214 : vector<2x8xf32> to vector<2x8x1xf32>
    %216 = tpu.reciprocal %215 {approx = true} : vector<2x8x1xf32> -> vector<2x8x1xf32>
    %217 = vector.broadcast %216 : vector<2x8x1xf32> to vector<2x8x8xf32>
    %218 = arith.mulf %213, %217 : vector<2x8x8xf32>
    "tpu.trace_start"() <{level = 10 : i32, message = "bqk,bkd->bqd"}> : () -> ()
    %cst_127 = arith.constant dense<0.000000e+00> : vector<2x8x8xf32>
    %219 = tpu.matmul %218, %202, %cst_127 {dimension_numbers = #tpu.dot_dimension_numbers<[2], [1], [1], [2], [0, 0, 0, 1, 1, 2], [0], [0]>} : vector<2x8x8xf32>, vector<2x8x8xf32>, vector<2x8x8xf32> -> vector<2x8x8xf32>
    "tpu.trace_stop"() : () -> ()
    %220 = vector.shape_cast %219 : vector<2x8x8xf32> to vector<16x8xf32>
    %c3_128 = arith.constant 3 : index
    %c0_129 = arith.constant 0 : index
    %c0_130 = arith.constant 0 : index
    %221 = vector.load %arg10[%c3_128, %c0_129, %c0_130] : memref<4x8x128xf32, #tpu.memory_space<vmem>>, vector<1x8x128xf32>
    %222 = vector.shape_cast %221 : vector<1x8x128xf32> to vector<8x128xf32>
    %cst_131 = arith.constant dense<0.000000e+00> : vector<16x128xf32>
    %223 = tpu.matmul %220, %222, %cst_131 {dimension_numbers = #tpu.dot_dimension_numbers<[1], [0], [0], [1], [0, 0, 1, 1], [], []>} : vector<16x8xf32>, vector<8x128xf32>, vector<16x128xf32> -> vector<16x128xf32>
    %224 = arith.addf %178, %223 : vector<16x128xf32>
    %225 = arith.addf %1, %224 : vector<16x128xf32>
    %c0_132 = arith.constant 0 : index
    %c0_133 = arith.constant 0 : index
    %226 = vector.load %arg12[%c0_132, %c0_133] : memref<1x128xf32, #tpu.memory_space<vmem>>, vector<1x128xf32>
    %c0_134 = arith.constant 0 : index
    %c0_135 = arith.constant 0 : index
    %227 = vector.load %arg13[%c0_134, %c0_135] : memref<1x128xf32, #tpu.memory_space<vmem>>, vector<1x128xf32>
    %cst_136 = arith.constant dense<0.000000e+00> : vector<16xf32>
    %228 = vector.multi_reduction <add>, %225, %cst_136 [1] : vector<16x128xf32> to vector<16xf32>
    %229 = vector.shape_cast %228 : vector<16xf32> to vector<16x1xf32>
    %cst_137 = arith.constant 3.125000e-02 : f32
    %230 = vector.broadcast %cst_137 : f32 to vector<16x1xf32>
    %231 = arith.mulf %229, %230 : vector<16x1xf32>
    %232 = vector.broadcast %231 : vector<16x1xf32> to vector<16x128xf32>
    %233 = arith.subf %225, %232 : vector<16x128xf32>
    %234 = vector.broadcast %6 : vector<1x128xf32> to vector<16x128xf32>
    %235 = arith.mulf %233, %234 : vector<16x128xf32>
    %236 = arith.mulf %235, %235 : vector<16x128xf32>
    %cst_138 = arith.constant dense<0.000000e+00> : vector<16xf32>
    %237 = vector.multi_reduction <add>, %236, %cst_138 [1] : vector<16x128xf32> to vector<16xf32>
    %238 = vector.shape_cast %237 : vector<16xf32> to vector<16x1xf32>
    %cst_139 = arith.constant 3.125000e-02 : f32
    %239 = vector.broadcast %cst_139 : f32 to vector<16x1xf32>
    %240 = arith.mulf %238, %239 : vector<16x1xf32>
    %cst_140 = arith.constant 9.99999974E-6 : f32
    %241 = vector.broadcast %cst_140 : f32 to vector<16x1xf32>
    %242 = arith.addf %240, %241 : vector<16x1xf32>
    %243 = math.rsqrt %242 : vector<16x1xf32>
    %244 = vector.broadcast %243 : vector<16x1xf32> to vector<16x128xf32>
    %245 = arith.mulf %235, %244 : vector<16x128xf32>
    %246 = vector.broadcast %226 : vector<1x128xf32> to vector<16x128xf32>
    %247 = arith.mulf %245, %246 : vector<16x128xf32>
    %248 = vector.broadcast %227 : vector<1x128xf32> to vector<16x128xf32>
    %249 = arith.addf %247, %248 : vector<16x128xf32>
    %c0_141 = arith.constant 0 : index
    %c0_142 = arith.constant 0 : index
    %250 = vector.load %arg14[%c0_141, %c0_142] : memref<128x128xf32, #tpu.memory_space<vmem>>, vector<128x128xf32>
    %cst_143 = arith.constant dense<0.000000e+00> : vector<16x128xf32>
    %251 = tpu.matmul %249, %250, %cst_143 {dimension_numbers = #tpu.dot_dimension_numbers<[1], [0], [0], [1], [0, 0, 1, 1], [], []>} : vector<16x128xf32>, vector<128x128xf32>, vector<16x128xf32> -> vector<16x128xf32>
    %c0_144 = arith.constant 0 : index
    %c0_145 = arith.constant 0 : index
    %252 = vector.load %arg15[%c0_144, %c0_145] : memref<1x128xf32, #tpu.memory_space<vmem>>, vector<1x128xf32>
    %253 = vector.broadcast %252 : vector<1x128xf32> to vector<16x128xf32>
    %254 = arith.addf %251, %253 : vector<16x128xf32>
    %cst_146 = arith.constant 5.000000e-01 : f32
    %255 = vector.broadcast %cst_146 : f32 to vector<16x128xf32>
    %256 = arith.mulf %255, %254 : vector<16x128xf32>
    %cst_147 = arith.constant 4.471500e-02 : f32
    %257 = vector.broadcast %cst_147 : f32 to vector<16x128xf32>
    %258 = arith.mulf %257, %254 : vector<16x128xf32>
    %259 = arith.mulf %258, %254 : vector<16x128xf32>
    %260 = arith.mulf %259, %254 : vector<16x128xf32>
    %261 = arith.addf %254, %260 : vector<16x128xf32>
    %cst_148 = arith.constant 0.797884583 : f32
    %262 = vector.broadcast %cst_148 : f32 to vector<16x128xf32>
    %263 = arith.mulf %262, %261 : vector<16x128xf32>
    %264 = math.tanh %263 : vector<16x128xf32>
    %cst_149 = arith.constant 1.000000e+00 : f32
    %265 = vector.broadcast %cst_149 : f32 to vector<16x128xf32>
    %266 = arith.addf %265, %264 : vector<16x128xf32>
    %267 = arith.mulf %256, %266 : vector<16x128xf32>
    %c0_150 = arith.constant 0 : index
    %c0_151 = arith.constant 0 : index
    %268 = vector.load %arg16[%c0_150, %c0_151] : memref<128x128xf32, #tpu.memory_space<vmem>>, vector<128x128xf32>
    %cst_152 = arith.constant dense<0.000000e+00> : vector<16x128xf32>
    %269 = tpu.matmul %267, %268, %cst_152 {dimension_numbers = #tpu.dot_dimension_numbers<[1], [0], [0], [1], [0, 0, 1, 1], [], []>} : vector<16x128xf32>, vector<128x128xf32>, vector<16x128xf32> -> vector<16x128xf32>
    %c0_153 = arith.constant 0 : index
    %c0_154 = arith.constant 0 : index
    %270 = vector.load %arg17[%c0_153, %c0_154] : memref<1x128xf32, #tpu.memory_space<vmem>>, vector<1x128xf32>
    %271 = vector.broadcast %270 : vector<1x128xf32> to vector<16x128xf32>
    %272 = arith.addf %269, %271 : vector<16x128xf32>
    %273 = arith.addf %225, %272 : vector<16x128xf32>
    %274 = vector.shape_cast %273 : vector<16x128xf32> to vector<2x8x128xf32>
    %c0_155 = arith.constant 0 : index
    %c0_156 = arith.constant 0 : index
    %c0_157 = arith.constant 0 : index
    %275 = vector.load %arg18[%c0_155, %c0_156, %c0_157] : memref<2x8x128xf32, #tpu.memory_space<vmem>>, vector<2x8x128xf32>
    tpu.vector_store %arg18[%c0_155, %c0_156, %c0_157], %274 {strides = array<i32>} : memref<2x8x128xf32, #tpu.memory_space<vmem>>, vector<2x8x128xf32>,
    return
  }
  func.func @transform_0(%arg0: i32) -> (i32, i32, i32) {
    %c0_i32 = arith.constant 0 : i32
    %c0_i32_0 = arith.constant 0 : i32
    %c0_i32_1 = arith.constant 0 : i32
    %c0_i32_2 = arith.constant 0 : i32
    return %c0_i32, %c0_i32_0, %c0_i32_1 : i32, i32, i32
  }
  func.func @transform_1(%arg0: i32) -> (i32, i32) {
    %c0_i32 = arith.constant 0 : i32
    %c0_i32_0 = arith.constant 0 : i32
    %c0_i32_1 = arith.constant 0 : i32
    return %c0_i32, %c0_i32_0 : i32, i32
  }
  func.func @transform_2(%arg0: i32) -> (i32, i32) {
    %c0_i32 = arith.constant 0 : i32
    %c0_i32_0 = arith.constant 0 : i32
    %c0_i32_1 = arith.constant 0 : i32
    return %c0_i32, %c0_i32_0 : i32, i32
  }
  func.func @transform_3(%arg0: i32) -> (i32, i32, i32) {
    %c0_i32 = arith.constant 0 : i32
    %c0_i32_0 = arith.constant 0 : i32
    %c0_i32_1 = arith.constant 0 : i32
    %c0_i32_2 = arith.constant 0 : i32
    return %c0_i32, %c0_i32_0, %c0_i32_1 : i32, i32, i32
  }
  func.func @transform_4(%arg0: i32) -> (i32, i32, i32) {
    %c0_i32 = arith.constant 0 : i32
    %c0_i32_0 = arith.constant 0 : i32
    %c0_i32_1 = arith.constant 0 : i32
    %c0_i32_2 = arith.constant 0 : i32
    return %c0_i32, %c0_i32_0, %c0_i32_1 : i32, i32, i32
  }
  func.func @transform_5(%arg0: i32) -> (i32, i32, i32) {
    %c0_i32 = arith.constant 0 : i32
    %c0_i32_0 = arith.constant 0 : i32
    %c0_i32_1 = arith.constant 0 : i32
    %c0_i32_2 = arith.constant 0 : i32
    return %c0_i32, %c0_i32_0, %c0_i32_1 : i32, i32, i32
  }
  func.func @transform_6(%arg0: i32) -> (i32, i32, i32) {
    %c0_i32 = arith.constant 0 : i32
    %c0_i32_0 = arith.constant 0 : i32
    %c0_i32_1 = arith.constant 0 : i32
    %c0_i32_2 = arith.constant 0 : i32
    return %c0_i32, %c0_i32_0, %c0_i32_1 : i32, i32, i32
  }
  func.func @transform_7(%arg0: i32) -> (i32, i32, i32) {
    %c0_i32 = arith.constant 0 : i32
    %c0_i32_0 = arith.constant 0 : i32
    %c0_i32_1 = arith.constant 0 : i32
    %c0_i32_2 = arith.constant 0 : i32
    return %c0_i32, %c0_i32_0, %c0_i32_1 : i32, i32, i32
  }
  func.func @transform_8(%arg0: i32) -> (i32, i32, i32) {
    %c0_i32 = arith.constant 0 : i32
    %c0_i32_0 = arith.constant 0 : i32
    %c0_i32_1 = arith.constant 0 : i32
    %c0_i32_2 = arith.constant 0 : i32
    return %c0_i32, %c0_i32_0, %c0_i32_1 : i32, i32, i32
  }
  func.func @transform_9(%arg0: i32) -> (i32, i32, i32) {
    %c0_i32 = arith.constant 0 : i32
    %c0_i32_0 = arith.constant 0 : i32
    %c0_i32_1 = arith.constant 0 : i32
    %c0_i32_2 = arith.constant 0 : i32
    return %c0_i32, %c0_i32_0, %c0_i32_1 : i32, i32, i32
  }
  func.func @transform_10(%arg0: i32) -> (i32, i32) {
    %c0_i32 = arith.constant 0 : i32
    %c0_i32_0 = arith.constant 0 : i32
    %c0_i32_1 = arith.constant 0 : i32
    return %c0_i32, %c0_i32_0 : i32, i32
  }
  func.func @transform_11(%arg0: i32) -> (i32, i32) {
    %c0_i32 = arith.constant 0 : i32
    %c0_i32_0 = arith.constant 0 : i32
    %c0_i32_1 = arith.constant 0 : i32
    return %c0_i32, %c0_i32_0 : i32, i32
  }
  func.func @transform_12(%arg0: i32) -> (i32, i32) {
    %c0_i32 = arith.constant 0 : i32
    %c0_i32_0 = arith.constant 0 : i32
    %c0_i32_1 = arith.constant 0 : i32
    return %c0_i32, %c0_i32_0 : i32, i32
  }
  func.func @transform_13(%arg0: i32) -> (i32, i32) {
    %c0_i32 = arith.constant 0 : i32
    %c0_i32_0 = arith.constant 0 : i32
    %c0_i32_1 = arith.constant 0 : i32
    return %c0_i32, %c0_i32_0 : i32, i32
  }
  func.func @transform_14(%arg0: i32) -> (i32, i32) {
    %c0_i32 = arith.constant 0 : i32
    %c0_i32_0 = arith.constant 0 : i32
    %c0_i32_1 = arith.constant 0 : i32
    return %c0_i32, %c0_i32_0 : i32, i32
  }
  func.func @transform_15(%arg0: i32) -> (i32, i32) {
    %c0_i32 = arith.constant 0 : i32
    %c0_i32_0 = arith.constant 0 : i32
    %c0_i32_1 = arith.constant 0 : i32
    return %c0_i32, %c0_i32_0 : i32, i32
  }
  func.func @transform_16(%arg0: i32) -> (i32, i32) {
    %c0_i32 = arith.constant 0 : i32
    %c0_i32_0 = arith.constant 0 : i32
    %c0_i32_1 = arith.constant 0 : i32
    return %c0_i32, %c0_i32_0 : i32, i32
  }
  func.func @transform_17(%arg0: i32) -> (i32, i32, i32) {
    %c0_i32 = arith.constant 0 : i32
    %c0_i32_0 = arith.constant 0 : i32
    %c0_i32_1 = arith.constant 0 : i32
    %c0_i32_2 = arith.constant 0 : i32
    return %c0_i32, %c0_i32_0, %c0_i32_1 : i32, i32, i32
  }
}

</mosaic_0001>

<llo_original>
// kernel: tpu_custom_call.1
$region0: #{tpu_custom_call.1}
  #allocation0 [shape = 'u32[]', space=smem, size = 0x4, offset = 0x4, fixed_abs, tag = 'smem constant byte address 0x4 - core index']
  #allocation1 [shape = 'u32[144,128]{1,0:T(1,128)}', space=vmem, size = 0x12000, scoped, tag = 'internal scratch']
  %s0 = inlined_call_operand.vmem [shape: f32[2,8,128], index: 0, kind: input, shape index: {}]
  %s1 = inlined_call_operand.vmem [shape: f32[1,128], index: 1, kind: input, shape index: {}]
  %s2 = inlined_call_operand.vmem [shape: f32[1,128], index: 2, kind: input, shape index: {}]
  %s3 = inlined_call_operand.vmem [shape: f32[4,128,8], index: 3, kind: input, shape index: {}]
  %s4 = inlined_call_operand.vmem [shape: f32[4,1,8], index: 4, kind: input, shape index: {}]
  %s5 = inlined_call_operand.vmem [shape: f32[4,128,8], index: 5, kind: input, shape index: {}]
  %s6 = inlined_call_operand.vmem [shape: f32[4,1,8], index: 6, kind: input, shape index: {}]
  %s7 = inlined_call_operand.vmem [shape: f32[4,128,8], index: 7, kind: input, shape index: {}]
  %s8 = inlined_call_operand.vmem [shape: f32[4,1,8], index: 8, kind: input, shape index: {}]
  %s9 = inlined_call_operand.vmem [shape: f32[4,8,128], index: 9, kind: input, shape index: {}]
  %s10 = inlined_call_operand.vmem [shape: f32[1,128], index: 10, kind: input, shape index: {}]
  %s11 = inlined_call_operand.vmem [shape: f32[1,128], index: 11, kind: input, shape index: {}]
  %s12 = inlined_call_operand.vmem [shape: f32[1,128], index: 12, kind: input, shape index: {}]
  %s13 = inlined_call_operand.vmem [shape: f32[128,128], index: 13, kind: input, shape index: {}]
  %s14 = inlined_call_operand.vmem [shape: f32[1,128], index: 14, kind: input, shape index: {}]
  %s15 = inlined_call_operand.vmem [shape: f32[128,128], index: 15, kind: input, shape index: {}]
  %s16 = inlined_call_operand.vmem [shape: f32[1,128], index: 16, kind: input, shape index: {}]
  %s17 = inlined_call_operand.hbm [shape: f32[2,8,128], index: 17, kind: output, shape index: {}]
  %s18 = sld [smem:[#allocation0]]
  $region78: #{tpu_custom_call.1} parent=0
    _
  %s20 = ssub.s32 1, %s18
  %s21 = scalar_select 0, %s20, %s18
  $region1: #{tpu_custom_call.1} parent=0
    #allocation2 [shape = 'u8[8192]{0}', space=vmem, size = 0x2000, scoped, tag = 'output window, operand 0, single buffered']
    #allocation3 [shape = 's32[1]{0}', space=sflag, size = 0x4, scoped, tag = 'scoped memory for tpu_custom_call.1']
    %22 = vsyncpa [#allocation3], 0
    // Predicated region
    $region2: #{tpu_custom_call.1} parent=1 // pred_check
      _
    $region3: #{tpu_custom_call.1} parent=1 // pred_check_branch
      %24 = sbr.rel (0) target = $region5
    $region4: #{tpu_custom_call.1} parent=1 // pred_region
      _
    $region5: #{tpu_custom_call.1} parent=1 // pred_fallthru
      _
    // Predicated region
    $region6: #{tpu_custom_call.1} parent=1 // pred_check
      _
    $region7: #{tpu_custom_call.1} parent=1 // pred_check_branch
      %26 = sbr.rel (0) target = $region9
    $region8: #{tpu_custom_call.1} parent=1 // pred_region
      _
    $region9: #{tpu_custom_call.1} parent=1 // pred_fallthru
      _
    // Predicated region
    $region10: #{tpu_custom_call.1} parent=1 // pred_check
      _
    $region11: #{tpu_custom_call.1} parent=1 // pred_check_branch
      %28 = sbr.rel (0) target = $region13
    $region12: #{tpu_custom_call.1} parent=1 // pred_region
      _
    $region13: #{tpu_custom_call.1} parent=1 // pred_fallthru
      _
    // Predicated region
    $region14: #{tpu_custom_call.1} parent=1 // pred_check
      _
    $region15: #{tpu_custom_call.1} parent=1 // pred_check_branch
      %30 = sbr.rel (0) target = $region17
    $region16: #{tpu_custom_call.1} parent=1 // pred_region
      _
    $region17: #{tpu_custom_call.1} parent=1 // pred_fallthru
      _
    // Predicated region
    $region18: #{tpu_custom_call.1} parent=1 // pred_check
      _
    $region19: #{tpu_custom_call.1} parent=1 // pred_check_branch
      %32 = sbr.rel (0) target = $region21
    $region20: #{tpu_custom_call.1} parent=1 // pred_region
      _
    $region21: #{tpu_custom_call.1} parent=1 // pred_fallthru
      _
    // Predicated region
    $region22: #{tpu_custom_call.1} parent=1 // pred_check
      _
    $region23: #{tpu_custom_call.1} parent=1 // pred_check_branch
      %34 = sbr.rel (0) target = $region25
    $region24: #{tpu_custom_call.1} parent=1 // pred_region
      _
    $region25: #{tpu_custom_call.1} parent=1 // pred_fallthru
      _
    // Predicated region
    $region26: #{tpu_custom_call.1} parent=1 // pred_check
      _
    $region27: #{tpu_custom_call.1} parent=1 // pred_check_branch
      %36 = sbr.rel (0) target = $region29
    $region28: #{tpu_custom_call.1} parent=1 // pred_region
      _
    $region29: #{tpu_custom_call.1} parent=1 // pred_fallthru
      _
    // Predicated region
    $region30: #{tpu_custom_call.1} parent=1 // pred_check
      _
    $region31: #{tpu_custom_call.1} parent=1 // pred_check_branch
      %38 = sbr.rel (0) target = $region33
    $region32: #{tpu_custom_call.1} parent=1 // pred_region
      _
    $region33: #{tpu_custom_call.1} parent=1 // pred_fallthru
      _
    // Predicated region
    $region34: #{tpu_custom_call.1} parent=1 // pred_check
      _
    $region35: #{tpu_custom_call.1} parent=1 // pred_check_branch
      %40 = sbr.rel (0) target = $region37
    $region36: #{tpu_custom_call.1} parent=1 // pred_region
      _
    $region37: #{tpu_custom_call.1} parent=1 // pred_fallthru
      _
    // Predicated region
    $region38: #{tpu_custom_call.1} parent=1 // pred_check
      _
    $region39: #{tpu_custom_call.1} parent=1 // pred_check_branch
      %42 = sbr.rel (0) target = $region41
    $region40: #{tpu_custom_call.1} parent=1 // pred_region
      _
    $region41: #{tpu_custom_call.1} parent=1 // pred_fallthru
      _
    // Predicated region
    $region42: #{tpu_custom_call.1} parent=1 // pred_check
      _
    $region43: #{tpu_custom_call.1} parent=1 // pred_check_branch
      %44 = sbr.rel (0) target = $region45
    $region44: #{tpu_custom_call.1} parent=1 // pred_region
      _
    $region45: #{tpu_custom_call.1} parent=1 // pred_fallthru
      _
    // Predicated region
    $region46: #{tpu_custom_call.1} parent=1 // pred_check
      _
    $region47: #{tpu_custom_call.1} parent=1 // pred_check_branch
      %46 = sbr.rel (0) target = $region49
    $region48: #{tpu_custom_call.1} parent=1 // pred_region
      _
    $region49: #{tpu_custom_call.1} parent=1 // pred_fallthru
      _
    // Predicated region
    $region50: #{tpu_custom_call.1} parent=1 // pred_check
      _
    $region51: #{tpu_custom_call.1} parent=1 // pred_check_branch
      %48 = sbr.rel (0) target = $region53
    $region52: #{tpu_custom_call.1} parent=1 // pred_region
      _
    $region53: #{tpu_custom_call.1} parent=1 // pred_fallthru
      _
    // Predicated region
    $region54: #{tpu_custom_call.1} parent=1 // pred_check
      _
    $region55: #{tpu_custom_call.1} parent=1 // pred_check_branch
      %50 = sbr.rel (0) target = $region57
    $region56: #{tpu_custom_call.1} parent=1 // pred_region
      _
    $region57: #{tpu_custom_call.1} parent=1 // pred_fallthru
      _
    // Predicated region
    $region58: #{tpu_custom_call.1} parent=1 // pred_check
      _
    $region59: #{tpu_custom_call.1} parent=1 // pred_check_branch
      %52 = sbr.rel (0) target = $region61
    $region60: #{tpu_custom_call.1} parent=1 // pred_region
      _
    $region61: #{tpu_custom_call.1} parent=1 // pred_fallthru
      _
    // Predicated region
    $region62: #{tpu_custom_call.1} parent=1 // pred_check
      _
    $region63: #{tpu_custom_call.1} parent=1 // pred_check_branch
      %54 = sbr.rel (0) target = $region65
    $region64: #{tpu_custom_call.1} parent=1 // pred_region
      _
    $region65: #{tpu_custom_call.1} parent=1 // pred_fallthru
      _
    // Predicated region
    $region66: #{tpu_custom_call.1} parent=1 // pred_check
      _
    $region67: #{tpu_custom_call.1} parent=1 // pred_check_branch
      %56 = sbr.rel (0) target = $region69
    $region68: #{tpu_custom_call.1} parent=1 // pred_region
      _
    $region69: #{tpu_custom_call.1} parent=1 // pred_fallthru
      _
    %v57 = vld [vmem:[%s0] sm:$0xff]
    %v58 = vld [vmem:[%s0 + $0x8] sm:$0xff]
    %v59 = vlaneseq
    %v60 = vand.u32 %v59, 127
    %vm61 = vcmp.lt.s32.totalorder %v60, 32
    %v62 = vsel %vm61, 1, 0
    %v63 = vcvt.s32.f32 %v62
    %v64 = vlaneseq
    %v65 = vshrl.u32 %v64, 7
    %vm66 = vcmp.le.s32.totalorder %v60, %v65
    %v67 = vsel %vm66, 0.0, -1e+30
    %v68 = vld [vmem:[%s1] sm:$0x1]
    %v69 = vld [vmem:[%s2] sm:$0x1]
    %70 = vadd.xlane.f32.xlu0 %v57
    %v71 = vpop.xlane.xlu0 %70
    %72 = vadd.xlane.f32.xlu0 %v58
    %v73 = vpop.xlane.xlu0 %72
    %v74 = vmul.f32 %v71, 0.03125
    %v75 = vmul.f32 %v73, 0.03125
    %v76 = vsub.f32 %v57, %v74
    %v77 = vsub.f32 %v58, %v75
    %v78 = vmul.f32 %v76, %v63
    %v79 = vmul.f32 %v77, %v63
    %v80 = vmul.f32 %v78, %v78
    %v81 = vmul.f32 %v79, %v79
    %82 = vadd.xlane.f32.xlu0 %v80
    %v83 = vpop.xlane.xlu0 %82
    %84 = vadd.xlane.f32.xlu0 %v81
    %v85 = vpop.xlane.xlu0 %84
    %v86 = vmul.f32 %v83, 0.03125
    %v87 = vmul.f32 %v85, 0.03125
    %v88 = vadd.f32 %v86, 1e-05
    %v89 = vadd.f32 %v87, 1e-05
    %v90 = vrsqrt.pop %v88
    %v91 = vrsqrt.pop %v89
    %v92 = vmul.f32 %v78, %v90
    %v93 = vmul.f32 %v79, %v91
    %v95 = vlaneseq
    %v96 = vshrl.u32 %v95, 7
    %v97 = vsub.s32 0, %v96
    %v98 = vrot.slane %v68, %v97
    %v100 = vmul.f32 %v92, %v98
    %v101 = vmul.f32 %v93, %v98
    %v103 = vlaneseq
    %v104 = vshrl.u32 %v103, 7
    %v105 = vsub.s32 0, %v104
    %v106 = vrot.slane %v69, %v105
    %v108 = vadd.f32 %v100, %v106
    %v109 = vadd.f32 %v101, %v106
    %v110 = vld [vmem:[%s10] sm:$0x1]
    %v112 = vlaneseq
    %v113 = vshrl.u32 %v112, 7
    %v114 = vsub.s32 0, %v113
    %v115 = vrot.slane %v110, %v114
    %v117 = vadd.f32 %v115, 0.0
    %v118 = vld [vmem:[%s3] sm:$0xff]
    %v119 = vld [vmem:[%s3 + $0x8] sm:$0xff]
    %v120 = vld [vmem:[%s3 + $0x10] sm:$0xff]
    %v121 = vld [vmem:[%s3 + $0x18] sm:$0xff]
    %v122 = vld [vmem:[%s3 + $0x20] sm:$0xff]
    %v123 = vld [vmem:[%s3 + $0x28] sm:$0xff]
    %v124 = vld [vmem:[%s3 + $0x30] sm:$0xff]
    %v125 = vld [vmem:[%s3 + $0x38] sm:$0xff]
    %v126 = vld [vmem:[%s3 + $0x40] sm:$0xff]
    %v127 = vld [vmem:[%s3 + $0x48] sm:$0xff]
    %v128 = vld [vmem:[%s3 + $0x50] sm:$0xff]
    %v129 = vld [vmem:[%s3 + $0x58] sm:$0xff]
    %v130 = vld [vmem:[%s3 + $0x60] sm:$0xff]
    %v131 = vld [vmem:[%s3 + $0x68] sm:$0xff]
    %v132 = vld [vmem:[%s3 + $0x70] sm:$0xff]
    %v133 = vld [vmem:[%s3 + $0x78] sm:$0xff]
    %v134 = vld [vmem:[%s4] sm:$0x1]
    %v136 = vlaneseq
    %v137 = vshrl.u32 %v136, 7
    %v138 = vsub.s32 0, %v137
    %v139 = vrot.slane %v134, %v138
    %141 = vmatprep.subr.mxu0 0.0
    %142 = vmatpush1.msra.mxu0 %v133
    %143 = vmatprep.subr.mxu0 0.0
    %144 = vmatpush1.msra.mxu0 %v132
    %145 = vmatprep.subr.mxu0 0.0
    %146 = vmatpush1.msra.mxu0 %v131
    %147 = vmatprep.subr.mxu0 0.0
    %148 = vmatpush1.msra.mxu0 %v130
    %149 = vmatprep.subr.mxu0 0.0
    %150 = vmatpush1.msra.mxu0 %v129
    %151 = vmatprep.subr.mxu0 0.0
    %152 = vmatpush1.msra.mxu0 %v128
    %153 = vmatprep.subr.mxu0 0.0
    %154 = vmatpush1.msra.mxu0 %v127
    %155 = vmatprep.subr.mxu0 0.0
    %156 = vmatpush1.msra.mxu0 %v126
    %157 = vmatprep.subr.mxu0 0.0
    %158 = vmatpush1.msra.mxu0 %v125
    %159 = vmatprep.subr.mxu0 0.0
    %160 = vmatpush1.msra.mxu0 %v124
    %161 = vmatprep.subr.mxu0 0.0
    %162 = vmatpush1.msra.mxu0 %v123
    %163 = vmatprep.subr.mxu0 0.0
    %164 = vmatpush1.msra.mxu0 %v122
    %165 = vmatprep.subr.mxu0 0.0
    %166 = vmatpush1.msra.mxu0 %v121
    %167 = vmatprep.subr.mxu0 0.0
    %168 = vmatpush1.msra.mxu0 %v120
    %169 = vmatprep.subr.mxu0 0.0
    %170 = vmatpush1.msra.mxu0 %v119
    %171 = vmatprep.subr.mxu0 0.0
    %172 = vmatpush1.msra.mxu0 %v118
    %173 = vmatprep.subr.mxu0 0.0
    %174 = vmatpush2.msra.mxu0 0.0
    %175 = vmatprep.subr.mxu0 0.0
    %176 = vmatpush2.msra.mxu0 0.0
    %177 = vmatprep.subr.mxu0 0.0
    %178 = vmatpush2.msra.mxu0 0.0
    %179 = vmatprep.subr.mxu0 0.0
    %180 = vmatpush2.msra.mxu0 0.0
    %181 = vmatprep.subr.mxu0 0.0
    %182 = vmatpush2.msra.mxu0 0.0
    %183 = vmatprep.subr.mxu0 0.0
    %184 = vmatpush2.msra.mxu0 0.0
    %185 = vmatprep.subr.mxu0 0.0
    %186 = vmatpush2.msra.mxu0 0.0
    %187 = vmatprep.subr.mxu0 0.0
    %188 = vmatpush2.msra.mxu0 0.0
    %189 = vmatprep.subr.mxu0 0.0
    %190 = vmatpush2.msra.mxu0 0.0
    %191 = vmatprep.subr.mxu0 0.0
    %192 = vmatpush2.msra.mxu0 0.0
    %193 = vmatprep.subr.mxu0 0.0
    %194 = vmatpush2.msra.mxu0 0.0
    %195 = vmatprep.subr.mxu0 0.0
    %196 = vmatpush2.msra.mxu0 0.0
    %197 = vmatprep.subr.mxu0 0.0
    %198 = vmatpush2.msra.mxu0 0.0
    %199 = vmatprep.subr.mxu0 0.0
    %200 = vmatpush2.msra.mxu0 0.0
    %201 = vmatprep.subr.mxu0 0.0
    %202 = vmatpush2.msra.mxu0 0.0
    %203 = vmatprep.subr.mxu0 0.0
    %204 = vmatpush2.msra.mxu0 0.0
    %205 = vmatprep.mubr.f32.mxu0 0.0
    %206 = vmatmul.mubr.f32.gmra.mxu0 %v108
    %v207 = vpop.f32.mrf.mxu0
    %v208 = vadd.f32 %v139, %v207
    %v209 = vpop.f32.mrf.mxu0
    %210 = vmatprep.mubr.f32.mxu0 0.0
    %211 = vmatmul.mubr.f32.gmra.mxu0 %v109
    %v212 = vpop.f32.mrf.mxu0
    %v213 = vadd.f32 %v139, %v212
    %v214 = vpop.f32.mrf.mxu0
    %215 = vdwg.mxu0
    %v216 = vld [vmem:[%s5] sm:$0xff]
    %v217 = vld [vmem:[%s5 + $0x8] sm:$0xff]
    %v218 = vld [vmem:[%s5 + $0x10] sm:$0xff]
    %v219 = vld [vmem:[%s5 + $0x18] sm:$0xff]
    %v220 = vld [vmem:[%s5 + $0x20] sm:$0xff]
    %v221 = vld [vmem:[%s5 + $0x28] sm:$0xff]
    %v222 = vld [vmem:[%s5 + $0x30] sm:$0xff]
    %v223 = vld [vmem:[%s5 + $0x38] sm:$0xff]
    %v224 = vld [vmem:[%s5 + $0x40] sm:$0xff]
    %v225 = vld [vmem:[%s5 + $0x48] sm:$0xff]
    %v226 = vld [vmem:[%s5 + $0x50] sm:$0xff]
    %v227 = vld [vmem:[%s5 + $0x58] sm:$0xff]
    %v228 = vld [vmem:[%s5 + $0x60] sm:$0xff]
    %v229 = vld [vmem:[%s5 + $0x68] sm:$0xff]
    %v230 = vld [vmem:[%s5 + $0x70] sm:$0xff]
    %v231 = vld [vmem:[%s5 + $0x78] sm:$0xff]
    %v232 = vld [vmem:[%s6] sm:$0x1]
    %v234 = vlaneseq
    %v235 = vshrl.u32 %v234, 7
    %v236 = vsub.s32 0, %v235
    %v237 = vrot.slane %v232, %v236
    %239 = vmatprep.subr.mxu0 0.0
    %240 = vmatpush1.msra.mxu0 %v231
    %241 = vmatprep.subr.mxu0 0.0
    %242 = vmatpush1.msra.mxu0 %v230
    %243 = vmatprep.subr.mxu0 0.0
    %244 = vmatpush1.msra.mxu0 %v229
    %245 = vmatprep.subr.mxu0 0.0
    %246 = vmatpush1.msra.mxu0 %v228
    %247 = vmatprep.subr.mxu0 0.0
    %248 = vmatpush1.msra.mxu0 %v227
    %249 = vmatprep.subr.mxu0 0.0
    %250 = vmatpush1.msra.mxu0 %v226
    %251 = vmatprep.subr.mxu0 0.0
    %252 = vmatpush1.msra.mxu0 %v225
    %253 = vmatprep.subr.mxu0 0.0
    %254 = vmatpush1.msra.mxu0 %v224
    %255 = vmatprep.subr.mxu0 0.0
    %256 = vmatpush1.msra.mxu0 %v223
    %257 = vmatprep.subr.mxu0 0.0
    %258 = vmatpush1.msra.mxu0 %v222
    %259 = vmatprep.subr.mxu0 0.0
    %260 = vmatpush1.msra.mxu0 %v221
    %261 = vmatprep.subr.mxu0 0.0
    %262 = vmatpush1.msra.mxu0 %v220
    %263 = vmatprep.subr.mxu0 0.0
    %264 = vmatpush1.msra.mxu0 %v219
    %265 = vmatprep.subr.mxu0 0.0
    %266 = vmatpush1.msra.mxu0 %v218
    %267 = vmatprep.subr.mxu0 0.0
    %268 = vmatpush1.msra.mxu0 %v217
    %269 = vmatprep.subr.mxu0 0.0
    %270 = vmatpush1.msra.mxu0 %v216
    %271 = vmatprep.subr.mxu0 0.0
    %272 = vmatpush2.msra.mxu0 0.0
    %273 = vmatprep.subr.mxu0 0.0
    %274 = vmatpush2.msra.mxu0 0.0
    %275 = vmatprep.subr.mxu0 0.0
    %276 = vmatpush2.msra.mxu0 0.0
    %277 = vmatprep.subr.mxu0 0.0
    %278 = vmatpush2.msra.mxu0 0.0
    %279 = vmatprep.subr.mxu0 0.0
    %280 = vmatpush2.msra.mxu0 0.0
    %281 = vmatprep.subr.mxu0 0.0
    %282 = vmatpush2.msra.mxu0 0.0
    %283 = vmatprep.subr.mxu0 0.0
    %284 = vmatpush2.msra.mxu0 0.0
    %285 = vmatprep.subr.mxu0 0.0
    %286 = vmatpush2.msra.mxu0 0.0
    %287 = vmatprep.subr.mxu0 0.0
    %288 = vmatpush2.msra.mxu0 0.0
    %289 = vmatprep.subr.mxu0 0.0
    %290 = vmatpush2.msra.mxu0 0.0
    %291 = vmatprep.subr.mxu0 0.0
    %292 = vmatpush2.msra.mxu0 0.0
    %293 = vmatprep.subr.mxu0 0.0
    %294 = vmatpush2.msra.mxu0 0.0
    %295 = vmatprep.subr.mxu0 0.0
    %296 = vmatpush2.msra.mxu0 0.0
    %297 = vmatprep.subr.mxu0 0.0
    %298 = vmatpush2.msra.mxu0 0.0
    %299 = vmatprep.subr.mxu0 0.0
    %300 = vmatpush2.msra.mxu0 0.0
    %301 = vmatprep.subr.mxu0 0.0
    %302 = vmatpush2.msra.mxu0 0.0
    %303 = vmatprep.mubr.f32.mxu0 0.0
    %304 = vmatmul.mubr.f32.gmra.mxu0 %v108
    %v305 = vpop.f32.mrf.mxu0
    %v306 = vadd.f32 %v237, %v305
    %v307 = vpop.f32.mrf.mxu0
    %308 = vmatprep.mubr.f32.mxu0 0.0
    %309 = vmatmul.mubr.f32.gmra.mxu0 %v109
    %v310 = vpop.f32.mrf.mxu0
    %v311 = vadd.f32 %v237, %v310
    %v312 = vpop.f32.mrf.mxu0
    %313 = vdwg.mxu0
    %v314 = vld [vmem:[%s7] sm:$0xff]
    %v315 = vld [vmem:[%s7 + $0x8] sm:$0xff]
    %v316 = vld [vmem:[%s7 + $0x10] sm:$0xff]
    %v317 = vld [vmem:[%s7 + $0x18] sm:$0xff]
    %v318 = vld [vmem:[%s7 + $0x20] sm:$0xff]
    %v319 = vld [vmem:[%s7 + $0x28] sm:$0xff]
    %v320 = vld [vmem:[%s7 + $0x30] sm:$0xff]
    %v321 = vld [vmem:[%s7 + $0x38] sm:$0xff]
    %v322 = vld [vmem:[%s7 + $0x40] sm:$0xff]
    %v323 = vld [vmem:[%s7 + $0x48] sm:$0xff]
    %v324 = vld [vmem:[%s7 + $0x50] sm:$0xff]
    %v325 = vld [vmem:[%s7 + $0x58] sm:$0xff]
    %v326 = vld [vmem:[%s7 + $0x60] sm:$0xff]
    %v327 = vld [vmem:[%s7 + $0x68] sm:$0xff]
    %v328 = vld [vmem:[%s7 + $0x70] sm:$0xff]
    %v329 = vld [vmem:[%s7 + $0x78] sm:$0xff]
    %v330 = vld [vmem:[%s8] sm:$0x1]
    %v332 = vlaneseq
    %v333 = vshrl.u32 %v332, 7
    %v334 = vsub.s32 0, %v333
    %v335 = vrot.slane %v330, %v334
    %337 = vmatprep.subr.mxu0 0.0
    %338 = vmatpush1.msra.mxu0 %v329
    %339 = vmatprep.subr.mxu0 0.0
    %340 = vmatpush1.msra.mxu0 %v328
    %341 = vmatprep.subr.mxu0 0.0
    %342 = vmatpush1.msra.mxu0 %v327
    %343 = vmatprep.subr.mxu0 0.0
    %344 = vmatpush1.msra.mxu0 %v326
    %345 = vmatprep.subr.mxu0 0.0
    %346 = vmatpush1.msra.mxu0 %v325
    %347 = vmatprep.subr.mxu0 0.0
    %348 = vmatpush1.msra.mxu0 %v324
    %349 = vmatprep.subr.mxu0 0.0
    %350 = vmatpush1.msra.mxu0 %v323
    %351 = vmatprep.subr.mxu0 0.0
    %352 = vmatpush1.msra.mxu0 %v322
    %353 = vmatprep.subr.mxu0 0.0
    %354 = vmatpush1.msra.mxu0 %v321
    %355 = vmatprep.subr.mxu0 0.0
    %356 = vmatpush1.msra.mxu0 %v320
    %357 = vmatprep.subr.mxu0 0.0
    %358 = vmatpush1.msra.mxu0 %v319
    %359 = vmatprep.subr.mxu0 0.0
    %360 = vmatpush1.msra.mxu0 %v318
    %361 = vmatprep.subr.mxu0 0.0
    %362 = vmatpush1.msra.mxu0 %v317
    %363 = vmatprep.subr.mxu0 0.0
    %364 = vmatpush1.msra.mxu0 %v316
    %365 = vmatprep.subr.mxu0 0.0
    %366 = vmatpush1.msra.mxu0 %v315
    %367 = vmatprep.subr.mxu0 0.0
    %368 = vmatpush1.msra.mxu0 %v314
    %369 = vmatprep.subr.mxu0 0.0
    %370 = vmatpush2.msra.mxu0 0.0
    %371 = vmatprep.subr.mxu0 0.0
    %372 = vmatpush2.msra.mxu0 0.0
    %373 = vmatprep.subr.mxu0 0.0
    %374 = vmatpush2.msra.mxu0 0.0
    %375 = vmatprep.subr.mxu0 0.0
    %376 = vmatpush2.msra.mxu0 0.0
    %377 = vmatprep.subr.mxu0 0.0
    %378 = vmatpush2.msra.mxu0 0.0
    %379 = vmatprep.subr.mxu0 0.0
    %380 = vmatpush2.msra.mxu0 0.0
    %381 = vmatprep.subr.mxu0 0.0
    %382 = vmatpush2.msra.mxu0 0.0
    %383 = vmatprep.subr.mxu0 0.0
    %384 = vmatpush2.msra.mxu0 0.0
    %385 = vmatprep.subr.mxu0 0.0
    %386 = vmatpush2.msra.mxu0 0.0
    %387 = vmatprep.subr.mxu0 0.0
    %388 = vmatpush2.msra.mxu0 0.0
    %389 = vmatprep.subr.mxu0 0.0
    %390 = vmatpush2.msra.mxu0 0.0
    %391 = vmatprep.subr.mxu0 0.0
    %392 = vmatpush2.msra.mxu0 0.0
    %393 = vmatprep.subr.mxu0 0.0
    %394 = vmatpush2.msra.mxu0 0.0
    %395 = vmatprep.subr.mxu0 0.0
    %396 = vmatpush2.msra.mxu0 0.0
    %397 = vmatprep.subr.mxu0 0.0
    %398 = vmatpush2.msra.mxu0 0.0
    %399 = vmatprep.subr.mxu0 0.0
    %400 = vmatpush2.msra.mxu0 0.0
    %401 = vmatprep.mubr.f32.mxu0 0.0
    %402 = vmatmul.mubr.f32.gmra.mxu0 %v108
    %v403 = vpop.f32.mrf.mxu0
    %v404 = vadd.f32 %v335, %v403
    %v405 = vpop.f32.mrf.mxu0
    %406 = vmatprep.mubr.f32.mxu0 0.0
    %407 = vmatmul.mubr.f32.gmra.mxu0 %v109
    %v408 = vpop.f32.mrf.mxu0
    %v409 = vadd.f32 %v335, %v408
    %v410 = vpop.f32.mrf.mxu0
    %411 = vdwg.mxu0
    %vm412 = vcmask 64512
    %v414 = vsel %vm412, %v208, 0
    %v417 = vsel %vm412, %v306, 0
    %419 = vmatprep.subr.mxu0 0.0
    %420 = vmatpush1.xpose.msra.mxu0 0.0
    %421 = vmatprep.subr.mxu0 0.0
    %422 = vmatpush1.xpose.msra.mxu0 0.0
    %423 = vmatprep.subr.mxu0 0.0
    %424 = vmatpush1.xpose.msra.mxu0 0.0
    %425 = vmatprep.subr.mxu0 0.0
    %426 = vmatpush1.xpose.msra.mxu0 0.0
    %427 = vmatprep.subr.mxu0 0.0
    %428 = vmatpush1.xpose.msra.mxu0 0.0
    %429 = vmatprep.subr.mxu0 0.0
    %430 = vmatpush1.xpose.msra.mxu0 0.0
    %431 = vmatprep.subr.mxu0 0.0
    %432 = vmatpush1.xpose.msra.mxu0 0.0
    %433 = vmatprep.subr.mxu0 0.0
    %434 = vmatpush1.xpose.msra.mxu0 0.0
    %435 = vmatprep.subr.mxu0 0.0
    %436 = vmatpush1.xpose.msra.mxu0 0.0
    %437 = vmatprep.subr.mxu0 0.0
    %438 = vmatpush1.xpose.msra.mxu0 0.0
    %439 = vmatprep.subr.mxu0 0.0
    %440 = vmatpush1.xpose.msra.mxu0 0.0
    %441 = vmatprep.subr.mxu0 0.0
    %442 = vmatpush1.xpose.msra.mxu0 0.0
    %443 = vmatprep.subr.mxu0 0.0
    %444 = vmatpush1.xpose.msra.mxu0 0.0
    %445 = vmatprep.subr.mxu0 0.0
    %446 = vmatpush1.xpose.msra.mxu0 0.0
    %447 = vmatprep.subr.mxu0 0.0
    %448 = vmatpush1.xpose.msra.mxu0 0.0
    %449 = vmatprep.subr.mxu0 0.0
    %450 = vmatpush1.xpose.msra.mxu0 %v417
    %451 = vmatprep.subr.mxu0 0.0
    %452 = vmatpush2.xpose.msra.mxu0 0.0
    %453 = vmatprep.subr.mxu0 0.0
    %454 = vmatpush2.xpose.msra.mxu0 0.0
    %455 = vmatprep.subr.mxu0 0.0
    %456 = vmatpush2.xpose.msra.mxu0 0.0
    %457 = vmatprep.subr.mxu0 0.0
    %458 = vmatpush2.xpose.msra.mxu0 0.0
    %459 = vmatprep.subr.mxu0 0.0
    %460 = vmatpush2.xpose.msra.mxu0 0.0
    %461 = vmatprep.subr.mxu0 0.0
    %462 = vmatpush2.xpose.msra.mxu0 0.0
    %463 = vmatprep.subr.mxu0 0.0
    %464 = vmatpush2.xpose.msra.mxu0 0.0
    %465 = vmatprep.subr.mxu0 0.0
    %466 = vmatpush2.xpose.msra.mxu0 0.0
    %467 = vmatprep.subr.mxu0 0.0
    %468 = vmatpush2.xpose.msra.mxu0 0.0
    %469 = vmatprep.subr.mxu0 0.0
    %470 = vmatpush2.xpose.msra.mxu0 0.0
    %471 = vmatprep.subr.mxu0 0.0
    %472 = vmatpush2.xpose.msra.mxu0 0.0
    %473 = vmatprep.subr.mxu0 0.0
    %474 = vmatpush2.xpose.msra.mxu0 0.0
    %475 = vmatprep.subr.mxu0 0.0
    %476 = vmatpush2.xpose.msra.mxu0 0.0
    %477 = vmatprep.subr.mxu0 0.0
    %478 = vmatpush2.xpose.msra.mxu0 0.0
    %479 = vmatprep.subr.mxu0 0.0
    %480 = vmatpush2.xpose.msra.mxu0 0.0
    %481 = vmatprep.subr.mxu0 0.0
    %482 = vmatpush2.xpose.msra.mxu0 0.0
    %483 = vmatprep.mubr.f32.mxu0 0.0
    %484 = vmatmul.mubr.f32.gmra.mxu0 %v414
    %v485 = vpop.f32.mrf.mxu0
    %v486 = vadd.f32 0.0, %v485
    %v487 = vpop.f32.mrf.mxu0
    %488 = vdwg.mxu0
    %v490 = vsel %vm412, %v213, 0
    %v493 = vsel %vm412, %v311, 0
    %495 = vmatprep.subr.mxu0 0.0
    %496 = vmatpush1.xpose.msra.mxu0 0.0
    %497 = vmatprep.subr.mxu0 0.0
    %498 = vmatpush1.xpose.msra.mxu0 0.0
    %499 = vmatprep.subr.mxu0 0.0
    %500 = vmatpush1.xpose.msra.mxu0 0.0
    %501 = vmatprep.subr.mxu0 0.0
    %502 = vmatpush1.xpose.msra.mxu0 0.0
    %503 = vmatprep.subr.mxu0 0.0
    %504 = vmatpush1.xpose.msra.mxu0 0.0
    %505 = vmatprep.subr.mxu0 0.0
    %506 = vmatpush1.xpose.msra.mxu0 0.0
    %507 = vmatprep.subr.mxu0 0.0
    %508 = vmatpush1.xpose.msra.mxu0 0.0
    %509 = vmatprep.subr.mxu0 0.0
    %510 = vmatpush1.xpose.msra.mxu0 0.0
    %511 = vmatprep.subr.mxu0 0.0
    %512 = vmatpush1.xpose.msra.mxu0 0.0
    %513 = vmatprep.subr.mxu0 0.0
    %514 = vmatpush1.xpose.msra.mxu0 0.0
    %515 = vmatprep.subr.mxu0 0.0
    %516 = vmatpush1.xpose.msra.mxu0 0.0
    %517 = vmatprep.subr.mxu0 0.0
    %518 = vmatpush1.xpose.msra.mxu0 0.0
    %519 = vmatprep.subr.mxu0 0.0
    %520 = vmatpush1.xpose.msra.mxu0 0.0
    %521 = vmatprep.subr.mxu0 0.0
    %522 = vmatpush1.xpose.msra.mxu0 0.0
    %523 = vmatprep.subr.mxu0 0.0
    %524 = vmatpush1.xpose.msra.mxu0 0.0
    %525 = vmatprep.subr.mxu0 0.0
    %526 = vmatpush1.xpose.msra.mxu0 %v493
    %527 = vmatprep.subr.mxu0 0.0
    %528 = vmatpush2.xpose.msra.mxu0 0.0
    %529 = vmatprep.subr.mxu0 0.0
    %530 = vmatpush2.xpose.msra.mxu0 0.0
    %531 = vmatprep.subr.mxu0 0.0
    %532 = vmatpush2.xpose.msra.mxu0 0.0
    %533 = vmatprep.subr.mxu0 0.0
    %534 = vmatpush2.xpose.msra.mxu0 0.0
    %535 = vmatprep.subr.mxu0 0.0
    %536 = vmatpush2.xpose.msra.mxu0 0.0
    %537 = vmatprep.subr.mxu0 0.0
    %538 = vmatpush2.xpose.msra.mxu0 0.0
    %539 = vmatprep.subr.mxu0 0.0
    %540 = vmatpush2.xpose.msra.mxu0 0.0
    %541 = vmatprep.subr.mxu0 0.0
    %542 = vmatpush2.xpose.msra.mxu0 0.0
    %543 = vmatprep.subr.mxu0 0.0
    %544 = vmatpush2.xpose.msra.mxu0 0.0
    %545 = vmatprep.subr.mxu0 0.0
    %546 = vmatpush2.xpose.msra.mxu0 0.0
    %547 = vmatprep.subr.mxu0 0.0
    %548 = vmatpush2.xpose.msra.mxu0 0.0
    %549 = vmatprep.subr.mxu0 0.0
    %550 = vmatpush2.xpose.msra.mxu0 0.0
    %551 = vmatprep.subr.mxu0 0.0
    %552 = vmatpush2.xpose.msra.mxu0 0.0
    %553 = vmatprep.subr.mxu0 0.0
    %554 = vmatpush2.xpose.msra.mxu0 0.0
    %555 = vmatprep.subr.mxu0 0.0
    %556 = vmatpush2.xpose.msra.mxu0 0.0
    %557 = vmatprep.subr.mxu0 0.0
    %558 = vmatpush2.xpose.msra.mxu0 0.0
    %559 = vmatprep.mubr.f32.mxu0 0.0
    %560 = vmatmul.mubr.f32.gmra.mxu0 %v490
    %v561 = vpop.f32.mrf.mxu0
    %v562 = vadd.f32 0.0, %v561
    %v563 = vpop.f32.mrf.mxu0
    %564 = vdwg.mxu0
    %v565 = vmul.f32 %v486, 0.35355338
    %v566 = vmul.f32 %v562, 0.35355338
    %v567 = vadd.f32 %v565, %v67
    %v568 = vadd.f32 %v566, %v67
    %v569 = vsel %vm412, %v567, -inf
    %570 = vmax.xlane.f32.xlu0 %v569
    %v571 = vpop.xlane.xlu0 %570
    %v572 = vsel %vm412, %v568, -inf
    %573 = vmax.xlane.f32.xlu0 %v572
    %v574 = vpop.xlane.xlu0 %573
    %v575 = vsub.f32 %v567, %v571
    %v576 = vsub.f32 %v568, %v574
    %v577 = vmul.f32 %v575, 1.442695
    %v578 = vpow.pop %v577
    %v579 = vmul.f32 %v576, 1.442695
    %v580 = vpow.pop %v579
    %v581 = vsel %vm412, %v578, 0.0
    %582 = vadd.xlane.f32.xlu0 %v581
    %v583 = vpop.xlane.xlu0 %582
    %v584 = vsel %vm412, %v580, 0.0
    %585 = vadd.xlane.f32.xlu0 %v584
    %v586 = vpop.xlane.xlu0 %585
    %v587 = vrcp.pop %v583
    %v588 = vrcp.pop %v586
    %v589 = vmul.f32 %v578, %v587
    %v590 = vmul.f32 %v580, %v588
    %v592 = vsel %vm412, %v589, 0
    %594 = vmatprep.subr.mxu0 0.0
    %595 = vmatpush1.msra.mxu0 0.0
    %596 = vmatprep.subr.mxu0 0.0
    %597 = vmatpush1.msra.mxu0 0.0
    %598 = vmatprep.subr.mxu0 0.0
    %599 = vmatpush1.msra.mxu0 0.0
    %600 = vmatprep.subr.mxu0 0.0
    %601 = vmatpush1.msra.mxu0 0.0
    %602 = vmatprep.subr.mxu0 0.0
    %603 = vmatpush1.msra.mxu0 0.0
    %604 = vmatprep.subr.mxu0 0.0
    %605 = vmatpush1.msra.mxu0 0.0
    %606 = vmatprep.subr.mxu0 0.0
    %607 = vmatpush1.msra.mxu0 0.0
    %608 = vmatprep.subr.mxu0 0.0
    %609 = vmatpush1.msra.mxu0 0.0
    %610 = vmatprep.subr.mxu0 0.0
    %611 = vmatpush1.msra.mxu0 0.0
    %612 = vmatprep.subr.mxu0 0.0
    %613 = vmatpush1.msra.mxu0 0.0
    %614 = vmatprep.subr.mxu0 0.0
    %615 = vmatpush1.msra.mxu0 0.0
    %616 = vmatprep.subr.mxu0 0.0
    %617 = vmatpush1.msra.mxu0 0.0
    %618 = vmatprep.subr.mxu0 0.0
    %619 = vmatpush1.msra.mxu0 0.0
    %620 = vmatprep.subr.mxu0 0.0
    %621 = vmatpush1.msra.mxu0 0.0
    %622 = vmatprep.subr.mxu0 0.0
    %623 = vmatpush1.msra.mxu0 0.0
    %624 = vmatprep.subr.mxu0 0.0
    %625 = vmatpush1.msra.mxu0 %v404
    %626 = vmatprep.subr.mxu0 0.0
    %627 = vmatpush2.msra.mxu0 0.0
    %628 = vmatprep.subr.mxu0 0.0
    %629 = vmatpush2.msra.mxu0 0.0
    %630 = vmatprep.subr.mxu0 0.0
    %631 = vmatpush2.msra.mxu0 0.0
    %632 = vmatprep.subr.mxu0 0.0
    %633 = vmatpush2.msra.mxu0 0.0
    %634 = vmatprep.subr.mxu0 0.0
    %635 = vmatpush2.msra.mxu0 0.0
    %636 = vmatprep.subr.mxu0 0.0
    %637 = vmatpush2.msra.mxu0 0.0
    %638 = vmatprep.subr.mxu0 0.0
    %639 = vmatpush2.msra.mxu0 0.0
    %640 = vmatprep.subr.mxu0 0.0
    %641 = vmatpush2.msra.mxu0 0.0
    %642 = vmatprep.subr.mxu0 0.0
    %643 = vmatpush2.msra.mxu0 0.0
    %644 = vmatprep.subr.mxu0 0.0
    %645 = vmatpush2.msra.mxu0 0.0
    %646 = vmatprep.subr.mxu0 0.0
    %647 = vmatpush2.msra.mxu0 0.0
    %648 = vmatprep.subr.mxu0 0.0
    %649 = vmatpush2.msra.mxu0 0.0
    %650 = vmatprep.subr.mxu0 0.0
    %651 = vmatpush2.msra.mxu0 0.0
    %652 = vmatprep.subr.mxu0 0.0
    %653 = vmatpush2.msra.mxu0 0.0
    %654 = vmatprep.subr.mxu0 0.0
    %655 = vmatpush2.msra.mxu0 0.0
    %656 = vmatprep.subr.mxu0 0.0
    %657 = vmatpush2.msra.mxu0 0.0
    %658 = vmatprep.mubr.f32.mxu0 0.0
    %659 = vmatmul.mubr.f32.gmra.mxu0 %v592
    %v660 = vpop.f32.mrf.mxu0
    %v661 = vadd.f32 0.0, %v660
    %v662 = vpop.f32.mrf.mxu0
    %663 = vdwg.mxu0
    %v665 = vsel %vm412, %v590, 0
    %667 = vmatprep.subr.mxu0 0.0
    %668 = vmatpush1.msra.mxu0 0.0
    %669 = vmatprep.subr.mxu0 0.0
    %670 = vmatpush1.msra.mxu0 0.0
    %671 = vmatprep.subr.mxu0 0.0
    %672 = vmatpush1.msra.mxu0 0.0
    %673 = vmatprep.subr.mxu0 0.0
    %674 = vmatpush1.msra.mxu0 0.0
    %675 = vmatprep.subr.mxu0 0.0
    %676 = vmatpush1.msra.mxu0 0.0
    %677 = vmatprep.subr.mxu0 0.0
    %678 = vmatpush1.msra.mxu0 0.0
    %679 = vmatprep.subr.mxu0 0.0
    %680 = vmatpush1.msra.mxu0 0.0
    %681 = vmatprep.subr.mxu0 0.0
    %682 = vmatpush1.msra.mxu0 0.0
    %683 = vmatprep.subr.mxu0 0.0
    %684 = vmatpush1.msra.mxu0 0.0
    %685 = vmatprep.subr.mxu0 0.0
    %686 = vmatpush1.msra.mxu0 0.0
    %687 = vmatprep.subr.mxu0 0.0
    %688 = vmatpush1.msra.mxu0 0.0
    %689 = vmatprep.subr.mxu0 0.0
    %690 = vmatpush1.msra.mxu0 0.0
    %691 = vmatprep.subr.mxu0 0.0
    %692 = vmatpush1.msra.mxu0 0.0
    %693 = vmatprep.subr.mxu0 0.0
    %694 = vmatpush1.msra.mxu0 0.0
    %695 = vmatprep.subr.mxu0 0.0
    %696 = vmatpush1.msra.mxu0 0.0
    %697 = vmatprep.subr.mxu0 0.0
    %698 = vmatpush1.msra.mxu0 %v409
    %699 = vmatprep.subr.mxu0 0.0
    %700 = vmatpush2.msra.mxu0 0.0
    %701 = vmatprep.subr.mxu0 0.0
    %702 = vmatpush2.msra.mxu0 0.0
    %703 = vmatprep.subr.mxu0 0.0
    %704 = vmatpush2.msra.mxu0 0.0
    %705 = vmatprep.subr.mxu0 0.0
    %706 = vmatpush2.msra.mxu0 0.0
    %707 = vmatprep.subr.mxu0 0.0
    %708 = vmatpush2.msra.mxu0 0.0
    %709 = vmatprep.subr.mxu0 0.0
    %710 = vmatpush2.msra.mxu0 0.0
    %711 = vmatprep.subr.mxu0 0.0
    %712 = vmatpush2.msra.mxu0 0.0
    %713 = vmatprep.subr.mxu0 0.0
    %714 = vmatpush2.msra.mxu0 0.0
    %715 = vmatprep.subr.mxu0 0.0
    %716 = vmatpush2.msra.mxu0 0.0
    %717 = vmatprep.subr.mxu0 0.0
    %718 = vmatpush2.msra.mxu0 0.0
    %719 = vmatprep.subr.mxu0 0.0
    %720 = vmatpush2.msra.mxu0 0.0
    %721 = vmatprep.subr.mxu0 0.0
    %722 = vmatpush2.msra.mxu0 0.0
    %723 = vmatprep.subr.mxu0 0.0
    %724 = vmatpush2.msra.mxu0 0.0
    %725 = vmatprep.subr.mxu0 0.0
    %726 = vmatpush2.msra.mxu0 0.0
    %727 = vmatprep.subr.mxu0 0.0
    %728 = vmatpush2.msra.mxu0 0.0
    %729 = vmatprep.subr.mxu0 0.0
    %730 = vmatpush2.msra.mxu0 0.0
    %731 = vmatprep.mubr.f32.mxu0 0.0
    %732 = vmatmul.mubr.f32.gmra.mxu0 %v665
    %v733 = vpop.f32.mrf.mxu0
    %v734 = vadd.f32 0.0, %v733
    %v735 = vpop.f32.mrf.mxu0
    %736 = vdwg.mxu0
    %v737 = vld [vmem:[%s9] sm:$0xff]
    %v739 = vsel %vm412, %v661, 0
    %v742 = vsel %vm412, %v734, 0
    %744 = vmatprep.subr.mxu0 0.0
    %745 = vmatpush1.msra.mxu0 0.0
    %746 = vmatprep.subr.mxu0 0.0
    %747 = vmatpush1.msra.mxu0 0.0
    %748 = vmatprep.subr.mxu0 0.0
    %749 = vmatpush1.msra.mxu0 0.0
    %750 = vmatprep.subr.mxu0 0.0
    %751 = vmatpush1.msra.mxu0 0.0
    %752 = vmatprep.subr.mxu0 0.0
    %753 = vmatpush1.msra.mxu0 0.0
    %754 = vmatprep.subr.mxu0 0.0
    %755 = vmatpush1.msra.mxu0 0.0
    %756 = vmatprep.subr.mxu0 0.0
    %757 = vmatpush1.msra.mxu0 0.0
    %758 = vmatprep.subr.mxu0 0.0
    %759 = vmatpush1.msra.mxu0 0.0
    %760 = vmatprep.subr.mxu0 0.0
    %761 = vmatpush1.msra.mxu0 0.0
    %762 = vmatprep.subr.mxu0 0.0
    %763 = vmatpush1.msra.mxu0 0.0
    %764 = vmatprep.subr.mxu0 0.0
    %765 = vmatpush1.msra.mxu0 0.0
    %766 = vmatprep.subr.mxu0 0.0
    %767 = vmatpush1.msra.mxu0 0.0
    %768 = vmatprep.subr.mxu0 0.0
    %769 = vmatpush1.msra.mxu0 0.0
    %770 = vmatprep.subr.mxu0 0.0
    %771 = vmatpush1.msra.mxu0 0.0
    %772 = vmatprep.subr.mxu0 0.0
    %773 = vmatpush1.msra.mxu0 0.0
    %774 = vmatprep.subr.mxu0 0.0
    %775 = vmatpush1.msra.mxu0 %v737
    %776 = vmatprep.subr.mxu0 0.0
    %777 = vmatpush2.msra.mxu0 0.0
    %778 = vmatprep.subr.mxu0 0.0
    %779 = vmatpush2.msra.mxu0 0.0
    %780 = vmatprep.subr.mxu0 0.0
    %781 = vmatpush2.msra.mxu0 0.0
    %782 = vmatprep.subr.mxu0 0.0
    %783 = vmatpush2.msra.mxu0 0.0
    %784 = vmatprep.subr.mxu0 0.0
    %785 = vmatpush2.msra.mxu0 0.0
    %786 = vmatprep.subr.mxu0 0.0
    %787 = vmatpush2.msra.mxu0 0.0
    %788 = vmatprep.subr.mxu0 0.0
    %789 = vmatpush2.msra.mxu0 0.0
    %790 = vmatprep.subr.mxu0 0.0
    %791 = vmatpush2.msra.mxu0 0.0
    %792 = vmatprep.subr.mxu0 0.0
    %793 = vmatpush2.msra.mxu0 0.0
    %794 = vmatprep.subr.mxu0 0.0
    %795 = vmatpush2.msra.mxu0 0.0
    %796 = vmatprep.subr.mxu0 0.0
    %797 = vmatpush2.msra.mxu0 0.0
    %798 = vmatprep.subr.mxu0 0.0
    %799 = vmatpush2.msra.mxu0 0.0
    %800 = vmatprep.subr.mxu0 0.0
    %801 = vmatpush2.msra.mxu0 0.0
    %802 = vmatprep.subr.mxu0 0.0
    %803 = vmatpush2.msra.mxu0 0.0
    %804 = vmatprep.subr.mxu0 0.0
    %805 = vmatpush2.msra.mxu0 0.0
    %806 = vmatprep.subr.mxu0 0.0
    %807 = vmatpush2.msra.mxu0 0.0
    %808 = vmatprep.mubr.f32.mxu0 0.0
    %809 = vmatmul.mubr.f32.gmra.mxu0 %v739
    %v810 = vpop.f32.mrf.mxu0
    %v811 = vadd.f32 0.0, %v810
    %v812 = vpop.f32.mrf.mxu0
    %813 = vmatprep.mubr.f32.mxu0 0.0
    %814 = vmatmul.mubr.f32.gmra.mxu0 %v742
    %v815 = vpop.f32.mrf.mxu0
    %v816 = vadd.f32 0.0, %v815
    %v817 = vpop.f32.mrf.mxu0
    %818 = vdwg.mxu0
    %v819 = vadd.f32 %v117, %v811
    %v820 = vadd.f32 %v117, %v816
    %s821 = scalar_lea.vmem %s3, 128
    %v822 = vld [vmem:[%s821] sm:$0xff]
    %v823 = vld [vmem:[%s821 + $0x8] sm:$0xff]
    %v824 = vld [vmem:[%s821 + $0x10] sm:$0xff]
    %v825 = vld [vmem:[%s821 + $0x18] sm:$0xff]
    %v826 = vld [vmem:[%s821 + $0x20] sm:$0xff]
    %v827 = vld [vmem:[%s821 + $0x28] sm:$0xff]
    %v828 = vld [vmem:[%s821 + $0x30] sm:$0xff]
    %v829 = vld [vmem:[%s821 + $0x38] sm:$0xff]
    %v830 = vld [vmem:[%s821 + $0x40] sm:$0xff]
    %v831 = vld [vmem:[%s821 + $0x48] sm:$0xff]
    %v832 = vld [vmem:[%s821 + $0x50] sm:$0xff]
    %v833 = vld [vmem:[%s821 + $0x58] sm:$0xff]
    %v834 = vld [vmem:[%s821 + $0x60] sm:$0xff]
    %v835 = vld [vmem:[%s821 + $0x68] sm:$0xff]
    %v836 = vld [vmem:[%s821 + $0x70] sm:$0xff]
    %v837 = vld [vmem:[%s821 + $0x78] sm:$0xff]
    %s838 = scalar_lea.vmem %s4, 1
    %v839 = vld [vmem:[%s838] sm:$0x1]
    %v841 = vlaneseq
    %v842 = vshrl.u32 %v841, 7
    %v843 = vsub.s32 0, %v842
    %v844 = vrot.slane %v839, %v843
    %846 = vmatprep.subr.mxu0 0.0
    %847 = vmatpush1.msra.mxu0 %v837
    %848 = vmatprep.subr.mxu0 0.0
    %849 = vmatpush1.msra.mxu0 %v836
    %850 = vmatprep.subr.mxu0 0.0
    %851 = vmatpush1.msra.mxu0 %v835
    %852 = vmatprep.subr.mxu0 0.0
    %853 = vmatpush1.msra.mxu0 %v834
    %854 = vmatprep.subr.mxu0 0.0
    %855 = vmatpush1.msra.mxu0 %v833
    %856 = vmatprep.subr.mxu0 0.0
    %857 = vmatpush1.msra.mxu0 %v832
    %858 = vmatprep.subr.mxu0 0.0
    %859 = vmatpush1.msra.mxu0 %v831
    %860 = vmatprep.subr.mxu0 0.0
    %861 = vmatpush1.msra.mxu0 %v830
    %862 = vmatprep.subr.mxu0 0.0
    %863 = vmatpush1.msra.mxu0 %v829
    %864 = vmatprep.subr.mxu0 0.0
    %865 = vmatpush1.msra.mxu0 %v828
    %866 = vmatprep.subr.mxu0 0.0
    %867 = vmatpush1.msra.mxu0 %v827
    %868 = vmatprep.subr.mxu0 0.0
    %869 = vmatpush1.msra.mxu0 %v826
    %870 = vmatprep.subr.mxu0 0.0
    %871 = vmatpush1.msra.mxu0 %v825
    %872 = vmatprep.subr.mxu0 0.0
    %873 = vmatpush1.msra.mxu0 %v824
    %874 = vmatprep.subr.mxu0 0.0
    %875 = vmatpush1.msra.mxu0 %v823
    %876 = vmatprep.subr.mxu0 0.0
    %877 = vmatpush1.msra.mxu0 %v822
    %878 = vmatprep.subr.mxu0 0.0
    %879 = vmatpush2.msra.mxu0 0.0
    %880 = vmatprep.subr.mxu0 0.0
    %881 = vmatpush2.msra.mxu0 0.0
    %882 = vmatprep.subr.mxu0 0.0
    %883 = vmatpush2.msra.mxu0 0.0
    %884 = vmatprep.subr.mxu0 0.0
    %885 = vmatpush2.msra.mxu0 0.0
    %886 = vmatprep.subr.mxu0 0.0
    %887 = vmatpush2.msra.mxu0 0.0
    %888 = vmatprep.subr.mxu0 0.0
    %889 = vmatpush2.msra.mxu0 0.0
    %890 = vmatprep.subr.mxu0 0.0
    %891 = vmatpush2.msra.mxu0 0.0
    %892 = vmatprep.subr.mxu0 0.0
    %893 = vmatpush2.msra.mxu0 0.0
    %894 = vmatprep.subr.mxu0 0.0
    %895 = vmatpush2.msra.mxu0 0.0
    %896 = vmatprep.subr.mxu0 0.0
    %897 = vmatpush2.msra.mxu0 0.0
    %898 = vmatprep.subr.mxu0 0.0
    %899 = vmatpush2.msra.mxu0 0.0
    %900 = vmatprep.subr.mxu0 0.0
    %901 = vmatpush2.msra.mxu0 0.0
    %902 = vmatprep.subr.mxu0 0.0
    %903 = vmatpush2.msra.mxu0 0.0
    %904 = vmatprep.subr.mxu0 0.0
    %905 = vmatpush2.msra.mxu0 0.0
    %906 = vmatprep.subr.mxu0 0.0
    %907 = vmatpush2.msra.mxu0 0.0
    %908 = vmatprep.subr.mxu0 0.0
    %909 = vmatpush2.msra.mxu0 0.0
    %910 = vmatprep.mubr.f32.mxu0 0.0
    %911 = vmatmul.mubr.f32.gmra.mxu0 %v108
    %v912 = vpop.f32.mrf.mxu0
    %v913 = vadd.f32 %v844, %v912
    %v914 = vpop.f32.mrf.mxu0
    %915 = vmatprep.mubr.f32.mxu0 0.0
    %916 = vmatmul.mubr.f32.gmra.mxu0 %v109
    %v917 = vpop.f32.mrf.mxu0
    %v918 = vadd.f32 %v844, %v917
    %v919 = vpop.f32.mrf.mxu0
    %920 = vdwg.mxu0
    %s921 = scalar_lea.vmem %s5, 128
    %v922 = vld [vmem:[%s921] sm:$0xff]
    %v923 = vld [vmem:[%s921 + $0x8] sm:$0xff]
    %v924 = vld [vmem:[%s921 + $0x10] sm:$0xff]
    %v925 = vld [vmem:[%s921 + $0x18] sm:$0xff]
    %v926 = vld [vmem:[%s921 + $0x20] sm:$0xff]
    %v927 = vld [vmem:[%s921 + $0x28] sm:$0xff]
    %v928 = vld [vmem:[%s921 + $0x30] sm:$0xff]
    %v929 = vld [vmem:[%s921 + $0x38] sm:$0xff]
    %v930 = vld [vmem:[%s921 + $0x40] sm:$0xff]
    %v931 = vld [vmem:[%s921 + $0x48] sm:$0xff]
    %v932 = vld [vmem:[%s921 + $0x50] sm:$0xff]
    %v933 = vld [vmem:[%s921 + $0x58] sm:$0xff]
    %v934 = vld [vmem:[%s921 + $0x60] sm:$0xff]
    %v935 = vld [vmem:[%s921 + $0x68] sm:$0xff]
    %v936 = vld [vmem:[%s921 + $0x70] sm:$0xff]
    %v937 = vld [vmem:[%s921 + $0x78] sm:$0xff]
    %s938 = scalar_lea.vmem %s6, 1
    %v939 = vld [vmem:[%s938] sm:$0x1]
    %v941 = vlaneseq
    %v942 = vshrl.u32 %v941, 7
    %v943 = vsub.s32 0, %v942
    %v944 = vrot.slane %v939, %v943
    %946 = vmatprep.subr.mxu0 0.0
    %947 = vmatpush1.msra.mxu0 %v937
    %948 = vmatprep.subr.mxu0 0.0
    %949 = vmatpush1.msra.mxu0 %v936
    %950 = vmatprep.subr.mxu0 0.0
    %951 = vmatpush1.msra.mxu0 %v935
    %952 = vmatprep.subr.mxu0 0.0
    %953 = vmatpush1.msra.mxu0 %v934
    %954 = vmatprep.subr.mxu0 0.0
    %955 = vmatpush1.msra.mxu0 %v933
    %956 = vmatprep.subr.mxu0 0.0
    %957 = vmatpush1.msra.mxu0 %v932
    %958 = vmatprep.subr.mxu0 0.0
    %959 = vmatpush1.msra.mxu0 %v931
    %960 = vmatprep.subr.mxu0 0.0
    %961 = vmatpush1.msra.mxu0 %v930
    %962 = vmatprep.subr.mxu0 0.0
    %963 = vmatpush1.msra.mxu0 %v929
    %964 = vmatprep.subr.mxu0 0.0
    %965 = vmatpush1.msra.mxu0 %v928
    %966 = vmatprep.subr.mxu0 0.0
    %967 = vmatpush1.msra.mxu0 %v927
    %968 = vmatprep.subr.mxu0 0.0
    %969 = vmatpush1.msra.mxu0 %v926
    %970 = vmatprep.subr.mxu0 0.0
    %971 = vmatpush1.msra.mxu0 %v925
    %972 = vmatprep.subr.mxu0 0.0
    %973 = vmatpush1.msra.mxu0 %v924
    %974 = vmatprep.subr.mxu0 0.0
    %975 = vmatpush1.msra.mxu0 %v923
    %976 = vmatprep.subr.mxu0 0.0
    %977 = vmatpush1.msra.mxu0 %v922
    %978 = vmatprep.subr.mxu0 0.0
    %979 = vmatpush2.msra.mxu0 0.0
    %980 = vmatprep.subr.mxu0 0.0
    %981 = vmatpush2.msra.mxu0 0.0
    %982 = vmatprep.subr.mxu0 0.0
    %983 = vmatpush2.msra.mxu0 0.0
    %984 = vmatprep.subr.mxu0 0.0
    %985 = vmatpush2.msra.mxu0 0.0
    %986 = vmatprep.subr.mxu0 0.0
    %987 = vmatpush2.msra.mxu0 0.0
    %988 = vmatprep.subr.mxu0 0.0
    %989 = vmatpush2.msra.mxu0 0.0
    %990 = vmatprep.subr.mxu0 0.0
    %991 = vmatpush2.msra.mxu0 0.0
    %992 = vmatprep.subr.mxu0 0.0
    %993 = vmatpush2.msra.mxu0 0.0
    %994 = vmatprep.subr.mxu0 0.0
    %995 = vmatpush2.msra.mxu0 0.0
    %996 = vmatprep.subr.mxu0 0.0
    %997 = vmatpush2.msra.mxu0 0.0
    %998 = vmatprep.subr.mxu0 0.0
    %999 = vmatpush2.msra.mxu0 0.0
    %1000 = vmatprep.subr.mxu0 0.0
    %1001 = vmatpush2.msra.mxu0 0.0
    %1002 = vmatprep.subr.mxu0 0.0
    %1003 = vmatpush2.msra.mxu0 0.0
    %1004 = vmatprep.subr.mxu0 0.0
    %1005 = vmatpush2.msra.mxu0 0.0
    %1006 = vmatprep.subr.mxu0 0.0
    %1007 = vmatpush2.msra.mxu0 0.0
    %1008 = vmatprep.subr.mxu0 0.0
    %1009 = vmatpush2.msra.mxu0 0.0
    %1010 = vmatprep.mubr.f32.mxu0 0.0
    %1011 = vmatmul.mubr.f32.gmra.mxu0 %v108
    %v1012 = vpop.f32.mrf.mxu0
    %v1013 = vadd.f32 %v944, %v1012
    %v1014 = vpop.f32.mrf.mxu0
    %1015 = vmatprep.mubr.f32.mxu0 0.0
    %1016 = vmatmul.mubr.f32.gmra.mxu0 %v109
    %v1017 = vpop.f32.mrf.mxu0
    %v1018 = vadd.f32 %v944, %v1017
    %v1019 = vpop.f32.mrf.mxu0
    %1020 = vdwg.mxu0
    %s1021 = scalar_lea.vmem %s7, 128
    %v1022 = vld [vmem:[%s1021] sm:$0xff]
    %v1023 = vld [vmem:[%s1021 + $0x8] sm:$0xff]
    %v1024 = vld [vmem:[%s1021 + $0x10] sm:$0xff]
    %v1025 = vld [vmem:[%s1021 + $0x18] sm:$0xff]
    %v1026 = vld [vmem:[%s1021 + $0x20] sm:$0xff]
    %v1027 = vld [vmem:[%s1021 + $0x28] sm:$0xff]
    %v1028 = vld [vmem:[%s1021 + $0x30] sm:$0xff]
    %v1029 = vld [vmem:[%s1021 + $0x38] sm:$0xff]
    %v1030 = vld [vmem:[%s1021 + $0x40] sm:$0xff]
    %v1031 = vld [vmem:[%s1021 + $0x48] sm:$0xff]
    %v1032 = vld [vmem:[%s1021 + $0x50] sm:$0xff]
    %v1033 = vld [vmem:[%s1021 + $0x58] sm:$0xff]
    %v1034 = vld [vmem:[%s1021 + $0x60] sm:$0xff]
    %v1035 = vld [vmem:[%s1021 + $0x68] sm:$0xff]
    %v1036 = vld [vmem:[%s1021 + $0x70] sm:$0xff]
    %v1037 = vld [vmem:[%s1021 + $0x78] sm:$0xff]
    %s1038 = scalar_lea.vmem %s8, 1
    %v1039 = vld [vmem:[%s1038] sm:$0x1]
    %v1041 = vlaneseq
    %v1042 = vshrl.u32 %v1041, 7
    %v1043 = vsub.s32 0, %v1042
    %v1044 = vrot.slane %v1039, %v1043
    %1046 = vmatprep.subr.mxu0 0.0
    %1047 = vmatpush1.msra.mxu0 %v1037
    %1048 = vmatprep.subr.mxu0 0.0
    %1049 = vmatpush1.msra.mxu0 %v1036
    %1050 = vmatprep.subr.mxu0 0.0
    %1051 = vmatpush1.msra.mxu0 %v1035
    %1052 = vmatprep.subr.mxu0 0.0
    %1053 = vmatpush1.msra.mxu0 %v1034
    %1054 = vmatprep.subr.mxu0 0.0
    %1055 = vmatpush1.msra.mxu0 %v1033
    %1056 = vmatprep.subr.mxu0 0.0
    %1057 = vmatpush1.msra.mxu0 %v1032
    %1058 = vmatprep.subr.mxu0 0.0
    %1059 = vmatpush1.msra.mxu0 %v1031
    %1060 = vmatprep.subr.mxu0 0.0
    %1061 = vmatpush1.msra.mxu0 %v1030
    %1062 = vmatprep.subr.mxu0 0.0
    %1063 = vmatpush1.msra.mxu0 %v1029
    %1064 = vmatprep.subr.mxu0 0.0
    %1065 = vmatpush1.msra.mxu0 %v1028
    %1066 = vmatprep.subr.mxu0 0.0
    %1067 = vmatpush1.msra.mxu0 %v1027
    %1068 = vmatprep.subr.mxu0 0.0
    %1069 = vmatpush1.msra.mxu0 %v1026
    %1070 = vmatprep.subr.mxu0 0.0
    %1071 = vmatpush1.msra.mxu0 %v1025
    %1072 = vmatprep.subr.mxu0 0.0
    %1073 = vmatpush1.msra.mxu0 %v1024
    %1074 = vmatprep.subr.mxu0 0.0
    %1075 = vmatpush1.msra.mxu0 %v1023
    %1076 = vmatprep.subr.mxu0 0.0
    %1077 = vmatpush1.msra.mxu0 %v1022
    %1078 = vmatprep.subr.mxu0 0.0
    %1079 = vmatpush2.msra.mxu0 0.0
    %1080 = vmatprep.subr.mxu0 0.0
    %1081 = vmatpush2.msra.mxu0 0.0
    %1082 = vmatprep.subr.mxu0 0.0
    %1083 = vmatpush2.msra.mxu0 0.0
    %1084 = vmatprep.subr.mxu0 0.0
    %1085 = vmatpush2.msra.mxu0 0.0
    %1086 = vmatprep.subr.mxu0 0.0
    %1087 = vmatpush2.msra.mxu0 0.0
    %1088 = vmatprep.subr.mxu0 0.0
    %1089 = vmatpush2.msra.mxu0 0.0
    %1090 = vmatprep.subr.mxu0 0.0
    %1091 = vmatpush2.msra.mxu0 0.0
    %1092 = vmatprep.subr.mxu0 0.0
    %1093 = vmatpush2.msra.mxu0 0.0
    %1094 = vmatprep.subr.mxu0 0.0
    %1095 = vmatpush2.msra.mxu0 0.0
    %1096 = vmatprep.subr.mxu0 0.0
    %1097 = vmatpush2.msra.mxu0 0.0
    %1098 = vmatprep.subr.mxu0 0.0
    %1099 = vmatpush2.msra.mxu0 0.0
    %1100 = vmatprep.subr.mxu0 0.0
    %1101 = vmatpush2.msra.mxu0 0.0
    %1102 = vmatprep.subr.mxu0 0.0
    %1103 = vmatpush2.msra.mxu0 0.0
    %1104 = vmatprep.subr.mxu0 0.0
    %1105 = vmatpush2.msra.mxu0 0.0
    %1106 = vmatprep.subr.mxu0 0.0
    %1107 = vmatpush2.msra.mxu0 0.0
    %1108 = vmatprep.subr.mxu0 0.0
    %1109 = vmatpush2.msra.mxu0 0.0
    %1110 = vmatprep.mubr.f32.mxu0 0.0
    %1111 = vmatmul.mubr.f32.gmra.mxu0 %v108
    %v1112 = vpop.f32.mrf.mxu0
    %v1113 = vadd.f32 %v1044, %v1112
    %v1114 = vpop.f32.mrf.mxu0
    %1115 = vmatprep.mubr.f32.mxu0 0.0
    %1116 = vmatmul.mubr.f32.gmra.mxu0 %v109
    %v1117 = vpop.f32.mrf.mxu0
    %v1118 = vadd.f32 %v1044, %v1117
    %v1119 = vpop.f32.mrf.mxu0
    %1120 = vdwg.mxu0
    %v1122 = vsel %vm412, %v913, 0
    %v1125 = vsel %vm412, %v1013, 0
    %1127 = vmatprep.subr.mxu0 0.0
    %1128 = vmatpush1.xpose.msra.mxu0 0.0
    %1129 = vmatprep.subr.mxu0 0.0
    %1130 = vmatpush1.xpose.msra.mxu0 0.0
    %1131 = vmatprep.subr.mxu0 0.0
    %1132 = vmatpush1.xpose.msra.mxu0 0.0
    %1133 = vmatprep.subr.mxu0 0.0
    %1134 = vmatpush1.xpose.msra.mxu0 0.0
    %1135 = vmatprep.subr.mxu0 0.0
    %1136 = vmatpush1.xpose.msra.mxu0 0.0
    %1137 = vmatprep.subr.mxu0 0.0
    %1138 = vmatpush1.xpose.msra.mxu0 0.0
    %1139 = vmatprep.subr.mxu0 0.0
    %1140 = vmatpush1.xpose.msra.mxu0 0.0
    %1141 = vmatprep.subr.mxu0 0.0
    %1142 = vmatpush1.xpose.msra.mxu0 0.0
    %1143 = vmatprep.subr.mxu0 0.0
    %1144 = vmatpush1.xpose.msra.mxu0 0.0
    %1145 = vmatprep.subr.mxu0 0.0
    %1146 = vmatpush1.xpose.msra.mxu0 0.0
    %1147 = vmatprep.subr.mxu0 0.0
    %1148 = vmatpush1.xpose.msra.mxu0 0.0
    %1149 = vmatprep.subr.mxu0 0.0
    %1150 = vmatpush1.xpose.msra.mxu0 0.0
    %1151 = vmatprep.subr.mxu0 0.0
    %1152 = vmatpush1.xpose.msra.mxu0 0.0
    %1153 = vmatprep.subr.mxu0 0.0
    %1154 = vmatpush1.xpose.msra.mxu0 0.0
    %1155 = vmatprep.subr.mxu0 0.0
    %1156 = vmatpush1.xpose.msra.mxu0 0.0
    %1157 = vmatprep.subr.mxu0 0.0
    %1158 = vmatpush1.xpose.msra.mxu0 %v1125
    %1159 = vmatprep.subr.mxu0 0.0
    %1160 = vmatpush2.xpose.msra.mxu0 0.0
    %1161 = vmatprep.subr.mxu0 0.0
    %1162 = vmatpush2.xpose.msra.mxu0 0.0
    %1163 = vmatprep.subr.mxu0 0.0
    %1164 = vmatpush2.xpose.msra.mxu0 0.0
    %1165 = vmatprep.subr.mxu0 0.0
    %1166 = vmatpush2.xpose.msra.mxu0 0.0
    %1167 = vmatprep.subr.mxu0 0.0
    %1168 = vmatpush2.xpose.msra.mxu0 0.0
    %1169 = vmatprep.subr.mxu0 0.0
    %1170 = vmatpush2.xpose.msra.mxu0 0.0
    %1171 = vmatprep.subr.mxu0 0.0
    %1172 = vmatpush2.xpose.msra.mxu0 0.0
    %1173 = vmatprep.subr.mxu0 0.0
    %1174 = vmatpush2.xpose.msra.mxu0 0.0
    %1175 = vmatprep.subr.mxu0 0.0
    %1176 = vmatpush2.xpose.msra.mxu0 0.0
    %1177 = vmatprep.subr.mxu0 0.0
    %1178 = vmatpush2.xpose.msra.mxu0 0.0
    %1179 = vmatprep.subr.mxu0 0.0
    %1180 = vmatpush2.xpose.msra.mxu0 0.0
    %1181 = vmatprep.subr.mxu0 0.0
    %1182 = vmatpush2.xpose.msra.mxu0 0.0
    %1183 = vmatprep.subr.mxu0 0.0
    %1184 = vmatpush2.xpose.msra.mxu0 0.0
    %1185 = vmatprep.subr.mxu0 0.0
    %1186 = vmatpush2.xpose.msra.mxu0 0.0
    %1187 = vmatprep.subr.mxu0 0.0
    %1188 = vmatpush2.xpose.msra.mxu0 0.0
    %1189 = vmatprep.subr.mxu0 0.0
    %1190 = vmatpush2.xpose.msra.mxu0 0.0
    %1191 = vmatprep.mubr.f32.mxu0 0.0
    %1192 = vmatmul.mubr.f32.gmra.mxu0 %v1122
    %v1193 = vpop.f32.mrf.mxu0
    %v1194 = vadd.f32 0.0, %v1193
    %v1195 = vpop.f32.mrf.mxu0
    %1196 = vdwg.mxu0
    %v1198 = vsel %vm412, %v918, 0
    %v1201 = vsel %vm412, %v1018, 0
    %1203 = vmatprep.subr.mxu0 0.0
    %1204 = vmatpush1.xpose.msra.mxu0 0.0
    %1205 = vmatprep.subr.mxu0 0.0
    %1206 = vmatpush1.xpose.msra.mxu0 0.0
    %1207 = vmatprep.subr.mxu0 0.0
    %1208 = vmatpush1.xpose.msra.mxu0 0.0
    %1209 = vmatprep.subr.mxu0 0.0
    %1210 = vmatpush1.xpose.msra.mxu0 0.0
    %1211 = vmatprep.subr.mxu0 0.0
    %1212 = vmatpush1.xpose.msra.mxu0 0.0
    %1213 = vmatprep.subr.mxu0 0.0
    %1214 = vmatpush1.xpose.msra.mxu0 0.0
    %1215 = vmatprep.subr.mxu0 0.0
    %1216 = vmatpush1.xpose.msra.mxu0 0.0
    %1217 = vmatprep.subr.mxu0 0.0
    %1218 = vmatpush1.xpose.msra.mxu0 0.0
    %1219 = vmatprep.subr.mxu0 0.0
    %1220 = vmatpush1.xpose.msra.mxu0 0.0
    %1221 = vmatprep.subr.mxu0 0.0
    %1222 = vmatpush1.xpose.msra.mxu0 0.0
    %1223 = vmatprep.subr.mxu0 0.0
    %1224 = vmatpush1.xpose.msra.mxu0 0.0
    %1225 = vmatprep.subr.mxu0 0.0
    %1226 = vmatpush1.xpose.msra.mxu0 0.0
    %1227 = vmatprep.subr.mxu0 0.0
    %1228 = vmatpush1.xpose.msra.mxu0 0.0
    %1229 = vmatprep.subr.mxu0 0.0
    %1230 = vmatpush1.xpose.msra.mxu0 0.0
    %1231 = vmatprep.subr.mxu0 0.0
    %1232 = vmatpush1.xpose.msra.mxu0 0.0
    %1233 = vmatprep.subr.mxu0 0.0
    %1234 = vmatpush1.xpose.msra.mxu0 %v1201
    %1235 = vmatprep.subr.mxu0 0.0
    %1236 = vmatpush2.xpose.msra.mxu0 0.0
    %1237 = vmatprep.subr.mxu0 0.0
    %1238 = vmatpush2.xpose.msra.mxu0 0.0
    %1239 = vmatprep.subr.mxu0 0.0
    %1240 = vmatpush2.xpose.msra.mxu0 0.0
    %1241 = vmatprep.subr.mxu0 0.0
    %1242 = vmatpush2.xpose.msra.mxu0 0.0
    %1243 = vmatprep.subr.mxu0 0.0
    %1244 = vmatpush2.xpose.msra.mxu0 0.0
    %1245 = vmatprep.subr.mxu0 0.0
    %1246 = vmatpush2.xpose.msra.mxu0 0.0
    %1247 = vmatprep.subr.mxu0 0.0
    %1248 = vmatpush2.xpose.msra.mxu0 0.0
    %1249 = vmatprep.subr.mxu0 0.0
    %1250 = vmatpush2.xpose.msra.mxu0 0.0
    %1251 = vmatprep.subr.mxu0 0.0
    %1252 = vmatpush2.xpose.msra.mxu0 0.0
    %1253 = vmatprep.subr.mxu0 0.0
    %1254 = vmatpush2.xpose.msra.mxu0 0.0
    %1255 = vmatprep.subr.mxu0 0.0
    %1256 = vmatpush2.xpose.msra.mxu0 0.0
    %1257 = vmatprep.subr.mxu0 0.0
    %1258 = vmatpush2.xpose.msra.mxu0 0.0
    %1259 = vmatprep.subr.mxu0 0.0
    %1260 = vmatpush2.xpose.msra.mxu0 0.0
    %1261 = vmatprep.subr.mxu0 0.0
    %1262 = vmatpush2.xpose.msra.mxu0 0.0
    %1263 = vmatprep.subr.mxu0 0.0
    %1264 = vmatpush2.xpose.msra.mxu0 0.0
    %1265 = vmatprep.subr.mxu0 0.0
    %1266 = vmatpush2.xpose.msra.mxu0 0.0
    %1267 = vmatprep.mubr.f32.mxu0 0.0
    %1268 = vmatmul.mubr.f32.gmra.mxu0 %v1198
    %v1269 = vpop.f32.mrf.mxu0
    %v1270 = vadd.f32 0.0, %v1269
    %v1271 = vpop.f32.mrf.mxu0
    %1272 = vdwg.mxu0
    %v1273 = vmul.f32 %v1194, 0.35355338
    %v1274 = vmul.f32 %v1270, 0.35355338
    %v1275 = vadd.f32 %v1273, %v67
    %v1276 = vadd.f32 %v1274, %v67
    %v1277 = vsel %vm412, %v1275, -inf
    %1278 = vmax.xlane.f32.xlu0 %v1277
    %v1279 = vpop.xlane.xlu0 %1278
    %v1280 = vsel %vm412, %v1276, -inf
    %1281 = vmax.xlane.f32.xlu0 %v1280
    %v1282 = vpop.xlane.xlu0 %1281
    %v1283 = vsub.f32 %v1275, %v1279
    %v1284 = vsub.f32 %v1276, %v1282
    %v1285 = vmul.f32 %v1283, 1.442695
    %v1286 = vpow.pop %v1285
    %v1287 = vmul.f32 %v1284, 1.442695
    %v1288 = vpow.pop %v1287
    %v1289 = vsel %vm412, %v1286, 0.0
    %1290 = vadd.xlane.f32.xlu0 %v1289
    %v1291 = vpop.xlane.xlu0 %1290
    %v1292 = vsel %vm412, %v1288, 0.0
    %1293 = vadd.xlane.f32.xlu0 %v1292
    %v1294 = vpop.xlane.xlu0 %1293
    %v1295 = vrcp.pop %v1291
    %v1296 = vrcp.pop %v1294
    %v1297 = vmul.f32 %v1286, %v1295
    %v1298 = vmul.f32 %v1288, %v1296
    %v1300 = vsel %vm412, %v1297, 0
    %1302 = vmatprep.subr.mxu0 0.0
    %1303 = vmatpush1.msra.mxu0 0.0
    %1304 = vmatprep.subr.mxu0 0.0
    %1305 = vmatpush1.msra.mxu0 0.0
    %1306 = vmatprep.subr.mxu0 0.0
    %1307 = vmatpush1.msra.mxu0 0.0
    %1308 = vmatprep.subr.mxu0 0.0
    %1309 = vmatpush1.msra.mxu0 0.0
    %1310 = vmatprep.subr.mxu0 0.0
    %1311 = vmatpush1.msra.mxu0 0.0
    %1312 = vmatprep.subr.mxu0 0.0
    %1313 = vmatpush1.msra.mxu0 0.0
    %1314 = vmatprep.subr.mxu0 0.0
    %1315 = vmatpush1.msra.mxu0 0.0
    %1316 = vmatprep.subr.mxu0 0.0
    %1317 = vmatpush1.msra.mxu0 0.0
    %1318 = vmatprep.subr.mxu0 0.0
    %1319 = vmatpush1.msra.mxu0 0.0
    %1320 = vmatprep.subr.mxu0 0.0
    %1321 = vmatpush1.msra.mxu0 0.0
    %1322 = vmatprep.subr.mxu0 0.0
    %1323 = vmatpush1.msra.mxu0 0.0
    %1324 = vmatprep.subr.mxu0 0.0
    %1325 = vmatpush1.msra.mxu0 0.0
    %1326 = vmatprep.subr.mxu0 0.0
    %1327 = vmatpush1.msra.mxu0 0.0
    %1328 = vmatprep.subr.mxu0 0.0
    %1329 = vmatpush1.msra.mxu0 0.0
    %1330 = vmatprep.subr.mxu0 0.0
    %1331 = vmatpush1.msra.mxu0 0.0
    %1332 = vmatprep.subr.mxu0 0.0
    %1333 = vmatpush1.msra.mxu0 %v1113
    %1334 = vmatprep.subr.mxu0 0.0
    %1335 = vmatpush2.msra.mxu0 0.0
    %1336 = vmatprep.subr.mxu0 0.0
    %1337 = vmatpush2.msra.mxu0 0.0
    %1338 = vmatprep.subr.mxu0 0.0
    %1339 = vmatpush2.msra.mxu0 0.0
    %1340 = vmatprep.subr.mxu0 0.0
    %1341 = vmatpush2.msra.mxu0 0.0
    %1342 = vmatprep.subr.mxu0 0.0
    %1343 = vmatpush2.msra.mxu0 0.0
    %1344 = vmatprep.subr.mxu0 0.0
    %1345 = vmatpush2.msra.mxu0 0.0
    %1346 = vmatprep.subr.mxu0 0.0
    %1347 = vmatpush2.msra.mxu0 0.0
    %1348 = vmatprep.subr.mxu0 0.0
    %1349 = vmatpush2.msra.mxu0 0.0
    %1350 = vmatprep.subr.mxu0 0.0
    %1351 = vmatpush2.msra.mxu0 0.0
    %1352 = vmatprep.subr.mxu0 0.0
    %1353 = vmatpush2.msra.mxu0 0.0
    %1354 = vmatprep.subr.mxu0 0.0
    %1355 = vmatpush2.msra.mxu0 0.0
    %1356 = vmatprep.subr.mxu0 0.0
    %1357 = vmatpush2.msra.mxu0 0.0
    %1358 = vmatprep.subr.mxu0 0.0
    %1359 = vmatpush2.msra.mxu0 0.0
    %1360 = vmatprep.subr.mxu0 0.0
    %1361 = vmatpush2.msra.mxu0 0.0
    %1362 = vmatprep.subr.mxu0 0.0
    %1363 = vmatpush2.msra.mxu0 0.0
    %1364 = vmatprep.subr.mxu0 0.0
    %1365 = vmatpush2.msra.mxu0 0.0
    %1366 = vmatprep.mubr.f32.mxu0 0.0
    %1367 = vmatmul.mubr.f32.gmra.mxu0 %v1300
    %v1368 = vpop.f32.mrf.mxu0
    %v1369 = vadd.f32 0.0, %v1368
    %v1370 = vpop.f32.mrf.mxu0
    %1371 = vdwg.mxu0
    %v1373 = vsel %vm412, %v1298, 0
    %1375 = vmatprep.subr.mxu0 0.0
    %1376 = vmatpush1.msra.mxu0 0.0
    %1377 = vmatprep.subr.mxu0 0.0
    %1378 = vmatpush1.msra.mxu0 0.0
    %1379 = vmatprep.subr.mxu0 0.0
    %1380 = vmatpush1.msra.mxu0 0.0
    %1381 = vmatprep.subr.mxu0 0.0
    %1382 = vmatpush1.msra.mxu0 0.0
    %1383 = vmatprep.subr.mxu0 0.0
    %1384 = vmatpush1.msra.mxu0 0.0
    %1385 = vmatprep.subr.mxu0 0.0
    %1386 = vmatpush1.msra.mxu0 0.0
    %1387 = vmatprep.subr.mxu0 0.0
    %1388 = vmatpush1.msra.mxu0 0.0
    %1389 = vmatprep.subr.mxu0 0.0
    %1390 = vmatpush1.msra.mxu0 0.0
    %1391 = vmatprep.subr.mxu0 0.0
    %1392 = vmatpush1.msra.mxu0 0.0
    %1393 = vmatprep.subr.mxu0 0.0
    %1394 = vmatpush1.msra.mxu0 0.0
    %1395 = vmatprep.subr.mxu0 0.0
    %1396 = vmatpush1.msra.mxu0 0.0
    %1397 = vmatprep.subr.mxu0 0.0
    %1398 = vmatpush1.msra.mxu0 0.0
    %1399 = vmatprep.subr.mxu0 0.0
    %1400 = vmatpush1.msra.mxu0 0.0
    %1401 = vmatprep.subr.mxu0 0.0
    %1402 = vmatpush1.msra.mxu0 0.0
    %1403 = vmatprep.subr.mxu0 0.0
    %1404 = vmatpush1.msra.mxu0 0.0
    %1405 = vmatprep.subr.mxu0 0.0
    %1406 = vmatpush1.msra.mxu0 %v1118
    %1407 = vmatprep.subr.mxu0 0.0
    %1408 = vmatpush2.msra.mxu0 0.0
    %1409 = vmatprep.subr.mxu0 0.0
    %1410 = vmatpush2.msra.mxu0 0.0
    %1411 = vmatprep.subr.mxu0 0.0
    %1412 = vmatpush2.msra.mxu0 0.0
    %1413 = vmatprep.subr.mxu0 0.0
    %1414 = vmatpush2.msra.mxu0 0.0
    %1415 = vmatprep.subr.mxu0 0.0
    %1416 = vmatpush2.msra.mxu0 0.0
    %1417 = vmatprep.subr.mxu0 0.0
    %1418 = vmatpush2.msra.mxu0 0.0
    %1419 = vmatprep.subr.mxu0 0.0
    %1420 = vmatpush2.msra.mxu0 0.0
    %1421 = vmatprep.subr.mxu0 0.0
    %1422 = vmatpush2.msra.mxu0 0.0
    %1423 = vmatprep.subr.mxu0 0.0
    %1424 = vmatpush2.msra.mxu0 0.0
    %1425 = vmatprep.subr.mxu0 0.0
    %1426 = vmatpush2.msra.mxu0 0.0
    %1427 = vmatprep.subr.mxu0 0.0
    %1428 = vmatpush2.msra.mxu0 0.0
    %1429 = vmatprep.subr.mxu0 0.0
    %1430 = vmatpush2.msra.mxu0 0.0
    %1431 = vmatprep.subr.mxu0 0.0
    %1432 = vmatpush2.msra.mxu0 0.0
    %1433 = vmatprep.subr.mxu0 0.0
    %1434 = vmatpush2.msra.mxu0 0.0
    %1435 = vmatprep.subr.mxu0 0.0
    %1436 = vmatpush2.msra.mxu0 0.0
    %1437 = vmatprep.subr.mxu0 0.0
    %1438 = vmatpush2.msra.mxu0 0.0
    %1439 = vmatprep.mubr.f32.mxu0 0.0
    %1440 = vmatmul.mubr.f32.gmra.mxu0 %v1373
    %v1441 = vpop.f32.mrf.mxu0
    %v1442 = vadd.f32 0.0, %v1441
    %v1443 = vpop.f32.mrf.mxu0
    %1444 = vdwg.mxu0
    %s1445 = scalar_lea.vmem %s9, 8
    %v1446 = vld [vmem:[%s1445] sm:$0xff]
    %v1448 = vsel %vm412, %v1369, 0
    %v1451 = vsel %vm412, %v1442, 0
    %1453 = vmatprep.subr.mxu0 0.0
    %1454 = vmatpush1.msra.mxu0 0.0
    %1455 = vmatprep.subr.mxu0 0.0
    %1456 = vmatpush1.msra.mxu0 0.0
    %1457 = vmatprep.subr.mxu0 0.0
    %1458 = vmatpush1.msra.mxu0 0.0
    %1459 = vmatprep.subr.mxu0 0.0
    %1460 = vmatpush1.msra.mxu0 0.0
    %1461 = vmatprep.subr.mxu0 0.0
    %1462 = vmatpush1.msra.mxu0 0.0
    %1463 = vmatprep.subr.mxu0 0.0
    %1464 = vmatpush1.msra.mxu0 0.0
    %1465 = vmatprep.subr.mxu0 0.0
    %1466 = vmatpush1.msra.mxu0 0.0
    %1467 = vmatprep.subr.mxu0 0.0
    %1468 = vmatpush1.msra.mxu0 0.0
    %1469 = vmatprep.subr.mxu0 0.0
    %1470 = vmatpush1.msra.mxu0 0.0
    %1471 = vmatprep.subr.mxu0 0.0
    %1472 = vmatpush1.msra.mxu0 0.0
    %1473 = vmatprep.subr.mxu0 0.0
    %1474 = vmatpush1.msra.mxu0 0.0
    %1475 = vmatprep.subr.mxu0 0.0
    %1476 = vmatpush1.msra.mxu0 0.0
    %1477 = vmatprep.subr.mxu0 0.0
    %1478 = vmatpush1.msra.mxu0 0.0
    %1479 = vmatprep.subr.mxu0 0.0
    %1480 = vmatpush1.msra.mxu0 0.0
    %1481 = vmatprep.subr.mxu0 0.0
    %1482 = vmatpush1.msra.mxu0 0.0
    %1483 = vmatprep.subr.mxu0 0.0
    %1484 = vmatpush1.msra.mxu0 %v1446
    %1485 = vmatprep.subr.mxu0 0.0
    %1486 = vmatpush2.msra.mxu0 0.0
    %1487 = vmatprep.subr.mxu0 0.0
    %1488 = vmatpush2.msra.mxu0 0.0
    %1489 = vmatprep.subr.mxu0 0.0
    %1490 = vmatpush2.msra.mxu0 0.0
    %1491 = vmatprep.subr.mxu0 0.0
    %1492 = vmatpush2.msra.mxu0 0.0
    %1493 = vmatprep.subr.mxu0 0.0
    %1494 = vmatpush2.msra.mxu0 0.0
    %1495 = vmatprep.subr.mxu0 0.0
    %1496 = vmatpush2.msra.mxu0 0.0
    %1497 = vmatprep.subr.mxu0 0.0
    %1498 = vmatpush2.msra.mxu0 0.0
    %1499 = vmatprep.subr.mxu0 0.0
    %1500 = vmatpush2.msra.mxu0 0.0
    %1501 = vmatprep.subr.mxu0 0.0
    %1502 = vmatpush2.msra.mxu0 0.0
    %1503 = vmatprep.subr.mxu0 0.0
    %1504 = vmatpush2.msra.mxu0 0.0
    %1505 = vmatprep.subr.mxu0 0.0
    %1506 = vmatpush2.msra.mxu0 0.0
    %1507 = vmatprep.subr.mxu0 0.0
    %1508 = vmatpush2.msra.mxu0 0.0
    %1509 = vmatprep.subr.mxu0 0.0
    %1510 = vmatpush2.msra.mxu0 0.0
    %1511 = vmatprep.subr.mxu0 0.0
    %1512 = vmatpush2.msra.mxu0 0.0
    %1513 = vmatprep.subr.mxu0 0.0
    %1514 = vmatpush2.msra.mxu0 0.0
    %1515 = vmatprep.subr.mxu0 0.0
    %1516 = vmatpush2.msra.mxu0 0.0
    %1517 = vmatprep.mubr.f32.mxu0 0.0
    %1518 = vmatmul.mubr.f32.gmra.mxu0 %v1448
    %v1519 = vpop.f32.mrf.mxu0
    %v1520 = vadd.f32 0.0, %v1519
    %v1521 = vpop.f32.mrf.mxu0
    %1522 = vmatprep.mubr.f32.mxu0 0.0
    %1523 = vmatmul.mubr.f32.gmra.mxu0 %v1451
    %v1524 = vpop.f32.mrf.mxu0
    %v1525 = vadd.f32 0.0, %v1524
    %v1526 = vpop.f32.mrf.mxu0
    %1527 = vdwg.mxu0
    %v1528 = vadd.f32 %v819, %v1520
    %v1529 = vadd.f32 %v820, %v1525
    %s1530 = scalar_lea.vmem %s3, 256
    %v1531 = vld [vmem:[%s1530] sm:$0xff]
    %v1532 = vld [vmem:[%s1530 + $0x8] sm:$0xff]
    %v1533 = vld [vmem:[%s1530 + $0x10] sm:$0xff]
    %v1534 = vld [vmem:[%s1530 + $0x18] sm:$0xff]
    %v1535 = vld [vmem:[%s1530 + $0x20] sm:$0xff]
    %v1536 = vld [vmem:[%s1530 + $0x28] sm:$0xff]
    %v1537 = vld [vmem:[%s1530 + $0x30] sm:$0xff]
    %v1538 = vld [vmem:[%s1530 + $0x38] sm:$0xff]
    %v1539 = vld [vmem:[%s1530 + $0x40] sm:$0xff]
    %v1540 = vld [vmem:[%s1530 + $0x48] sm:$0xff]
    %v1541 = vld [vmem:[%s1530 + $0x50] sm:$0xff]
    %v1542 = vld [vmem:[%s1530 + $0x58] sm:$0xff]
    %v1543 = vld [vmem:[%s1530 + $0x60] sm:$0xff]
    %v1544 = vld [vmem:[%s1530 + $0x68] sm:$0xff]
    %v1545 = vld [vmem:[%s1530 + $0x70] sm:$0xff]
    %v1546 = vld [vmem:[%s1530 + $0x78] sm:$0xff]
    %s1547 = scalar_lea.vmem %s4, 2
    %v1548 = vld [vmem:[%s1547] sm:$0x1]
    %v1550 = vlaneseq
    %v1551 = vshrl.u32 %v1550, 7
    %v1552 = vsub.s32 0, %v1551
    %v1553 = vrot.slane %v1548, %v1552
    %1555 = vmatprep.subr.mxu0 0.0
    %1556 = vmatpush1.msra.mxu0 %v1546
    %1557 = vmatprep.subr.mxu0 0.0
    %1558 = vmatpush1.msra.mxu0 %v1545
    %1559 = vmatprep.subr.mxu0 0.0
    %1560 = vmatpush1.msra.mxu0 %v1544
    %1561 = vmatprep.subr.mxu0 0.0
    %1562 = vmatpush1.msra.mxu0 %v1543
    %1563 = vmatprep.subr.mxu0 0.0
    %1564 = vmatpush1.msra.mxu0 %v1542
    %1565 = vmatprep.subr.mxu0 0.0
    %1566 = vmatpush1.msra.mxu0 %v1541
    %1567 = vmatprep.subr.mxu0 0.0
    %1568 = vmatpush1.msra.mxu0 %v1540
    %1569 = vmatprep.subr.mxu0 0.0
    %1570 = vmatpush1.msra.mxu0 %v1539
    %1571 = vmatprep.subr.mxu0 0.0
    %1572 = vmatpush1.msra.mxu0 %v1538
    %1573 = vmatprep.subr.mxu0 0.0
    %1574 = vmatpush1.msra.mxu0 %v1537
    %1575 = vmatprep.subr.mxu0 0.0
    %1576 = vmatpush1.msra.mxu0 %v1536
    %1577 = vmatprep.subr.mxu0 0.0
    %1578 = vmatpush1.msra.mxu0 %v1535
    %1579 = vmatprep.subr.mxu0 0.0
    %1580 = vmatpush1.msra.mxu0 %v1534
    %1581 = vmatprep.subr.mxu0 0.0
    %1582 = vmatpush1.msra.mxu0 %v1533
    %1583 = vmatprep.subr.mxu0 0.0
    %1584 = vmatpush1.msra.mxu0 %v1532
    %1585 = vmatprep.subr.mxu0 0.0
    %1586 = vmatpush1.msra.mxu0 %v1531
    %1587 = vmatprep.subr.mxu0 0.0
    %1588 = vmatpush2.msra.mxu0 0.0
    %1589 = vmatprep.subr.mxu0 0.0
    %1590 = vmatpush2.msra.mxu0 0.0
    %1591 = vmatprep.subr.mxu0 0.0
    %1592 = vmatpush2.msra.mxu0 0.0
    %1593 = vmatprep.subr.mxu0 0.0
    %1594 = vmatpush2.msra.mxu0 0.0
    %1595 = vmatprep.subr.mxu0 0.0
    %1596 = vmatpush2.msra.mxu0 0.0
    %1597 = vmatprep.subr.mxu0 0.0
    %1598 = vmatpush2.msra.mxu0 0.0
    %1599 = vmatprep.subr.mxu0 0.0
    %1600 = vmatpush2.msra.mxu0 0.0
    %1601 = vmatprep.subr.mxu0 0.0
    %1602 = vmatpush2.msra.mxu0 0.0
    %1603 = vmatprep.subr.mxu0 0.0
    %1604 = vmatpush2.msra.mxu0 0.0
    %1605 = vmatprep.subr.mxu0 0.0
    %1606 = vmatpush2.msra.mxu0 0.0
    %1607 = vmatprep.subr.mxu0 0.0
    %1608 = vmatpush2.msra.mxu0 0.0
    %1609 = vmatprep.subr.mxu0 0.0
    %1610 = vmatpush2.msra.mxu0 0.0
    %1611 = vmatprep.subr.mxu0 0.0
    %1612 = vmatpush2.msra.mxu0 0.0
    %1613 = vmatprep.subr.mxu0 0.0
    %1614 = vmatpush2.msra.mxu0 0.0
    %1615 = vmatprep.subr.mxu0 0.0
    %1616 = vmatpush2.msra.mxu0 0.0
    %1617 = vmatprep.subr.mxu0 0.0
    %1618 = vmatpush2.msra.mxu0 0.0
    %1619 = vmatprep.mubr.f32.mxu0 0.0
    %1620 = vmatmul.mubr.f32.gmra.mxu0 %v108
    %v1621 = vpop.f32.mrf.mxu0
    %v1622 = vadd.f32 %v1553, %v1621
    %v1623 = vpop.f32.mrf.mxu0
    %1624 = vmatprep.mubr.f32.mxu0 0.0
    %1625 = vmatmul.mubr.f32.gmra.mxu0 %v109
    %v1626 = vpop.f32.mrf.mxu0
    %v1627 = vadd.f32 %v1553, %v1626
    %v1628 = vpop.f32.mrf.mxu0
    %1629 = vdwg.mxu0
    %s1630 = scalar_lea.vmem %s5, 256
    %v1631 = vld [vmem:[%s1630] sm:$0xff]
    %v1632 = vld [vmem:[%s1630 + $0x8] sm:$0xff]
    %v1633 = vld [vmem:[%s1630 + $0x10] sm:$0xff]
    %v1634 = vld [vmem:[%s1630 + $0x18] sm:$0xff]
    %v1635 = vld [vmem:[%s1630 + $0x20] sm:$0xff]
    %v1636 = vld [vmem:[%s1630 + $0x28] sm:$0xff]
    %v1637 = vld [vmem:[%s1630 + $0x30] sm:$0xff]
    %v1638 = vld [vmem:[%s1630 + $0x38] sm:$0xff]
    %v1639 = vld [vmem:[%s1630 + $0x40] sm:$0xff]
    %v1640 = vld [vmem:[%s1630 + $0x48] sm:$0xff]
    %v1641 = vld [vmem:[%s1630 + $0x50] sm:$0xff]
    %v1642 = vld [vmem:[%s1630 + $0x58] sm:$0xff]
    %v1643 = vld [vmem:[%s1630 + $0x60] sm:$0xff]
    %v1644 = vld [vmem:[%s1630 + $0x68] sm:$0xff]
    %v1645 = vld [vmem:[%s1630 + $0x70] sm:$0xff]
    %v1646 = vld [vmem:[%s1630 + $0x78] sm:$0xff]
    %s1647 = scalar_lea.vmem %s6, 2
    %v1648 = vld [vmem:[%s1647] sm:$0x1]
    %v1650 = vlaneseq
    %v1651 = vshrl.u32 %v1650, 7
    %v1652 = vsub.s32 0, %v1651
    %v1653 = vrot.slane %v1648, %v1652
    %1655 = vmatprep.subr.mxu0 0.0
    %1656 = vmatpush1.msra.mxu0 %v1646
    %1657 = vmatprep.subr.mxu0 0.0
    %1658 = vmatpush1.msra.mxu0 %v1645
    %1659 = vmatprep.subr.mxu0 0.0
    %1660 = vmatpush1.msra.mxu0 %v1644
    %1661 = vmatprep.subr.mxu0 0.0
    %1662 = vmatpush1.msra.mxu0 %v1643
    %1663 = vmatprep.subr.mxu0 0.0
    %1664 = vmatpush1.msra.mxu0 %v1642
    %1665 = vmatprep.subr.mxu0 0.0
    %1666 = vmatpush1.msra.mxu0 %v1641
    %1667 = vmatprep.subr.mxu0 0.0
    %1668 = vmatpush1.msra.mxu0 %v1640
    %1669 = vmatprep.subr.mxu0 0.0
    %1670 = vmatpush1.msra.mxu0 %v1639
    %1671 = vmatprep.subr.mxu0 0.0
    %1672 = vmatpush1.msra.mxu0 %v1638
    %1673 = vmatprep.subr.mxu0 0.0
    %1674 = vmatpush1.msra.mxu0 %v1637
    %1675 = vmatprep.subr.mxu0 0.0
    %1676 = vmatpush1.msra.mxu0 %v1636
    %1677 = vmatprep.subr.mxu0 0.0
    %1678 = vmatpush1.msra.mxu0 %v1635
    %1679 = vmatprep.subr.mxu0 0.0
    %1680 = vmatpush1.msra.mxu0 %v1634
    %1681 = vmatprep.subr.mxu0 0.0
    %1682 = vmatpush1.msra.mxu0 %v1633
    %1683 = vmatprep.subr.mxu0 0.0
    %1684 = vmatpush1.msra.mxu0 %v1632
    %1685 = vmatprep.subr.mxu0 0.0
    %1686 = vmatpush1.msra.mxu0 %v1631
    %1687 = vmatprep.subr.mxu0 0.0
    %1688 = vmatpush2.msra.mxu0 0.0
    %1689 = vmatprep.subr.mxu0 0.0
    %1690 = vmatpush2.msra.mxu0 0.0
    %1691 = vmatprep.subr.mxu0 0.0
    %1692 = vmatpush2.msra.mxu0 0.0
    %1693 = vmatprep.subr.mxu0 0.0
    %1694 = vmatpush2.msra.mxu0 0.0
    %1695 = vmatprep.subr.mxu0 0.0
    %1696 = vmatpush2.msra.mxu0 0.0
    %1697 = vmatprep.subr.mxu0 0.0
    %1698 = vmatpush2.msra.mxu0 0.0
    %1699 = vmatprep.subr.mxu0 0.0
    %1700 = vmatpush2.msra.mxu0 0.0
    %1701 = vmatprep.subr.mxu0 0.0
    %1702 = vmatpush2.msra.mxu0 0.0
    %1703 = vmatprep.subr.mxu0 0.0
    %1704 = vmatpush2.msra.mxu0 0.0
    %1705 = vmatprep.subr.mxu0 0.0
    %1706 = vmatpush2.msra.mxu0 0.0
    %1707 = vmatprep.subr.mxu0 0.0
    %1708 = vmatpush2.msra.mxu0 0.0
    %1709 = vmatprep.subr.mxu0 0.0
    %1710 = vmatpush2.msra.mxu0 0.0
    %1711 = vmatprep.subr.mxu0 0.0
    %1712 = vmatpush2.msra.mxu0 0.0
    %1713 = vmatprep.subr.mxu0 0.0
    %1714 = vmatpush2.msra.mxu0 0.0
    %1715 = vmatprep.subr.mxu0 0.0
    %1716 = vmatpush2.msra.mxu0 0.0
    %1717 = vmatprep.subr.mxu0 0.0
    %1718 = vmatpush2.msra.mxu0 0.0
    %1719 = vmatprep.mubr.f32.mxu0 0.0
    %1720 = vmatmul.mubr.f32.gmra.mxu0 %v108
    %v1721 = vpop.f32.mrf.mxu0
    %v1722 = vadd.f32 %v1653, %v1721
    %v1723 = vpop.f32.mrf.mxu0
    %1724 = vmatprep.mubr.f32.mxu0 0.0
    %1725 = vmatmul.mubr.f32.gmra.mxu0 %v109
    %v1726 = vpop.f32.mrf.mxu0
    %v1727 = vadd.f32 %v1653, %v1726
    %v1728 = vpop.f32.mrf.mxu0
    %1729 = vdwg.mxu0
    %s1730 = scalar_lea.vmem %s7, 256
    %v1731 = vld [vmem:[%s1730] sm:$0xff]
    %v1732 = vld [vmem:[%s1730 + $0x8] sm:$0xff]
    %v1733 = vld [vmem:[%s1730 + $0x10] sm:$0xff]
    %v1734 = vld [vmem:[%s1730 + $0x18] sm:$0xff]
    %v1735 = vld [vmem:[%s1730 + $0x20] sm:$0xff]
    %v1736 = vld [vmem:[%s1730 + $0x28] sm:$0xff]
    %v1737 = vld [vmem:[%s1730 + $0x30] sm:$0xff]
    %v1738 = vld [vmem:[%s1730 + $0x38] sm:$0xff]
    %v1739 = vld [vmem:[%s1730 + $0x40] sm:$0xff]
    %v1740 = vld [vmem:[%s1730 + $0x48] sm:$0xff]
    %v1741 = vld [vmem:[%s1730 + $0x50] sm:$0xff]
    %v1742 = vld [vmem:[%s1730 + $0x58] sm:$0xff]
    %v1743 = vld [vmem:[%s1730 + $0x60] sm:$0xff]
    %v1744 = vld [vmem:[%s1730 + $0x68] sm:$0xff]
    %v1745 = vld [vmem:[%s1730 + $0x70] sm:$0xff]
    %v1746 = vld [vmem:[%s1730 + $0x78] sm:$0xff]
    %s1747 = scalar_lea.vmem %s8, 2
    %v1748 = vld [vmem:[%s1747] sm:$0x1]
    %v1750 = vlaneseq
    %v1751 = vshrl.u32 %v1750, 7
    %v1752 = vsub.s32 0, %v1751
    %v1753 = vrot.slane %v1748, %v1752
    %1755 = vmatprep.subr.mxu0 0.0
    %1756 = vmatpush1.msra.mxu0 %v1746
    %1757 = vmatprep.subr.mxu0 0.0
    %1758 = vmatpush1.msra.mxu0 %v1745
    %1759 = vmatprep.subr.mxu0 0.0
    %1760 = vmatpush1.msra.mxu0 %v1744
    %1761 = vmatprep.subr.mxu0 0.0
    %1762 = vmatpush1.msra.mxu0 %v1743
    %1763 = vmatprep.subr.mxu0 0.0
    %1764 = vmatpush1.msra.mxu0 %v1742
    %1765 = vmatprep.subr.mxu0 0.0
    %1766 = vmatpush1.msra.mxu0 %v1741
    %1767 = vmatprep.subr.mxu0 0.0
    %1768 = vmatpush1.msra.mxu0 %v1740
    %1769 = vmatprep.subr.mxu0 0.0
    %1770 = vmatpush1.msra.mxu0 %v1739
    %1771 = vmatprep.subr.mxu0 0.0
    %1772 = vmatpush1.msra.mxu0 %v1738
    %1773 = vmatprep.subr.mxu0 0.0
    %1774 = vmatpush1.msra.mxu0 %v1737
    %1775 = vmatprep.subr.mxu0 0.0
    %1776 = vmatpush1.msra.mxu0 %v1736
    %1777 = vmatprep.subr.mxu0 0.0
    %1778 = vmatpush1.msra.mxu0 %v1735
    %1779 = vmatprep.subr.mxu0 0.0
    %1780 = vmatpush1.msra.mxu0 %v1734
    %1781 = vmatprep.subr.mxu0 0.0
    %1782 = vmatpush1.msra.mxu0 %v1733
    %1783 = vmatprep.subr.mxu0 0.0
    %1784 = vmatpush1.msra.mxu0 %v1732
    %1785 = vmatprep.subr.mxu0 0.0
    %1786 = vmatpush1.msra.mxu0 %v1731
    %1787 = vmatprep.subr.mxu0 0.0
    %1788 = vmatpush2.msra.mxu0 0.0
    %1789 = vmatprep.subr.mxu0 0.0
    %1790 = vmatpush2.msra.mxu0 0.0
    %1791 = vmatprep.subr.mxu0 0.0
    %1792 = vmatpush2.msra.mxu0 0.0
    %1793 = vmatprep.subr.mxu0 0.0
    %1794 = vmatpush2.msra.mxu0 0.0
    %1795 = vmatprep.subr.mxu0 0.0
    %1796 = vmatpush2.msra.mxu0 0.0
    %1797 = vmatprep.subr.mxu0 0.0
    %1798 = vmatpush2.msra.mxu0 0.0
    %1799 = vmatprep.subr.mxu0 0.0
    %1800 = vmatpush2.msra.mxu0 0.0
    %1801 = vmatprep.subr.mxu0 0.0
    %1802 = vmatpush2.msra.mxu0 0.0
    %1803 = vmatprep.subr.mxu0 0.0
    %1804 = vmatpush2.msra.mxu0 0.0
    %1805 = vmatprep.subr.mxu0 0.0
    %1806 = vmatpush2.msra.mxu0 0.0
    %1807 = vmatprep.subr.mxu0 0.0
    %1808 = vmatpush2.msra.mxu0 0.0
    %1809 = vmatprep.subr.mxu0 0.0
    %1810 = vmatpush2.msra.mxu0 0.0
    %1811 = vmatprep.subr.mxu0 0.0
    %1812 = vmatpush2.msra.mxu0 0.0
    %1813 = vmatprep.subr.mxu0 0.0
    %1814 = vmatpush2.msra.mxu0 0.0
    %1815 = vmatprep.subr.mxu0 0.0
    %1816 = vmatpush2.msra.mxu0 0.0
    %1817 = vmatprep.subr.mxu0 0.0
    %1818 = vmatpush2.msra.mxu0 0.0
    %1819 = vmatprep.mubr.f32.mxu0 0.0
    %1820 = vmatmul.mubr.f32.gmra.mxu0 %v108
    %v1821 = vpop.f32.mrf.mxu0
    %v1822 = vadd.f32 %v1753, %v1821
    %v1823 = vpop.f32.mrf.mxu0
    %1824 = vmatprep.mubr.f32.mxu0 0.0
    %1825 = vmatmul.mubr.f32.gmra.mxu0 %v109
    %v1826 = vpop.f32.mrf.mxu0
    %v1827 = vadd.f32 %v1753, %v1826
    %v1828 = vpop.f32.mrf.mxu0
    %1829 = vdwg.mxu0
    %v1831 = vsel %vm412, %v1622, 0
    %v1834 = vsel %vm412, %v1722, 0
    %1836 = vmatprep.subr.mxu0 0.0
    %1837 = vmatpush1.xpose.msra.mxu0 0.0
    %1838 = vmatprep.subr.mxu0 0.0
    %1839 = vmatpush1.xpose.msra.mxu0 0.0
    %1840 = vmatprep.subr.mxu0 0.0
    %1841 = vmatpush1.xpose.msra.mxu0 0.0
    %1842 = vmatprep.subr.mxu0 0.0
    %1843 = vmatpush1.xpose.msra.mxu0 0.0
    %1844 = vmatprep.subr.mxu0 0.0
    %1845 = vmatpush1.xpose.msra.mxu0 0.0
    %1846 = vmatprep.subr.mxu0 0.0
    %1847 = vmatpush1.xpose.msra.mxu0 0.0
    %1848 = vmatprep.subr.mxu0 0.0
    %1849 = vmatpush1.xpose.msra.mxu0 0.0
    %1850 = vmatprep.subr.mxu0 0.0
    %1851 = vmatpush1.xpose.msra.mxu0 0.0
    %1852 = vmatprep.subr.mxu0 0.0
    %1853 = vmatpush1.xpose.msra.mxu0 0.0
    %1854 = vmatprep.subr.mxu0 0.0
    %1855 = vmatpush1.xpose.msra.mxu0 0.0
    %1856 = vmatprep.subr.mxu0 0.0
    %1857 = vmatpush1.xpose.msra.mxu0 0.0
    %1858 = vmatprep.subr.mxu0 0.0
    %1859 = vmatpush1.xpose.msra.mxu0 0.0
    %1860 = vmatprep.subr.mxu0 0.0
    %1861 = vmatpush1.xpose.msra.mxu0 0.0
    %1862 = vmatprep.subr.mxu0 0.0
    %1863 = vmatpush1.xpose.msra.mxu0 0.0
    %1864 = vmatprep.subr.mxu0 0.0
    %1865 = vmatpush1.xpose.msra.mxu0 0.0
    %1866 = vmatprep.subr.mxu0 0.0
    %1867 = vmatpush1.xpose.msra.mxu0 %v1834
    %1868 = vmatprep.subr.mxu0 0.0
    %1869 = vmatpush2.xpose.msra.mxu0 0.0
    %1870 = vmatprep.subr.mxu0 0.0
    %1871 = vmatpush2.xpose.msra.mxu0 0.0
    %1872 = vmatprep.subr.mxu0 0.0
    %1873 = vmatpush2.xpose.msra.mxu0 0.0
    %1874 = vmatprep.subr.mxu0 0.0
    %1875 = vmatpush2.xpose.msra.mxu0 0.0
    %1876 = vmatprep.subr.mxu0 0.0
    %1877 = vmatpush2.xpose.msra.mxu0 0.0
    %1878 = vmatprep.subr.mxu0 0.0
    %1879 = vmatpush2.xpose.msra.mxu0 0.0
    %1880 = vmatprep.subr.mxu0 0.0
    %1881 = vmatpush2.xpose.msra.mxu0 0.0
    %1882 = vmatprep.subr.mxu0 0.0
    %1883 = vmatpush2.xpose.msra.mxu0 0.0
    %1884 = vmatprep.subr.mxu0 0.0
    %1885 = vmatpush2.xpose.msra.mxu0 0.0
    %1886 = vmatprep.subr.mxu0 0.0
    %1887 = vmatpush2.xpose.msra.mxu0 0.0
    %1888 = vmatprep.subr.mxu0 0.0
    %1889 = vmatpush2.xpose.msra.mxu0 0.0
    %1890 = vmatprep.subr.mxu0 0.0
    %1891 = vmatpush2.xpose.msra.mxu0 0.0
    %1892 = vmatprep.subr.mxu0 0.0
    %1893 = vmatpush2.xpose.msra.mxu0 0.0
    %1894 = vmatprep.subr.mxu0 0.0
    %1895 = vmatpush2.xpose.msra.mxu0 0.0
    %1896 = vmatprep.subr.mxu0 0.0
    %1897 = vmatpush2.xpose.msra.mxu0 0.0
    %1898 = vmatprep.subr.mxu0 0.0
    %1899 = vmatpush2.xpose.msra.mxu0 0.0
    %1900 = vmatprep.mubr.f32.mxu0 0.0
    %1901 = vmatmul.mubr.f32.gmra.mxu0 %v1831
    %v1902 = vpop.f32.mrf.mxu0
    %v1903 = vadd.f32 0.0, %v1902
    %v1904 = vpop.f32.mrf.mxu0
    %1905 = vdwg.mxu0
    %v1907 = vsel %vm412, %v1627, 0
    %v1910 = vsel %vm412, %v1727, 0
    %1912 = vmatprep.subr.mxu0 0.0
    %1913 = vmatpush1.xpose.msra.mxu0 0.0
    %1914 = vmatprep.subr.mxu0 0.0
    %1915 = vmatpush1.xpose.msra.mxu0 0.0
    %1916 = vmatprep.subr.mxu0 0.0
    %1917 = vmatpush1.xpose.msra.mxu0 0.0
    %1918 = vmatprep.subr.mxu0 0.0
    %1919 = vmatpush1.xpose.msra.mxu0 0.0
    %1920 = vmatprep.subr.mxu0 0.0
    %1921 = vmatpush1.xpose.msra.mxu0 0.0
    %1922 = vmatprep.subr.mxu0 0.0
    %1923 = vmatpush1.xpose.msra.mxu0 0.0
    %1924 = vmatprep.subr.mxu0 0.0
    %1925 = vmatpush1.xpose.msra.mxu0 0.0
    %1926 = vmatprep.subr.mxu0 0.0
    %1927 = vmatpush1.xpose.msra.mxu0 0.0
    %1928 = vmatprep.subr.mxu0 0.0
    %1929 = vmatpush1.xpose.msra.mxu0 0.0
    %1930 = vmatprep.subr.mxu0 0.0
    %1931 = vmatpush1.xpose.msra.mxu0 0.0
    %1932 = vmatprep.subr.mxu0 0.0
    %1933 = vmatpush1.xpose.msra.mxu0 0.0
    %1934 = vmatprep.subr.mxu0 0.0
    %1935 = vmatpush1.xpose.msra.mxu0 0.0
    %1936 = vmatprep.subr.mxu0 0.0
    %1937 = vmatpush1.xpose.msra.mxu0 0.0
    %1938 = vmatprep.subr.mxu0 0.0
    %1939 = vmatpush1.xpose.msra.mxu0 0.0
    %1940 = vmatprep.subr.mxu0 0.0
    %1941 = vmatpush1.xpose.msra.mxu0 0.0
    %1942 = vmatprep.subr.mxu0 0.0
    %1943 = vmatpush1.xpose.msra.mxu0 %v1910
    %1944 = vmatprep.subr.mxu0 0.0
    %1945 = vmatpush2.xpose.msra.mxu0 0.0
    %1946 = vmatprep.subr.mxu0 0.0
    %1947 = vmatpush2.xpose.msra.mxu0 0.0
    %1948 = vmatprep.subr.mxu0 0.0
    %1949 = vmatpush2.xpose.msra.mxu0 0.0
    %1950 = vmatprep.subr.mxu0 0.0
    %1951 = vmatpush2.xpose.msra.mxu0 0.0
    %1952 = vmatprep.subr.mxu0 0.0
    %1953 = vmatpush2.xpose.msra.mxu0 0.0
    %1954 = vmatprep.subr.mxu0 0.0
    %1955 = vmatpush2.xpose.msra.mxu0 0.0
    %1956 = vmatprep.subr.mxu0 0.0
    %1957 = vmatpush2.xpose.msra.mxu0 0.0
    %1958 = vmatprep.subr.mxu0 0.0
    %1959 = vmatpush2.xpose.msra.mxu0 0.0
    %1960 = vmatprep.subr.mxu0 0.0
    %1961 = vmatpush2.xpose.msra.mxu0 0.0
    %1962 = vmatprep.subr.mxu0 0.0
    %1963 = vmatpush2.xpose.msra.mxu0 0.0
    %1964 = vmatprep.subr.mxu0 0.0
    %1965 = vmatpush2.xpose.msra.mxu0 0.0
    %1966 = vmatprep.subr.mxu0 0.0
    %1967 = vmatpush2.xpose.msra.mxu0 0.0
    %1968 = vmatprep.subr.mxu0 0.0
    %1969 = vmatpush2.xpose.msra.mxu0 0.0
    %1970 = vmatprep.subr.mxu0 0.0
    %1971 = vmatpush2.xpose.msra.mxu0 0.0
    %1972 = vmatprep.subr.mxu0 0.0
    %1973 = vmatpush2.xpose.msra.mxu0 0.0
    %1974 = vmatprep.subr.mxu0 0.0
    %1975 = vmatpush2.xpose.msra.mxu0 0.0
    %1976 = vmatprep.mubr.f32.mxu0 0.0
    %1977 = vmatmul.mubr.f32.gmra.mxu0 %v1907
    %v1978 = vpop.f32.mrf.mxu0
    %v1979 = vadd.f32 0.0, %v1978
    %v1980 = vpop.f32.mrf.mxu0
    %1981 = vdwg.mxu0
    %v1982 = vmul.f32 %v1903, 0.35355338
    %v1983 = vmul.f32 %v1979, 0.35355338
    %v1984 = vadd.f32 %v1982, %v67
    %v1985 = vadd.f32 %v1983, %v67
    %v1986 = vsel %vm412, %v1984, -inf
    %1987 = vmax.xlane.f32.xlu0 %v1986
    %v1988 = vpop.xlane.xlu0 %1987
    %v1989 = vsel %vm412, %v1985, -inf
    %1990 = vmax.xlane.f32.xlu0 %v1989
    %v1991 = vpop.xlane.xlu0 %1990
    %v1992 = vsub.f32 %v1984, %v1988
    %v1993 = vsub.f32 %v1985, %v1991
    %v1994 = vmul.f32 %v1992, 1.442695
    %v1995 = vpow.pop %v1994
    %v1996 = vmul.f32 %v1993, 1.442695
    %v1997 = vpow.pop %v1996
    %v1998 = vsel %vm412, %v1995, 0.0
    %1999 = vadd.xlane.f32.xlu0 %v1998
    %v2000 = vpop.xlane.xlu0 %1999
    %v2001 = vsel %vm412, %v1997, 0.0
    %2002 = vadd.xlane.f32.xlu0 %v2001
    %v2003 = vpop.xlane.xlu0 %2002
    %v2004 = vrcp.pop %v2000
    %v2005 = vrcp.pop %v2003
    %v2006 = vmul.f32 %v1995, %v2004
    %v2007 = vmul.f32 %v1997, %v2005
    %v2009 = vsel %vm412, %v2006, 0
    %2011 = vmatprep.subr.mxu0 0.0
    %2012 = vmatpush1.msra.mxu0 0.0
    %2013 = vmatprep.subr.mxu0 0.0
    %2014 = vmatpush1.msra.mxu0 0.0
    %2015 = vmatprep.subr.mxu0 0.0
    %2016 = vmatpush1.msra.mxu0 0.0
    %2017 = vmatprep.subr.mxu0 0.0
    %2018 = vmatpush1.msra.mxu0 0.0
    %2019 = vmatprep.subr.mxu0 0.0
    %2020 = vmatpush1.msra.mxu0 0.0
    %2021 = vmatprep.subr.mxu0 0.0
    %2022 = vmatpush1.msra.mxu0 0.0
    %2023 = vmatprep.subr.mxu0 0.0
    %2024 = vmatpush1.msra.mxu0 0.0
    %2025 = vmatprep.subr.mxu0 0.0
    %2026 = vmatpush1.msra.mxu0 0.0
    %2027 = vmatprep.subr.mxu0 0.0
    %2028 = vmatpush1.msra.mxu0 0.0
    %2029 = vmatprep.subr.mxu0 0.0
    %2030 = vmatpush1.msra.mxu0 0.0
    %2031 = vmatprep.subr.mxu0 0.0
    %2032 = vmatpush1.msra.mxu0 0.0
    %2033 = vmatprep.subr.mxu0 0.0
    %2034 = vmatpush1.msra.mxu0 0.0
    %2035 = vmatprep.subr.mxu0 0.0
    %2036 = vmatpush1.msra.mxu0 0.0
    %2037 = vmatprep.subr.mxu0 0.0
    %2038 = vmatpush1.msra.mxu0 0.0
    %2039 = vmatprep.subr.mxu0 0.0
    %2040 = vmatpush1.msra.mxu0 0.0
    %2041 = vmatprep.subr.mxu0 0.0
    %2042 = vmatpush1.msra.mxu0 %v1822
    %2043 = vmatprep.subr.mxu0 0.0
    %2044 = vmatpush2.msra.mxu0 0.0
    %2045 = vmatprep.subr.mxu0 0.0
    %2046 = vmatpush2.msra.mxu0 0.0
    %2047 = vmatprep.subr.mxu0 0.0
    %2048 = vmatpush2.msra.mxu0 0.0
    %2049 = vmatprep.subr.mxu0 0.0
    %2050 = vmatpush2.msra.mxu0 0.0
    %2051 = vmatprep.subr.mxu0 0.0
    %2052 = vmatpush2.msra.mxu0 0.0
    %2053 = vmatprep.subr.mxu0 0.0
    %2054 = vmatpush2.msra.mxu0 0.0
    %2055 = vmatprep.subr.mxu0 0.0
    %2056 = vmatpush2.msra.mxu0 0.0
    %2057 = vmatprep.subr.mxu0 0.0
    %2058 = vmatpush2.msra.mxu0 0.0
    %2059 = vmatprep.subr.mxu0 0.0
    %2060 = vmatpush2.msra.mxu0 0.0
    %2061 = vmatprep.subr.mxu0 0.0
    %2062 = vmatpush2.msra.mxu0 0.0
    %2063 = vmatprep.subr.mxu0 0.0
    %2064 = vmatpush2.msra.mxu0 0.0
    %2065 = vmatprep.subr.mxu0 0.0
    %2066 = vmatpush2.msra.mxu0 0.0
    %2067 = vmatprep.subr.mxu0 0.0
    %2068 = vmatpush2.msra.mxu0 0.0
    %2069 = vmatprep.subr.mxu0 0.0
    %2070 = vmatpush2.msra.mxu0 0.0
    %2071 = vmatprep.subr.mxu0 0.0
    %2072 = vmatpush2.msra.mxu0 0.0
    %2073 = vmatprep.subr.mxu0 0.0
    %2074 = vmatpush2.msra.mxu0 0.0
    %2075 = vmatprep.mubr.f32.mxu0 0.0
    %2076 = vmatmul.mubr.f32.gmra.mxu0 %v2009
    %v2077 = vpop.f32.mrf.mxu0
    %v2078 = vadd.f32 0.0, %v2077
    %v2079 = vpop.f32.mrf.mxu0
    %2080 = vdwg.mxu0
    %v2082 = vsel %vm412, %v2007, 0
    %2084 = vmatprep.subr.mxu0 0.0
    %2085 = vmatpush1.msra.mxu0 0.0
    %2086 = vmatprep.subr.mxu0 0.0
    %2087 = vmatpush1.msra.mxu0 0.0
    %2088 = vmatprep.subr.mxu0 0.0
    %2089 = vmatpush1.msra.mxu0 0.0
    %2090 = vmatprep.subr.mxu0 0.0
    %2091 = vmatpush1.msra.mxu0 0.0
    %2092 = vmatprep.subr.mxu0 0.0
    %2093 = vmatpush1.msra.mxu0 0.0
    %2094 = vmatprep.subr.mxu0 0.0
    %2095 = vmatpush1.msra.mxu0 0.0
    %2096 = vmatprep.subr.mxu0 0.0
    %2097 = vmatpush1.msra.mxu0 0.0
    %2098 = vmatprep.subr.mxu0 0.0
    %2099 = vmatpush1.msra.mxu0 0.0
    %2100 = vmatprep.subr.mxu0 0.0
    %2101 = vmatpush1.msra.mxu0 0.0
    %2102 = vmatprep.subr.mxu0 0.0
    %2103 = vmatpush1.msra.mxu0 0.0
    %2104 = vmatprep.subr.mxu0 0.0
    %2105 = vmatpush1.msra.mxu0 0.0
    %2106 = vmatprep.subr.mxu0 0.0
    %2107 = vmatpush1.msra.mxu0 0.0
    %2108 = vmatprep.subr.mxu0 0.0
    %2109 = vmatpush1.msra.mxu0 0.0
    %2110 = vmatprep.subr.mxu0 0.0
    %2111 = vmatpush1.msra.mxu0 0.0
    %2112 = vmatprep.subr.mxu0 0.0
    %2113 = vmatpush1.msra.mxu0 0.0
    %2114 = vmatprep.subr.mxu0 0.0
    %2115 = vmatpush1.msra.mxu0 %v1827
    %2116 = vmatprep.subr.mxu0 0.0
    %2117 = vmatpush2.msra.mxu0 0.0
    %2118 = vmatprep.subr.mxu0 0.0
    %2119 = vmatpush2.msra.mxu0 0.0
    %2120 = vmatprep.subr.mxu0 0.0
    %2121 = vmatpush2.msra.mxu0 0.0
    %2122 = vmatprep.subr.mxu0 0.0
    %2123 = vmatpush2.msra.mxu0 0.0
    %2124 = vmatprep.subr.mxu0 0.0
    %2125 = vmatpush2.msra.mxu0 0.0
    %2126 = vmatprep.subr.mxu0 0.0
    %2127 = vmatpush2.msra.mxu0 0.0
    %2128 = vmatprep.subr.mxu0 0.0
    %2129 = vmatpush2.msra.mxu0 0.0
    %2130 = vmatprep.subr.mxu0 0.0
    %2131 = vmatpush2.msra.mxu0 0.0
    %2132 = vmatprep.subr.mxu0 0.0
    %2133 = vmatpush2.msra.mxu0 0.0
    %2134 = vmatprep.subr.mxu0 0.0
    %2135 = vmatpush2.msra.mxu0 0.0
    %2136 = vmatprep.subr.mxu0 0.0
    %2137 = vmatpush2.msra.mxu0 0.0
    %2138 = vmatprep.subr.mxu0 0.0
    %2139 = vmatpush2.msra.mxu0 0.0
    %2140 = vmatprep.subr.mxu0 0.0
    %2141 = vmatpush2.msra.mxu0 0.0
    %2142 = vmatprep.subr.mxu0 0.0
    %2143 = vmatpush2.msra.mxu0 0.0
    %2144 = vmatprep.subr.mxu0 0.0
    %2145 = vmatpush2.msra.mxu0 0.0
    %2146 = vmatprep.subr.mxu0 0.0
    %2147 = vmatpush2.msra.mxu0 0.0
    %2148 = vmatprep.mubr.f32.mxu0 0.0
    %2149 = vmatmul.mubr.f32.gmra.mxu0 %v2082
    %v2150 = vpop.f32.mrf.mxu0
    %v2151 = vadd.f32 0.0, %v2150
    %v2152 = vpop.f32.mrf.mxu0
    %2153 = vdwg.mxu0
    %s2154 = scalar_lea.vmem %s9, 16
    %v2155 = vld [vmem:[%s2154] sm:$0xff]
    %v2157 = vsel %vm412, %v2078, 0
    %v2160 = vsel %vm412, %v2151, 0
    %2162 = vmatprep.subr.mxu0 0.0
    %2163 = vmatpush1.msra.mxu0 0.0
    %2164 = vmatprep.subr.mxu0 0.0
    %2165 = vmatpush1.msra.mxu0 0.0
    %2166 = vmatprep.subr.mxu0 0.0
    %2167 = vmatpush1.msra.mxu0 0.0
    %2168 = vmatprep.subr.mxu0 0.0
    %2169 = vmatpush1.msra.mxu0 0.0
    %2170 = vmatprep.subr.mxu0 0.0
    %2171 = vmatpush1.msra.mxu0 0.0
    %2172 = vmatprep.subr.mxu0 0.0
    %2173 = vmatpush1.msra.mxu0 0.0
    %2174 = vmatprep.subr.mxu0 0.0
    %2175 = vmatpush1.msra.mxu0 0.0
    %2176 = vmatprep.subr.mxu0 0.0
    %2177 = vmatpush1.msra.mxu0 0.0
    %2178 = vmatprep.subr.mxu0 0.0
    %2179 = vmatpush1.msra.mxu0 0.0
    %2180 = vmatprep.subr.mxu0 0.0
    %2181 = vmatpush1.msra.mxu0 0.0
    %2182 = vmatprep.subr.mxu0 0.0
    %2183 = vmatpush1.msra.mxu0 0.0
    %2184 = vmatprep.subr.mxu0 0.0
    %2185 = vmatpush1.msra.mxu0 0.0
    %2186 = vmatprep.subr.mxu0 0.0
    %2187 = vmatpush1.msra.mxu0 0.0
    %2188 = vmatprep.subr.mxu0 0.0
    %2189 = vmatpush1.msra.mxu0 0.0
    %2190 = vmatprep.subr.mxu0 0.0
    %2191 = vmatpush1.msra.mxu0 0.0
    %2192 = vmatprep.subr.mxu0 0.0
    %2193 = vmatpush1.msra.mxu0 %v2155
    %2194 = vmatprep.subr.mxu0 0.0
    %2195 = vmatpush2.msra.mxu0 0.0
    %2196 = vmatprep.subr.mxu0 0.0
    %2197 = vmatpush2.msra.mxu0 0.0
    %2198 = vmatprep.subr.mxu0 0.0
    %2199 = vmatpush2.msra.mxu0 0.0
    %2200 = vmatprep.subr.mxu0 0.0
    %2201 = vmatpush2.msra.mxu0 0.0
    %2202 = vmatprep.subr.mxu0 0.0
    %2203 = vmatpush2.msra.mxu0 0.0
    %2204 = vmatprep.subr.mxu0 0.0
    %2205 = vmatpush2.msra.mxu0 0.0
    %2206 = vmatprep.subr.mxu0 0.0
    %2207 = vmatpush2.msra.mxu0 0.0
    %2208 = vmatprep.subr.mxu0 0.0
    %2209 = vmatpush2.msra.mxu0 0.0
    %2210 = vmatprep.subr.mxu0 0.0
    %2211 = vmatpush2.msra.mxu0 0.0
    %2212 = vmatprep.subr.mxu0 0.0
    %2213 = vmatpush2.msra.mxu0 0.0
    %2214 = vmatprep.subr.mxu0 0.0
    %2215 = vmatpush2.msra.mxu0 0.0
    %2216 = vmatprep.subr.mxu0 0.0
    %2217 = vmatpush2.msra.mxu0 0.0
    %2218 = vmatprep.subr.mxu0 0.0
    %2219 = vmatpush2.msra.mxu0 0.0
    %2220 = vmatprep.subr.mxu0 0.0
    %2221 = vmatpush2.msra.mxu0 0.0
    %2222 = vmatprep.subr.mxu0 0.0
    %2223 = vmatpush2.msra.mxu0 0.0
    %2224 = vmatprep.subr.mxu0 0.0
    %2225 = vmatpush2.msra.mxu0 0.0
    %2226 = vmatprep.mubr.f32.mxu0 0.0
    %2227 = vmatmul.mubr.f32.gmra.mxu0 %v2157
    %v2228 = vpop.f32.mrf.mxu0
    %v2229 = vadd.f32 0.0, %v2228
    %v2230 = vpop.f32.mrf.mxu0
    %2231 = vmatprep.mubr.f32.mxu0 0.0
    %2232 = vmatmul.mubr.f32.gmra.mxu0 %v2160
    %v2233 = vpop.f32.mrf.mxu0
    %v2234 = vadd.f32 0.0, %v2233
    %v2235 = vpop.f32.mrf.mxu0
    %2236 = vdwg.mxu0
    %v2237 = vadd.f32 %v1528, %v2229
    %v2238 = vadd.f32 %v1529, %v2234
    %s2239 = scalar_lea.vmem %s3, 384
    %v2240 = vld [vmem:[%s2239] sm:$0xff]
    %v2241 = vld [vmem:[%s2239 + $0x8] sm:$0xff]
    %v2242 = vld [vmem:[%s2239 + $0x10] sm:$0xff]
    %v2243 = vld [vmem:[%s2239 + $0x18] sm:$0xff]
    %v2244 = vld [vmem:[%s2239 + $0x20] sm:$0xff]
    %v2245 = vld [vmem:[%s2239 + $0x28] sm:$0xff]
    %v2246 = vld [vmem:[%s2239 + $0x30] sm:$0xff]
    %v2247 = vld [vmem:[%s2239 + $0x38] sm:$0xff]
    %v2248 = vld [vmem:[%s2239 + $0x40] sm:$0xff]
    %v2249 = vld [vmem:[%s2239 + $0x48] sm:$0xff]
    %v2250 = vld [vmem:[%s2239 + $0x50] sm:$0xff]
    %v2251 = vld [vmem:[%s2239 + $0x58] sm:$0xff]
    %v2252 = vld [vmem:[%s2239 + $0x60] sm:$0xff]
    %v2253 = vld [vmem:[%s2239 + $0x68] sm:$0xff]
    %v2254 = vld [vmem:[%s2239 + $0x70] sm:$0xff]
    %v2255 = vld [vmem:[%s2239 + $0x78] sm:$0xff]
    %s2256 = scalar_lea.vmem %s4, 3
    %v2257 = vld [vmem:[%s2256] sm:$0x1]
    %v2259 = vlaneseq
    %v2260 = vshrl.u32 %v2259, 7
    %v2261 = vsub.s32 0, %v2260
    %v2262 = vrot.slane %v2257, %v2261
    %2264 = vmatprep.subr.mxu0 0.0
    %2265 = vmatpush1.msra.mxu0 %v2255
    %2266 = vmatprep.subr.mxu0 0.0
    %2267 = vmatpush1.msra.mxu0 %v2254
    %2268 = vmatprep.subr.mxu0 0.0
    %2269 = vmatpush1.msra.mxu0 %v2253
    %2270 = vmatprep.subr.mxu0 0.0
    %2271 = vmatpush1.msra.mxu0 %v2252
    %2272 = vmatprep.subr.mxu0 0.0
    %2273 = vmatpush1.msra.mxu0 %v2251
    %2274 = vmatprep.subr.mxu0 0.0
    %2275 = vmatpush1.msra.mxu0 %v2250
    %2276 = vmatprep.subr.mxu0 0.0
    %2277 = vmatpush1.msra.mxu0 %v2249
    %2278 = vmatprep.subr.mxu0 0.0
    %2279 = vmatpush1.msra.mxu0 %v2248
    %2280 = vmatprep.subr.mxu0 0.0
    %2281 = vmatpush1.msra.mxu0 %v2247
    %2282 = vmatprep.subr.mxu0 0.0
    %2283 = vmatpush1.msra.mxu0 %v2246
    %2284 = vmatprep.subr.mxu0 0.0
    %2285 = vmatpush1.msra.mxu0 %v2245
    %2286 = vmatprep.subr.mxu0 0.0
    %2287 = vmatpush1.msra.mxu0 %v2244
    %2288 = vmatprep.subr.mxu0 0.0
    %2289 = vmatpush1.msra.mxu0 %v2243
    %2290 = vmatprep.subr.mxu0 0.0
    %2291 = vmatpush1.msra.mxu0 %v2242
    %2292 = vmatprep.subr.mxu0 0.0
    %2293 = vmatpush1.msra.mxu0 %v2241
    %2294 = vmatprep.subr.mxu0 0.0
    %2295 = vmatpush1.msra.mxu0 %v2240
    %2296 = vmatprep.subr.mxu0 0.0
    %2297 = vmatpush2.msra.mxu0 0.0
    %2298 = vmatprep.subr.mxu0 0.0
    %2299 = vmatpush2.msra.mxu0 0.0
    %2300 = vmatprep.subr.mxu0 0.0
    %2301 = vmatpush2.msra.mxu0 0.0
    %2302 = vmatprep.subr.mxu0 0.0
    %2303 = vmatpush2.msra.mxu0 0.0
    %2304 = vmatprep.subr.mxu0 0.0
    %2305 = vmatpush2.msra.mxu0 0.0
    %2306 = vmatprep.subr.mxu0 0.0
    %2307 = vmatpush2.msra.mxu0 0.0
    %2308 = vmatprep.subr.mxu0 0.0
    %2309 = vmatpush2.msra.mxu0 0.0
    %2310 = vmatprep.subr.mxu0 0.0
    %2311 = vmatpush2.msra.mxu0 0.0
    %2312 = vmatprep.subr.mxu0 0.0
    %2313 = vmatpush2.msra.mxu0 0.0
    %2314 = vmatprep.subr.mxu0 0.0
    %2315 = vmatpush2.msra.mxu0 0.0
    %2316 = vmatprep.subr.mxu0 0.0
    %2317 = vmatpush2.msra.mxu0 0.0
    %2318 = vmatprep.subr.mxu0 0.0
    %2319 = vmatpush2.msra.mxu0 0.0
    %2320 = vmatprep.subr.mxu0 0.0
    %2321 = vmatpush2.msra.mxu0 0.0
    %2322 = vmatprep.subr.mxu0 0.0
    %2323 = vmatpush2.msra.mxu0 0.0
    %2324 = vmatprep.subr.mxu0 0.0
    %2325 = vmatpush2.msra.mxu0 0.0
    %2326 = vmatprep.subr.mxu0 0.0
    %2327 = vmatpush2.msra.mxu0 0.0
    %2328 = vmatprep.mubr.f32.mxu0 0.0
    %2329 = vmatmul.mubr.f32.gmra.mxu0 %v108
    %v2330 = vpop.f32.mrf.mxu0
    %v2331 = vadd.f32 %v2262, %v2330
    %v2332 = vpop.f32.mrf.mxu0
    %2333 = vmatprep.mubr.f32.mxu0 0.0
    %2334 = vmatmul.mubr.f32.gmra.mxu0 %v109
    %v2335 = vpop.f32.mrf.mxu0
    %v2336 = vadd.f32 %v2262, %v2335
    %v2337 = vpop.f32.mrf.mxu0
    %2338 = vdwg.mxu0
    %s2339 = scalar_lea.vmem %s5, 384
    %v2340 = vld [vmem:[%s2339] sm:$0xff]
    %v2341 = vld [vmem:[%s2339 + $0x8] sm:$0xff]
    %v2342 = vld [vmem:[%s2339 + $0x10] sm:$0xff]
    %v2343 = vld [vmem:[%s2339 + $0x18] sm:$0xff]
    %v2344 = vld [vmem:[%s2339 + $0x20] sm:$0xff]
    %v2345 = vld [vmem:[%s2339 + $0x28] sm:$0xff]
    %v2346 = vld [vmem:[%s2339 + $0x30] sm:$0xff]
    %v2347 = vld [vmem:[%s2339 + $0x38] sm:$0xff]
    %v2348 = vld [vmem:[%s2339 + $0x40] sm:$0xff]
    %v2349 = vld [vmem:[%s2339 + $0x48] sm:$0xff]
    %v2350 = vld [vmem:[%s2339 + $0x50] sm:$0xff]
    %v2351 = vld [vmem:[%s2339 + $0x58] sm:$0xff]
    %v2352 = vld [vmem:[%s2339 + $0x60] sm:$0xff]
    %v2353 = vld [vmem:[%s2339 + $0x68] sm:$0xff]
    %v2354 = vld [vmem:[%s2339 + $0x70] sm:$0xff]
    %v2355 = vld [vmem:[%s2339 + $0x78] sm:$0xff]
    %s2356 = scalar_lea.vmem %s6, 3
    %v2357 = vld [vmem:[%s2356] sm:$0x1]
    %v2359 = vlaneseq
    %v2360 = vshrl.u32 %v2359, 7
    %v2361 = vsub.s32 0, %v2360
    %v2362 = vrot.slane %v2357, %v2361
    %2364 = vmatprep.subr.mxu0 0.0
    %2365 = vmatpush1.msra.mxu0 %v2355
    %2366 = vmatprep.subr.mxu0 0.0
    %2367 = vmatpush1.msra.mxu0 %v2354
    %2368 = vmatprep.subr.mxu0 0.0
    %2369 = vmatpush1.msra.mxu0 %v2353
    %2370 = vmatprep.subr.mxu0 0.0
    %2371 = vmatpush1.msra.mxu0 %v2352
    %2372 = vmatprep.subr.mxu0 0.0
    %2373 = vmatpush1.msra.mxu0 %v2351
    %2374 = vmatprep.subr.mxu0 0.0
    %2375 = vmatpush1.msra.mxu0 %v2350
    %2376 = vmatprep.subr.mxu0 0.0
    %2377 = vmatpush1.msra.mxu0 %v2349
    %2378 = vmatprep.subr.mxu0 0.0
    %2379 = vmatpush1.msra.mxu0 %v2348
    %2380 = vmatprep.subr.mxu0 0.0
    %2381 = vmatpush1.msra.mxu0 %v2347
    %2382 = vmatprep.subr.mxu0 0.0
    %2383 = vmatpush1.msra.mxu0 %v2346
    %2384 = vmatprep.subr.mxu0 0.0
    %2385 = vmatpush1.msra.mxu0 %v2345
    %2386 = vmatprep.subr.mxu0 0.0
    %2387 = vmatpush1.msra.mxu0 %v2344
    %2388 = vmatprep.subr.mxu0 0.0
    %2389 = vmatpush1.msra.mxu0 %v2343
    %2390 = vmatprep.subr.mxu0 0.0
    %2391 = vmatpush1.msra.mxu0 %v2342
    %2392 = vmatprep.subr.mxu0 0.0
    %2393 = vmatpush1.msra.mxu0 %v2341
    %2394 = vmatprep.subr.mxu0 0.0
    %2395 = vmatpush1.msra.mxu0 %v2340
    %2396 = vmatprep.subr.mxu0 0.0
    %2397 = vmatpush2.msra.mxu0 0.0
    %2398 = vmatprep.subr.mxu0 0.0
    %2399 = vmatpush2.msra.mxu0 0.0
    %2400 = vmatprep.subr.mxu0 0.0
    %2401 = vmatpush2.msra.mxu0 0.0
    %2402 = vmatprep.subr.mxu0 0.0
    %2403 = vmatpush2.msra.mxu0 0.0
    %2404 = vmatprep.subr.mxu0 0.0
    %2405 = vmatpush2.msra.mxu0 0.0
    %2406 = vmatprep.subr.mxu0 0.0
    %2407 = vmatpush2.msra.mxu0 0.0
    %2408 = vmatprep.subr.mxu0 0.0
    %2409 = vmatpush2.msra.mxu0 0.0
    %2410 = vmatprep.subr.mxu0 0.0
    %2411 = vmatpush2.msra.mxu0 0.0
    %2412 = vmatprep.subr.mxu0 0.0
    %2413 = vmatpush2.msra.mxu0 0.0
    %2414 = vmatprep.subr.mxu0 0.0
    %2415 = vmatpush2.msra.mxu0 0.0
    %2416 = vmatprep.subr.mxu0 0.0
    %2417 = vmatpush2.msra.mxu0 0.0
    %2418 = vmatprep.subr.mxu0 0.0
    %2419 = vmatpush2.msra.mxu0 0.0
    %2420 = vmatprep.subr.mxu0 0.0
    %2421 = vmatpush2.msra.mxu0 0.0
    %2422 = vmatprep.subr.mxu0 0.0
    %2423 = vmatpush2.msra.mxu0 0.0
    %2424 = vmatprep.subr.mxu0 0.0
    %2425 = vmatpush2.msra.mxu0 0.0
    %2426 = vmatprep.subr.mxu0 0.0
    %2427 = vmatpush2.msra.mxu0 0.0
    %2428 = vmatprep.mubr.f32.mxu0 0.0
    %2429 = vmatmul.mubr.f32.gmra.mxu0 %v108
    %v2430 = vpop.f32.mrf.mxu0
    %v2431 = vadd.f32 %v2362, %v2430
    %v2432 = vpop.f32.mrf.mxu0
    %2433 = vmatprep.mubr.f32.mxu0 0.0
    %2434 = vmatmul.mubr.f32.gmra.mxu0 %v109
    %v2435 = vpop.f32.mrf.mxu0
    %v2436 = vadd.f32 %v2362, %v2435
    %v2437 = vpop.f32.mrf.mxu0
    %2438 = vdwg.mxu0
    %s2439 = scalar_lea.vmem %s7, 384
    %v2440 = vld [vmem:[%s2439] sm:$0xff]
    %v2441 = vld [vmem:[%s2439 + $0x8] sm:$0xff]
    %v2442 = vld [vmem:[%s2439 + $0x10] sm:$0xff]
    %v2443 = vld [vmem:[%s2439 + $0x18] sm:$0xff]
    %v2444 = vld [vmem:[%s2439 + $0x20] sm:$0xff]
    %v2445 = vld [vmem:[%s2439 + $0x28] sm:$0xff]
    %v2446 = vld [vmem:[%s2439 + $0x30] sm:$0xff]
    %v2447 = vld [vmem:[%s2439 + $0x38] sm:$0xff]
    %v2448 = vld [vmem:[%s2439 + $0x40] sm:$0xff]
    %v2449 = vld [vmem:[%s2439 + $0x48] sm:$0xff]
    %v2450 = vld [vmem:[%s2439 + $0x50] sm:$0xff]
    %v2451 = vld [vmem:[%s2439 + $0x58] sm:$0xff]
    %v2452 = vld [vmem:[%s2439 + $0x60] sm:$0xff]
    %v2453 = vld [vmem:[%s2439 + $0x68] sm:$0xff]
    %v2454 = vld [vmem:[%s2439 + $0x70] sm:$0xff]
    %v2455 = vld [vmem:[%s2439 + $0x78] sm:$0xff]
    %s2456 = scalar_lea.vmem %s8, 3
    %v2457 = vld [vmem:[%s2456] sm:$0x1]
    %v2459 = vlaneseq
    %v2460 = vshrl.u32 %v2459, 7
    %v2461 = vsub.s32 0, %v2460
    %v2462 = vrot.slane %v2457, %v2461
    %2464 = vmatprep.subr.mxu0 0.0
    %2465 = vmatpush1.msra.mxu0 %v2455
    %2466 = vmatprep.subr.mxu0 0.0
    %2467 = vmatpush1.msra.mxu0 %v2454
    %2468 = vmatprep.subr.mxu0 0.0
    %2469 = vmatpush1.msra.mxu0 %v2453
    %2470 = vmatprep.subr.mxu0 0.0
    %2471 = vmatpush1.msra.mxu0 %v2452
    %2472 = vmatprep.subr.mxu0 0.0
    %2473 = vmatpush1.msra.mxu0 %v2451
    %2474 = vmatprep.subr.mxu0 0.0
    %2475 = vmatpush1.msra.mxu0 %v2450
    %2476 = vmatprep.subr.mxu0 0.0
    %2477 = vmatpush1.msra.mxu0 %v2449
    %2478 = vmatprep.subr.mxu0 0.0
    %2479 = vmatpush1.msra.mxu0 %v2448
    %2480 = vmatprep.subr.mxu0 0.0
    %2481 = vmatpush1.msra.mxu0 %v2447
    %2482 = vmatprep.subr.mxu0 0.0
    %2483 = vmatpush1.msra.mxu0 %v2446
    %2484 = vmatprep.subr.mxu0 0.0
    %2485 = vmatpush1.msra.mxu0 %v2445
    %2486 = vmatprep.subr.mxu0 0.0
    %2487 = vmatpush1.msra.mxu0 %v2444
    %2488 = vmatprep.subr.mxu0 0.0
    %2489 = vmatpush1.msra.mxu0 %v2443
    %2490 = vmatprep.subr.mxu0 0.0
    %2491 = vmatpush1.msra.mxu0 %v2442
    %2492 = vmatprep.subr.mxu0 0.0
    %2493 = vmatpush1.msra.mxu0 %v2441
    %2494 = vmatprep.subr.mxu0 0.0
    %2495 = vmatpush1.msra.mxu0 %v2440
    %2496 = vmatprep.subr.mxu0 0.0
    %2497 = vmatpush2.msra.mxu0 0.0
    %2498 = vmatprep.subr.mxu0 0.0
    %2499 = vmatpush2.msra.mxu0 0.0
    %2500 = vmatprep.subr.mxu0 0.0
    %2501 = vmatpush2.msra.mxu0 0.0
    %2502 = vmatprep.subr.mxu0 0.0
    %2503 = vmatpush2.msra.mxu0 0.0
    %2504 = vmatprep.subr.mxu0 0.0
    %2505 = vmatpush2.msra.mxu0 0.0
    %2506 = vmatprep.subr.mxu0 0.0
    %2507 = vmatpush2.msra.mxu0 0.0
    %2508 = vmatprep.subr.mxu0 0.0
    %2509 = vmatpush2.msra.mxu0 0.0
    %2510 = vmatprep.subr.mxu0 0.0
    %2511 = vmatpush2.msra.mxu0 0.0
    %2512 = vmatprep.subr.mxu0 0.0
    %2513 = vmatpush2.msra.mxu0 0.0
    %2514 = vmatprep.subr.mxu0 0.0
    %2515 = vmatpush2.msra.mxu0 0.0
    %2516 = vmatprep.subr.mxu0 0.0
    %2517 = vmatpush2.msra.mxu0 0.0
    %2518 = vmatprep.subr.mxu0 0.0
    %2519 = vmatpush2.msra.mxu0 0.0
    %2520 = vmatprep.subr.mxu0 0.0
    %2521 = vmatpush2.msra.mxu0 0.0
    %2522 = vmatprep.subr.mxu0 0.0
    %2523 = vmatpush2.msra.mxu0 0.0
    %2524 = vmatprep.subr.mxu0 0.0
    %2525 = vmatpush2.msra.mxu0 0.0
    %2526 = vmatprep.subr.mxu0 0.0
    %2527 = vmatpush2.msra.mxu0 0.0
    %2528 = vmatprep.mubr.f32.mxu0 0.0
    %2529 = vmatmul.mubr.f32.gmra.mxu0 %v108
    %v2530 = vpop.f32.mrf.mxu0
    %v2531 = vadd.f32 %v2462, %v2530
    %v2532 = vpop.f32.mrf.mxu0
    %2533 = vmatprep.mubr.f32.mxu0 0.0
    %2534 = vmatmul.mubr.f32.gmra.mxu0 %v109
    %v2535 = vpop.f32.mrf.mxu0
    %v2536 = vadd.f32 %v2462, %v2535
    %v2537 = vpop.f32.mrf.mxu0
    %2538 = vdwg.mxu0
    %v2540 = vsel %vm412, %v2331, 0
    %v2543 = vsel %vm412, %v2431, 0
    %2545 = vmatprep.subr.mxu0 0.0
    %2546 = vmatpush1.xpose.msra.mxu0 0.0
    %2547 = vmatprep.subr.mxu0 0.0
    %2548 = vmatpush1.xpose.msra.mxu0 0.0
    %2549 = vmatprep.subr.mxu0 0.0
    %2550 = vmatpush1.xpose.msra.mxu0 0.0
    %2551 = vmatprep.subr.mxu0 0.0
    %2552 = vmatpush1.xpose.msra.mxu0 0.0
    %2553 = vmatprep.subr.mxu0 0.0
    %2554 = vmatpush1.xpose.msra.mxu0 0.0
    %2555 = vmatprep.subr.mxu0 0.0
    %2556 = vmatpush1.xpose.msra.mxu0 0.0
    %2557 = vmatprep.subr.mxu0 0.0
    %2558 = vmatpush1.xpose.msra.mxu0 0.0
    %2559 = vmatprep.subr.mxu0 0.0
    %2560 = vmatpush1.xpose.msra.mxu0 0.0
    %2561 = vmatprep.subr.mxu0 0.0
    %2562 = vmatpush1.xpose.msra.mxu0 0.0
    %2563 = vmatprep.subr.mxu0 0.0
    %2564 = vmatpush1.xpose.msra.mxu0 0.0
    %2565 = vmatprep.subr.mxu0 0.0
    %2566 = vmatpush1.xpose.msra.mxu0 0.0
    %2567 = vmatprep.subr.mxu0 0.0
    %2568 = vmatpush1.xpose.msra.mxu0 0.0
    %2569 = vmatprep.subr.mxu0 0.0
    %2570 = vmatpush1.xpose.msra.mxu0 0.0
    %2571 = vmatprep.subr.mxu0 0.0
    %2572 = vmatpush1.xpose.msra.mxu0 0.0
    %2573 = vmatprep.subr.mxu0 0.0
    %2574 = vmatpush1.xpose.msra.mxu0 0.0
    %2575 = vmatprep.subr.mxu0 0.0
    %2576 = vmatpush1.xpose.msra.mxu0 %v2543
    %2577 = vmatprep.subr.mxu0 0.0
    %2578 = vmatpush2.xpose.msra.mxu0 0.0
    %2579 = vmatprep.subr.mxu0 0.0
    %2580 = vmatpush2.xpose.msra.mxu0 0.0
    %2581 = vmatprep.subr.mxu0 0.0
    %2582 = vmatpush2.xpose.msra.mxu0 0.0
    %2583 = vmatprep.subr.mxu0 0.0
    %2584 = vmatpush2.xpose.msra.mxu0 0.0
    %2585 = vmatprep.subr.mxu0 0.0
    %2586 = vmatpush2.xpose.msra.mxu0 0.0
    %2587 = vmatprep.subr.mxu0 0.0
    %2588 = vmatpush2.xpose.msra.mxu0 0.0
    %2589 = vmatprep.subr.mxu0 0.0
    %2590 = vmatpush2.xpose.msra.mxu0 0.0
    %2591 = vmatprep.subr.mxu0 0.0
    %2592 = vmatpush2.xpose.msra.mxu0 0.0
    %2593 = vmatprep.subr.mxu0 0.0
    %2594 = vmatpush2.xpose.msra.mxu0 0.0
    %2595 = vmatprep.subr.mxu0 0.0
    %2596 = vmatpush2.xpose.msra.mxu0 0.0
    %2597 = vmatprep.subr.mxu0 0.0
    %2598 = vmatpush2.xpose.msra.mxu0 0.0
    %2599 = vmatprep.subr.mxu0 0.0
    %2600 = vmatpush2.xpose.msra.mxu0 0.0
    %2601 = vmatprep.subr.mxu0 0.0
    %2602 = vmatpush2.xpose.msra.mxu0 0.0
    %2603 = vmatprep.subr.mxu0 0.0
    %2604 = vmatpush2.xpose.msra.mxu0 0.0
    %2605 = vmatprep.subr.mxu0 0.0
    %2606 = vmatpush2.xpose.msra.mxu0 0.0
    %2607 = vmatprep.subr.mxu0 0.0
    %2608 = vmatpush2.xpose.msra.mxu0 0.0
    %2609 = vmatprep.mubr.f32.mxu0 0.0
    %2610 = vmatmul.mubr.f32.gmra.mxu0 %v2540
    %v2611 = vpop.f32.mrf.mxu0
    %v2612 = vadd.f32 0.0, %v2611
    %v2613 = vpop.f32.mrf.mxu0
    %2614 = vdwg.mxu0
    %v2616 = vsel %vm412, %v2336, 0
    %v2619 = vsel %vm412, %v2436, 0
    %2621 = vmatprep.subr.mxu0 0.0
    %2622 = vmatpush1.xpose.msra.mxu0 0.0
    %2623 = vmatprep.subr.mxu0 0.0
    %2624 = vmatpush1.xpose.msra.mxu0 0.0
    %2625 = vmatprep.subr.mxu0 0.0
    %2626 = vmatpush1.xpose.msra.mxu0 0.0
    %2627 = vmatprep.subr.mxu0 0.0
    %2628 = vmatpush1.xpose.msra.mxu0 0.0
    %2629 = vmatprep.subr.mxu0 0.0
    %2630 = vmatpush1.xpose.msra.mxu0 0.0
    %2631 = vmatprep.subr.mxu0 0.0
    %2632 = vmatpush1.xpose.msra.mxu0 0.0
    %2633 = vmatprep.subr.mxu0 0.0
    %2634 = vmatpush1.xpose.msra.mxu0 0.0
    %2635 = vmatprep.subr.mxu0 0.0
    %2636 = vmatpush1.xpose.msra.mxu0 0.0
    %2637 = vmatprep.subr.mxu0 0.0
    %2638 = vmatpush1.xpose.msra.mxu0 0.0
    %2639 = vmatprep.subr.mxu0 0.0
    %2640 = vmatpush1.xpose.msra.mxu0 0.0
    %2641 = vmatprep.subr.mxu0 0.0
    %2642 = vmatpush1.xpose.msra.mxu0 0.0
    %2643 = vmatprep.subr.mxu0 0.0
    %2644 = vmatpush1.xpose.msra.mxu0 0.0
    %2645 = vmatprep.subr.mxu0 0.0
    %2646 = vmatpush1.xpose.msra.mxu0 0.0
    %2647 = vmatprep.subr.mxu0 0.0
    %2648 = vmatpush1.xpose.msra.mxu0 0.0
    %2649 = vmatprep.subr.mxu0 0.0
    %2650 = vmatpush1.xpose.msra.mxu0 0.0
    %2651 = vmatprep.subr.mxu0 0.0
    %2652 = vmatpush1.xpose.msra.mxu0 %v2619
    %2653 = vmatprep.subr.mxu0 0.0
    %2654 = vmatpush2.xpose.msra.mxu0 0.0
    %2655 = vmatprep.subr.mxu0 0.0
    %2656 = vmatpush2.xpose.msra.mxu0 0.0
    %2657 = vmatprep.subr.mxu0 0.0
    %2658 = vmatpush2.xpose.msra.mxu0 0.0
    %2659 = vmatprep.subr.mxu0 0.0
    %2660 = vmatpush2.xpose.msra.mxu0 0.0
    %2661 = vmatprep.subr.mxu0 0.0
    %2662 = vmatpush2.xpose.msra.mxu0 0.0
    %2663 = vmatprep.subr.mxu0 0.0
    %2664 = vmatpush2.xpose.msra.mxu0 0.0
    %2665 = vmatprep.subr.mxu0 0.0
    %2666 = vmatpush2.xpose.msra.mxu0 0.0
    %2667 = vmatprep.subr.mxu0 0.0
    %2668 = vmatpush2.xpose.msra.mxu0 0.0
    %2669 = vmatprep.subr.mxu0 0.0
    %2670 = vmatpush2.xpose.msra.mxu0 0.0
    %2671 = vmatprep.subr.mxu0 0.0
    %2672 = vmatpush2.xpose.msra.mxu0 0.0
    %2673 = vmatprep.subr.mxu0 0.0
    %2674 = vmatpush2.xpose.msra.mxu0 0.0
    %2675 = vmatprep.subr.mxu0 0.0
    %2676 = vmatpush2.xpose.msra.mxu0 0.0
    %2677 = vmatprep.subr.mxu0 0.0
    %2678 = vmatpush2.xpose.msra.mxu0 0.0
    %2679 = vmatprep.subr.mxu0 0.0
    %2680 = vmatpush2.xpose.msra.mxu0 0.0
    %2681 = vmatprep.subr.mxu0 0.0
    %2682 = vmatpush2.xpose.msra.mxu0 0.0
    %2683 = vmatprep.subr.mxu0 0.0
    %2684 = vmatpush2.xpose.msra.mxu0 0.0
    %2685 = vmatprep.mubr.f32.mxu0 0.0
    %2686 = vmatmul.mubr.f32.gmra.mxu0 %v2616
    %v2687 = vpop.f32.mrf.mxu0
    %v2688 = vadd.f32 0.0, %v2687
    %v2689 = vpop.f32.mrf.mxu0
    %2690 = vdwg.mxu0
    %v2691 = vmul.f32 %v2612, 0.35355338
    %v2692 = vmul.f32 %v2688, 0.35355338
    %v2693 = vadd.f32 %v2691, %v67
    %v2694 = vadd.f32 %v2692, %v67
    %v2695 = vsel %vm412, %v2693, -inf
    %2696 = vmax.xlane.f32.xlu0 %v2695
    %v2697 = vpop.xlane.xlu0 %2696
    %v2698 = vsel %vm412, %v2694, -inf
    %2699 = vmax.xlane.f32.xlu0 %v2698
    %v2700 = vpop.xlane.xlu0 %2699
    %v2701 = vsub.f32 %v2693, %v2697
    %v2702 = vsub.f32 %v2694, %v2700
    %v2703 = vmul.f32 %v2701, 1.442695
    %v2704 = vpow.pop %v2703
    %v2705 = vmul.f32 %v2702, 1.442695
    %v2706 = vpow.pop %v2705
    %v2707 = vsel %vm412, %v2704, 0.0
    %2708 = vadd.xlane.f32.xlu0 %v2707
    %v2709 = vpop.xlane.xlu0 %2708
    %v2710 = vsel %vm412, %v2706, 0.0
    %2711 = vadd.xlane.f32.xlu0 %v2710
    %v2712 = vpop.xlane.xlu0 %2711
    %v2713 = vrcp.pop %v2709
    %v2714 = vrcp.pop %v2712
    %v2715 = vmul.f32 %v2704, %v2713
    %v2716 = vmul.f32 %v2706, %v2714
    %v2718 = vsel %vm412, %v2715, 0
    %2720 = vmatprep.subr.mxu0 0.0
    %2721 = vmatpush1.msra.mxu0 0.0
    %2722 = vmatprep.subr.mxu0 0.0
    %2723 = vmatpush1.msra.mxu0 0.0
    %2724 = vmatprep.subr.mxu0 0.0
    %2725 = vmatpush1.msra.mxu0 0.0
    %2726 = vmatprep.subr.mxu0 0.0
    %2727 = vmatpush1.msra.mxu0 0.0
    %2728 = vmatprep.subr.mxu0 0.0
    %2729 = vmatpush1.msra.mxu0 0.0
    %2730 = vmatprep.subr.mxu0 0.0
    %2731 = vmatpush1.msra.mxu0 0.0
    %2732 = vmatprep.subr.mxu0 0.0
    %2733 = vmatpush1.msra.mxu0 0.0
    %2734 = vmatprep.subr.mxu0 0.0
    %2735 = vmatpush1.msra.mxu0 0.0
    %2736 = vmatprep.subr.mxu0 0.0
    %2737 = vmatpush1.msra.mxu0 0.0
    %2738 = vmatprep.subr.mxu0 0.0
    %2739 = vmatpush1.msra.mxu0 0.0
    %2740 = vmatprep.subr.mxu0 0.0
    %2741 = vmatpush1.msra.mxu0 0.0
    %2742 = vmatprep.subr.mxu0 0.0
    %2743 = vmatpush1.msra.mxu0 0.0
    %2744 = vmatprep.subr.mxu0 0.0
    %2745 = vmatpush1.msra.mxu0 0.0
    %2746 = vmatprep.subr.mxu0 0.0
    %2747 = vmatpush1.msra.mxu0 0.0
    %2748 = vmatprep.subr.mxu0 0.0
    %2749 = vmatpush1.msra.mxu0 0.0
    %2750 = vmatprep.subr.mxu0 0.0
    %2751 = vmatpush1.msra.mxu0 %v2531
    %2752 = vmatprep.subr.mxu0 0.0
    %2753 = vmatpush2.msra.mxu0 0.0
    %2754 = vmatprep.subr.mxu0 0.0
    %2755 = vmatpush2.msra.mxu0 0.0
    %2756 = vmatprep.subr.mxu0 0.0
    %2757 = vmatpush2.msra.mxu0 0.0
    %2758 = vmatprep.subr.mxu0 0.0
    %2759 = vmatpush2.msra.mxu0 0.0
    %2760 = vmatprep.subr.mxu0 0.0
    %2761 = vmatpush2.msra.mxu0 0.0
    %2762 = vmatprep.subr.mxu0 0.0
    %2763 = vmatpush2.msra.mxu0 0.0
    %2764 = vmatprep.subr.mxu0 0.0
    %2765 = vmatpush2.msra.mxu0 0.0
    %2766 = vmatprep.subr.mxu0 0.0
    %2767 = vmatpush2.msra.mxu0 0.0
    %2768 = vmatprep.subr.mxu0 0.0
    %2769 = vmatpush2.msra.mxu0 0.0
    %2770 = vmatprep.subr.mxu0 0.0
    %2771 = vmatpush2.msra.mxu0 0.0
    %2772 = vmatprep.subr.mxu0 0.0
    %2773 = vmatpush2.msra.mxu0 0.0
    %2774 = vmatprep.subr.mxu0 0.0
    %2775 = vmatpush2.msra.mxu0 0.0
    %2776 = vmatprep.subr.mxu0 0.0
    %2777 = vmatpush2.msra.mxu0 0.0
    %2778 = vmatprep.subr.mxu0 0.0
    %2779 = vmatpush2.msra.mxu0 0.0
    %2780 = vmatprep.subr.mxu0 0.0
    %2781 = vmatpush2.msra.mxu0 0.0
    %2782 = vmatprep.subr.mxu0 0.0
    %2783 = vmatpush2.msra.mxu0 0.0
    %2784 = vmatprep.mubr.f32.mxu0 0.0
    %2785 = vmatmul.mubr.f32.gmra.mxu0 %v2718
    %v2786 = vpop.f32.mrf.mxu0
    %v2787 = vadd.f32 0.0, %v2786
    %v2788 = vpop.f32.mrf.mxu0
    %2789 = vdwg.mxu0
    %v2791 = vsel %vm412, %v2716, 0
    %2793 = vmatprep.subr.mxu0 0.0
    %2794 = vmatpush1.msra.mxu0 0.0
    %2795 = vmatprep.subr.mxu0 0.0
    %2796 = vmatpush1.msra.mxu0 0.0
    %2797 = vmatprep.subr.mxu0 0.0
    %2798 = vmatpush1.msra.mxu0 0.0
    %2799 = vmatprep.subr.mxu0 0.0
    %2800 = vmatpush1.msra.mxu0 0.0
    %2801 = vmatprep.subr.mxu0 0.0
    %2802 = vmatpush1.msra.mxu0 0.0
    %2803 = vmatprep.subr.mxu0 0.0
    %2804 = vmatpush1.msra.mxu0 0.0
    %2805 = vmatprep.subr.mxu0 0.0
    %2806 = vmatpush1.msra.mxu0 0.0
    %2807 = vmatprep.subr.mxu0 0.0
    %2808 = vmatpush1.msra.mxu0 0.0
    %2809 = vmatprep.subr.mxu0 0.0
    %2810 = vmatpush1.msra.mxu0 0.0
    %2811 = vmatprep.subr.mxu0 0.0
    %2812 = vmatpush1.msra.mxu0 0.0
    %2813 = vmatprep.subr.mxu0 0.0
    %2814 = vmatpush1.msra.mxu0 0.0
    %2815 = vmatprep.subr.mxu0 0.0
    %2816 = vmatpush1.msra.mxu0 0.0
    %2817 = vmatprep.subr.mxu0 0.0
    %2818 = vmatpush1.msra.mxu0 0.0
    %2819 = vmatprep.subr.mxu0 0.0
    %2820 = vmatpush1.msra.mxu0 0.0
    %2821 = vmatprep.subr.mxu0 0.0
    %2822 = vmatpush1.msra.mxu0 0.0
    %2823 = vmatprep.subr.mxu0 0.0
    %2824 = vmatpush1.msra.mxu0 %v2536
    %2825 = vmatprep.subr.mxu0 0.0
    %2826 = vmatpush2.msra.mxu0 0.0
    %2827 = vmatprep.subr.mxu0 0.0
    %2828 = vmatpush2.msra.mxu0 0.0
    %2829 = vmatprep.subr.mxu0 0.0
    %2830 = vmatpush2.msra.mxu0 0.0
    %2831 = vmatprep.subr.mxu0 0.0
    %2832 = vmatpush2.msra.mxu0 0.0
    %2833 = vmatprep.subr.mxu0 0.0
    %2834 = vmatpush2.msra.mxu0 0.0
    %2835 = vmatprep.subr.mxu0 0.0
    %2836 = vmatpush2.msra.mxu0 0.0
    %2837 = vmatprep.subr.mxu0 0.0
    %2838 = vmatpush2.msra.mxu0 0.0
    %2839 = vmatprep.subr.mxu0 0.0
    %2840 = vmatpush2.msra.mxu0 0.0
    %2841 = vmatprep.subr.mxu0 0.0
    %2842 = vmatpush2.msra.mxu0 0.0
    %2843 = vmatprep.subr.mxu0 0.0
    %2844 = vmatpush2.msra.mxu0 0.0
    %2845 = vmatprep.subr.mxu0 0.0
    %2846 = vmatpush2.msra.mxu0 0.0
    %2847 = vmatprep.subr.mxu0 0.0
    %2848 = vmatpush2.msra.mxu0 0.0
    %2849 = vmatprep.subr.mxu0 0.0
    %2850 = vmatpush2.msra.mxu0 0.0
    %2851 = vmatprep.subr.mxu0 0.0
    %2852 = vmatpush2.msra.mxu0 0.0
    %2853 = vmatprep.subr.mxu0 0.0
    %2854 = vmatpush2.msra.mxu0 0.0
    %2855 = vmatprep.subr.mxu0 0.0
    %2856 = vmatpush2.msra.mxu0 0.0
    %2857 = vmatprep.mubr.f32.mxu0 0.0
    %2858 = vmatmul.mubr.f32.gmra.mxu0 %v2791
    %v2859 = vpop.f32.mrf.mxu0
    %v2860 = vadd.f32 0.0, %v2859
    %v2861 = vpop.f32.mrf.mxu0
    %2862 = vdwg.mxu0
    %s2863 = scalar_lea.vmem %s9, 24
    %v2864 = vld [vmem:[%s2863] sm:$0xff]
    %v2866 = vsel %vm412, %v2787, 0
    %v2869 = vsel %vm412, %v2860, 0
    %2871 = vmatprep.subr.mxu0 0.0
    %2872 = vmatpush1.msra.mxu0 0.0
    %2873 = vmatprep.subr.mxu0 0.0
    %2874 = vmatpush1.msra.mxu0 0.0
    %2875 = vmatprep.subr.mxu0 0.0
    %2876 = vmatpush1.msra.mxu0 0.0
    %2877 = vmatprep.subr.mxu0 0.0
    %2878 = vmatpush1.msra.mxu0 0.0
    %2879 = vmatprep.subr.mxu0 0.0
    %2880 = vmatpush1.msra.mxu0 0.0
    %2881 = vmatprep.subr.mxu0 0.0
    %2882 = vmatpush1.msra.mxu0 0.0
    %2883 = vmatprep.subr.mxu0 0.0
    %2884 = vmatpush1.msra.mxu0 0.0
    %2885 = vmatprep.subr.mxu0 0.0
    %2886 = vmatpush1.msra.mxu0 0.0
    %2887 = vmatprep.subr.mxu0 0.0
    %2888 = vmatpush1.msra.mxu0 0.0
    %2889 = vmatprep.subr.mxu0 0.0
    %2890 = vmatpush1.msra.mxu0 0.0
    %2891 = vmatprep.subr.mxu0 0.0
    %2892 = vmatpush1.msra.mxu0 0.0
    %2893 = vmatprep.subr.mxu0 0.0
    %2894 = vmatpush1.msra.mxu0 0.0
    %2895 = vmatprep.subr.mxu0 0.0
    %2896 = vmatpush1.msra.mxu0 0.0
    %2897 = vmatprep.subr.mxu0 0.0
    %2898 = vmatpush1.msra.mxu0 0.0
    %2899 = vmatprep.subr.mxu0 0.0
    %2900 = vmatpush1.msra.mxu0 0.0
    %2901 = vmatprep.subr.mxu0 0.0
    %2902 = vmatpush1.msra.mxu0 %v2864
    %2903 = vmatprep.subr.mxu0 0.0
    %2904 = vmatpush2.msra.mxu0 0.0
    %2905 = vmatprep.subr.mxu0 0.0
    %2906 = vmatpush2.msra.mxu0 0.0
    %2907 = vmatprep.subr.mxu0 0.0
    %2908 = vmatpush2.msra.mxu0 0.0
    %2909 = vmatprep.subr.mxu0 0.0
    %2910 = vmatpush2.msra.mxu0 0.0
    %2911 = vmatprep.subr.mxu0 0.0
    %2912 = vmatpush2.msra.mxu0 0.0
    %2913 = vmatprep.subr.mxu0 0.0
    %2914 = vmatpush2.msra.mxu0 0.0
    %2915 = vmatprep.subr.mxu0 0.0
    %2916 = vmatpush2.msra.mxu0 0.0
    %2917 = vmatprep.subr.mxu0 0.0
    %2918 = vmatpush2.msra.mxu0 0.0
    %2919 = vmatprep.subr.mxu0 0.0
    %2920 = vmatpush2.msra.mxu0 0.0
    %2921 = vmatprep.subr.mxu0 0.0
    %2922 = vmatpush2.msra.mxu0 0.0
    %2923 = vmatprep.subr.mxu0 0.0
    %2924 = vmatpush2.msra.mxu0 0.0
    %2925 = vmatprep.subr.mxu0 0.0
    %2926 = vmatpush2.msra.mxu0 0.0
    %2927 = vmatprep.subr.mxu0 0.0
    %2928 = vmatpush2.msra.mxu0 0.0
    %2929 = vmatprep.subr.mxu0 0.0
    %2930 = vmatpush2.msra.mxu0 0.0
    %2931 = vmatprep.subr.mxu0 0.0
    %2932 = vmatpush2.msra.mxu0 0.0
    %2933 = vmatprep.subr.mxu0 0.0
    %2934 = vmatpush2.msra.mxu0 0.0
    %2935 = vmatprep.mubr.f32.mxu0 0.0
    %2936 = vmatmul.mubr.f32.gmra.mxu0 %v2866
    %v2937 = vpop.f32.mrf.mxu0
    %v2938 = vadd.f32 0.0, %v2937
    %v2939 = vpop.f32.mrf.mxu0
    %2940 = vmatprep.mubr.f32.mxu0 0.0
    %2941 = vmatmul.mubr.f32.gmra.mxu0 %v2869
    %v2942 = vpop.f32.mrf.mxu0
    %v2943 = vadd.f32 0.0, %v2942
    %v2944 = vpop.f32.mrf.mxu0
    %2945 = vdwg.mxu0
    %v2946 = vadd.f32 %v2237, %v2938
    %v2947 = vadd.f32 %v2238, %v2943
    %v2948 = vadd.f32 %v57, %v2946
    %v2949 = vadd.f32 %v58, %v2947
    %v2950 = vld [vmem:[%s11] sm:$0x1]
    %v2951 = vld [vmem:[%s12] sm:$0x1]
    %2952 = vadd.xlane.f32.xlu0 %v2948
    %v2953 = vpop.xlane.xlu0 %2952
    %2954 = vadd.xlane.f32.xlu0 %v2949
    %v2955 = vpop.xlane.xlu0 %2954
    %v2956 = vmul.f32 %v2953, 0.03125
    %v2957 = vmul.f32 %v2955, 0.03125
    %v2958 = vsub.f32 %v2948, %v2956
    %v2959 = vsub.f32 %v2949, %v2957
    %v2960 = vmul.f32 %v2958, %v63
    %v2961 = vmul.f32 %v2959, %v63
    %v2962 = vmul.f32 %v2960, %v2960
    %v2963 = vmul.f32 %v2961, %v2961
    %2964 = vadd.xlane.f32.xlu0 %v2962
    %v2965 = vpop.xlane.xlu0 %2964
    %2966 = vadd.xlane.f32.xlu0 %v2963
    %v2967 = vpop.xlane.xlu0 %2966
    %v2968 = vmul.f32 %v2965, 0.03125
    %v2969 = vmul.f32 %v2967, 0.03125
    %v2970 = vadd.f32 %v2968, 1e-05
    %v2971 = vadd.f32 %v2969, 1e-05
    %v2972 = vrsqrt.pop %v2970
    %v2973 = vrsqrt.pop %v2971
    %v2974 = vmul.f32 %v2960, %v2972
    %v2975 = vmul.f32 %v2961, %v2973
    %v2977 = vlaneseq
    %v2978 = vshrl.u32 %v2977, 7
    %v2979 = vsub.s32 0, %v2978
    %v2980 = vrot.slane %v2950, %v2979
    %v2982 = vmul.f32 %v2974, %v2980
    %v2983 = vmul.f32 %v2975, %v2980
    %v2985 = vlaneseq
    %v2986 = vshrl.u32 %v2985, 7
    %v2987 = vsub.s32 0, %v2986
    %v2988 = vrot.slane %v2951, %v2987
    %v2990 = vadd.f32 %v2982, %v2988
    %v2991 = vadd.f32 %v2983, %v2988
    %v2992 = vld [vmem:[%s13] sm:$0xff]
    %v2993 = vld [vmem:[%s13 + $0x8] sm:$0xff]
    %v2994 = vld [vmem:[%s13 + $0x10] sm:$0xff]
    %v2995 = vld [vmem:[%s13 + $0x18] sm:$0xff]
    %v2996 = vld [vmem:[%s13 + $0x20] sm:$0xff]
    %v2997 = vld [vmem:[%s13 + $0x28] sm:$0xff]
    %v2998 = vld [vmem:[%s13 + $0x30] sm:$0xff]
    %v2999 = vld [vmem:[%s13 + $0x38] sm:$0xff]
    %v3000 = vld [vmem:[%s13 + $0x40] sm:$0xff]
    %v3001 = vld [vmem:[%s13 + $0x48] sm:$0xff]
    %v3002 = vld [vmem:[%s13 + $0x50] sm:$0xff]
    %v3003 = vld [vmem:[%s13 + $0x58] sm:$0xff]
    %v3004 = vld [vmem:[%s13 + $0x60] sm:$0xff]
    %v3005 = vld [vmem:[%s13 + $0x68] sm:$0xff]
    %v3006 = vld [vmem:[%s13 + $0x70] sm:$0xff]
    %v3007 = vld [vmem:[%s13 + $0x78] sm:$0xff]
    %v3008 = vld [vmem:[%s14] sm:$0x1]
    %v3010 = vlaneseq
    %v3011 = vshrl.u32 %v3010, 7
    %v3012 = vsub.s32 0, %v3011
    %v3013 = vrot.slane %v3008, %v3012
    %3015 = vmatprep.subr.mxu0 0.0
    %3016 = vmatpush1.msra.mxu0 %v3007
    %3017 = vmatprep.subr.mxu0 0.0
    %3018 = vmatpush1.msra.mxu0 %v3006
    %3019 = vmatprep.subr.mxu0 0.0
    %3020 = vmatpush1.msra.mxu0 %v3005
    %3021 = vmatprep.subr.mxu0 0.0
    %3022 = vmatpush1.msra.mxu0 %v3004
    %3023 = vmatprep.subr.mxu0 0.0
    %3024 = vmatpush1.msra.mxu0 %v3003
    %3025 = vmatprep.subr.mxu0 0.0
    %3026 = vmatpush1.msra.mxu0 %v3002
    %3027 = vmatprep.subr.mxu0 0.0
    %3028 = vmatpush1.msra.mxu0 %v3001
    %3029 = vmatprep.subr.mxu0 0.0
    %3030 = vmatpush1.msra.mxu0 %v3000
    %3031 = vmatprep.subr.mxu0 0.0
    %3032 = vmatpush1.msra.mxu0 %v2999
    %3033 = vmatprep.subr.mxu0 0.0
    %3034 = vmatpush1.msra.mxu0 %v2998
    %3035 = vmatprep.subr.mxu0 0.0
    %3036 = vmatpush1.msra.mxu0 %v2997
    %3037 = vmatprep.subr.mxu0 0.0
    %3038 = vmatpush1.msra.mxu0 %v2996
    %3039 = vmatprep.subr.mxu0 0.0
    %3040 = vmatpush1.msra.mxu0 %v2995
    %3041 = vmatprep.subr.mxu0 0.0
    %3042 = vmatpush1.msra.mxu0 %v2994
    %3043 = vmatprep.subr.mxu0 0.0
    %3044 = vmatpush1.msra.mxu0 %v2993
    %3045 = vmatprep.subr.mxu0 0.0
    %3046 = vmatpush1.msra.mxu0 %v2992
    %3047 = vmatprep.subr.mxu0 0.0
    %3048 = vmatpush2.msra.mxu0 0.0
    %3049 = vmatprep.subr.mxu0 0.0
    %3050 = vmatpush2.msra.mxu0 0.0
    %3051 = vmatprep.subr.mxu0 0.0
    %3052 = vmatpush2.msra.mxu0 0.0
    %3053 = vmatprep.subr.mxu0 0.0
    %3054 = vmatpush2.msra.mxu0 0.0
    %3055 = vmatprep.subr.mxu0 0.0
    %3056 = vmatpush2.msra.mxu0 0.0
    %3057 = vmatprep.subr.mxu0 0.0
    %3058 = vmatpush2.msra.mxu0 0.0
    %3059 = vmatprep.subr.mxu0 0.0
    %3060 = vmatpush2.msra.mxu0 0.0
    %3061 = vmatprep.subr.mxu0 0.0
    %3062 = vmatpush2.msra.mxu0 0.0
    %3063 = vmatprep.subr.mxu0 0.0
    %3064 = vmatpush2.msra.mxu0 0.0
    %3065 = vmatprep.subr.mxu0 0.0
    %3066 = vmatpush2.msra.mxu0 0.0
    %3067 = vmatprep.subr.mxu0 0.0
    %3068 = vmatpush2.msra.mxu0 0.0
    %3069 = vmatprep.subr.mxu0 0.0
    %3070 = vmatpush2.msra.mxu0 0.0
    %3071 = vmatprep.subr.mxu0 0.0
    %3072 = vmatpush2.msra.mxu0 0.0
    %3073 = vmatprep.subr.mxu0 0.0
    %3074 = vmatpush2.msra.mxu0 0.0
    %3075 = vmatprep.subr.mxu0 0.0
    %3076 = vmatpush2.msra.mxu0 0.0
    %3077 = vmatprep.subr.mxu0 0.0
    %3078 = vmatpush2.msra.mxu0 0.0
    %3079 = vmatprep.mubr.f32.mxu0 0.0
    %3080 = vmatmul.mubr.f32.gmra.mxu0 %v2990
    %v3081 = vpop.f32.mrf.mxu0
    %v3082 = vadd.f32 %v3013, %v3081
    %v3083 = vpop.f32.mrf.mxu0
    %3084 = vmatprep.mubr.f32.mxu0 0.0
    %3085 = vmatmul.mubr.f32.gmra.mxu0 %v2991
    %v3086 = vpop.f32.mrf.mxu0
    %v3087 = vadd.f32 %v3013, %v3086
    %v3088 = vpop.f32.mrf.mxu0
    %3089 = vdwg.mxu0
    %v3090 = vmul.f32 %v3082, 0.5
    %v3091 = vmul.f32 %v3087, 0.5
    %v3092 = vmul.f32 %v3082, 0.044715
    %v3093 = vmul.f32 %v3087, 0.044715
    %v3094 = vmul.f32 %v3092, %v3082
    %v3095 = vmul.f32 %v3093, %v3087
    %v3096 = vmul.f32 %v3094, %v3082
    %v3097 = vmul.f32 %v3095, %v3087
    %v3098 = vadd.f32 %v3082, %v3096
    %v3099 = vadd.f32 %v3087, %v3097
    %v3100 = vmul.f32 %v3098, 0.7978846
    %v3101 = vmul.f32 %v3099, 0.7978846
    %v3102 = vtanh.pop %v3100
    %v3103 = vtanh.pop %v3101
    %v3104 = vadd.f32 %v3102, 1.0
    %v3105 = vadd.f32 %v3103, 1.0
    %v3106 = vmul.f32 %v3090, %v3104
    %v3107 = vmul.f32 %v3091, %v3105
    %v3108 = vld [vmem:[%s15] sm:$0xff]
    %v3109 = vld [vmem:[%s15 + $0x8] sm:$0xff]
    %v3110 = vld [vmem:[%s15 + $0x10] sm:$0xff]
    %v3111 = vld [vmem:[%s15 + $0x18] sm:$0xff]
    %v3112 = vld [vmem:[%s15 + $0x20] sm:$0xff]
    %v3113 = vld [vmem:[%s15 + $0x28] sm:$0xff]
    %v3114 = vld [vmem:[%s15 + $0x30] sm:$0xff]
    %v3115 = vld [vmem:[%s15 + $0x38] sm:$0xff]
    %v3116 = vld [vmem:[%s15 + $0x40] sm:$0xff]
    %v3117 = vld [vmem:[%s15 + $0x48] sm:$0xff]
    %v3118 = vld [vmem:[%s15 + $0x50] sm:$0xff]
    %v3119 = vld [vmem:[%s15 + $0x58] sm:$0xff]
    %v3120 = vld [vmem:[%s15 + $0x60] sm:$0xff]
    %v3121 = vld [vmem:[%s15 + $0x68] sm:$0xff]
    %v3122 = vld [vmem:[%s15 + $0x70] sm:$0xff]
    %v3123 = vld [vmem:[%s15 + $0x78] sm:$0xff]
    %v3124 = vld [vmem:[%s16] sm:$0x1]
    %v3126 = vlaneseq
    %v3127 = vshrl.u32 %v3126, 7
    %v3128 = vsub.s32 0, %v3127
    %v3129 = vrot.slane %v3124, %v3128
    %3131 = vmatprep.subr.mxu0 0.0
    %3132 = vmatpush1.msra.mxu0 %v3123
    %3133 = vmatprep.subr.mxu0 0.0
    %3134 = vmatpush1.msra.mxu0 %v3122
    %3135 = vmatprep.subr.mxu0 0.0
    %3136 = vmatpush1.msra.mxu0 %v3121
    %3137 = vmatprep.subr.mxu0 0.0
    %3138 = vmatpush1.msra.mxu0 %v3120
    %3139 = vmatprep.subr.mxu0 0.0
    %3140 = vmatpush1.msra.mxu0 %v3119
    %3141 = vmatprep.subr.mxu0 0.0
    %3142 = vmatpush1.msra.mxu0 %v3118
    %3143 = vmatprep.subr.mxu0 0.0
    %3144 = vmatpush1.msra.mxu0 %v3117
    %3145 = vmatprep.subr.mxu0 0.0
    %3146 = vmatpush1.msra.mxu0 %v3116
    %3147 = vmatprep.subr.mxu0 0.0
    %3148 = vmatpush1.msra.mxu0 %v3115
    %3149 = vmatprep.subr.mxu0 0.0
    %3150 = vmatpush1.msra.mxu0 %v3114
    %3151 = vmatprep.subr.mxu0 0.0
    %3152 = vmatpush1.msra.mxu0 %v3113
    %3153 = vmatprep.subr.mxu0 0.0
    %3154 = vmatpush1.msra.mxu0 %v3112
    %3155 = vmatprep.subr.mxu0 0.0
    %3156 = vmatpush1.msra.mxu0 %v3111
    %3157 = vmatprep.subr.mxu0 0.0
    %3158 = vmatpush1.msra.mxu0 %v3110
    %3159 = vmatprep.subr.mxu0 0.0
    %3160 = vmatpush1.msra.mxu0 %v3109
    %3161 = vmatprep.subr.mxu0 0.0
    %3162 = vmatpush1.msra.mxu0 %v3108
    %3163 = vmatprep.subr.mxu0 0.0
    %3164 = vmatpush2.msra.mxu0 0.0
    %3165 = vmatprep.subr.mxu0 0.0
    %3166 = vmatpush2.msra.mxu0 0.0
    %3167 = vmatprep.subr.mxu0 0.0
    %3168 = vmatpush2.msra.mxu0 0.0
    %3169 = vmatprep.subr.mxu0 0.0
    %3170 = vmatpush2.msra.mxu0 0.0
    %3171 = vmatprep.subr.mxu0 0.0
    %3172 = vmatpush2.msra.mxu0 0.0
    %3173 = vmatprep.subr.mxu0 0.0
    %3174 = vmatpush2.msra.mxu0 0.0
    %3175 = vmatprep.subr.mxu0 0.0
    %3176 = vmatpush2.msra.mxu0 0.0
    %3177 = vmatprep.subr.mxu0 0.0
    %3178 = vmatpush2.msra.mxu0 0.0
    %3179 = vmatprep.subr.mxu0 0.0
    %3180 = vmatpush2.msra.mxu0 0.0
    %3181 = vmatprep.subr.mxu0 0.0
    %3182 = vmatpush2.msra.mxu0 0.0
    %3183 = vmatprep.subr.mxu0 0.0
    %3184 = vmatpush2.msra.mxu0 0.0
    %3185 = vmatprep.subr.mxu0 0.0
    %3186 = vmatpush2.msra.mxu0 0.0
    %3187 = vmatprep.subr.mxu0 0.0
    %3188 = vmatpush2.msra.mxu0 0.0
    %3189 = vmatprep.subr.mxu0 0.0
    %3190 = vmatpush2.msra.mxu0 0.0
    %3191 = vmatprep.subr.mxu0 0.0
    %3192 = vmatpush2.msra.mxu0 0.0
    %3193 = vmatprep.subr.mxu0 0.0
    %3194 = vmatpush2.msra.mxu0 0.0
    %3195 = vmatprep.mubr.f32.mxu0 0.0
    %3196 = vmatmul.mubr.f32.gmra.mxu0 %v3106
    %v3197 = vpop.f32.mrf.mxu0
    %v3198 = vadd.f32 %v3129, %v3197
    %v3199 = vpop.f32.mrf.mxu0
    %3200 = vmatprep.mubr.f32.mxu0 0.0
    %3201 = vmatmul.mubr.f32.gmra.mxu0 %v3107
    %v3202 = vpop.f32.mrf.mxu0
    %v3203 = vadd.f32 %v3129, %v3202
    %v3204 = vpop.f32.mrf.mxu0
    %3205 = vdwg.mxu0
    %v3206 = vadd.f32 %v2948, %v3198
    %v3207 = vadd.f32 %v2949, %v3203
    %3208 = vst [vmem:[#allocation2] sm:$0xff] %v3206
    %3209 = vst [vmem:[#allocation2 + $0x8] sm:$0xff] %v3207
    // Predicated region
    $region70: #{tpu_custom_call.1} parent=1 // pred_check
      _
    $region71: #{tpu_custom_call.1} parent=1 // pred_check_branch
      %3211 = sbr.rel (0) target = $region73
    $region72: #{tpu_custom_call.1} parent=1 // pred_region
      %s3213 = ssub.s32 256, 256
      %3214 = vsyncadd [#allocation3], %s3213
      %s3215 = sshll.u32 [#allocation2], 4
      %s3216 = int_to_ptr.vmem [resolvable:$true] %s3215
      %3221 = dma.vmem_to_hbm [thread:$0]  %s3216, 256, %s17, [#allocation3], 128, 128, 8
    $region73: #{tpu_custom_call.1} parent=1 // pred_fallthru
      _
    // Predicated region
    $region74: #{tpu_custom_call.1} parent=1 // pred_check
      _
    $region75: #{tpu_custom_call.1} parent=1 // pred_check_branch
      %3223 = sbr.rel (0) target = $region77
    $region76: #{tpu_custom_call.1} parent=1 // pred_region
      %3224 = dma.done [#allocation3], 256
    $region77: #{tpu_custom_call.1} parent=1 // pred_fallthru
      _
    %3225 = vsyncpa [#allocation3], 1

</llo_original>
